<compile_context>
chip_gen: v5e
topology: v5e:2x2
jax: 0.10.0
libtpu: 0.0.40
codegen_flags: <defaults>
</compile_context>

<pallas_src>
import functools

import jax
import jax.numpy as jnp
from jax.experimental import pallas as pl
from jax.experimental.pallas import tpu as pltpu

_BIG = 1e9  # additive penalty / init value for masked-out entries of the min maps


def _round_up(x, m):
    return (x + m - 1) // m * m


def _boundary_loss_kernel(logits_ref, seg_ref, qmat_ref, pmat_ref,
                          out_ref, dmin_ref, *, n_real):
    """Grid = (sample i, q-tile t).

    dmin_ref (3, NP) accumulates, per class c, min_{q: seg[q]==c} ||p - q||^2
    over all q tiles (lane-dense over p)."""
    t = pl.program_id(1)
    n_qt = pl.num_programs(1)

    @pl.when(t == 0)
    def _init():
        dmin_ref[...] = jnp.full(dmin_ref.shape, _BIG, jnp.float32)

    # ---- fold this q-tile into the three per-class min maps (MXU) ----------
    # pmat rows          : [-2x_p, -2y_p, -2z_p, 1, r2_p, 0, 0, 0]        (8, NP)
    # qmat cols (class c): [ x_q ,  y_q ,  z_q , r2_q + BIG*(seg_q != c), 1, 0,0,0]
    #   =>  A_c @ pmat  ==  ||p - q||^2 + BIG*(seg_q != c)                (TQ, NP)
    pmat = pmat_ref[...]
    for c in range(3):
        a_c = qmat_ref[0, :, 8 * c:8 * c + 8]                        # (TQ, 8)
        slab = jnp.dot(a_c, pmat, preferred_element_type=jnp.float32)
        tile_min = jnp.min(slab, axis=0, keepdims=True)              # sublane reduce -> (1, NP)
        dmin_ref[c:c + 1, :] = jnp.minimum(dmin_ref[c:c + 1, :], tile_min)

    # ---- finalize on the last q tile ---------------------------------------
    @pl.when(t == n_qt - 1)
    def _finalize():
        # argmax over classes of the raw logits (== argmax of softmax; first
        # class wins ties, matching torch .max(0)[1]); all lane-dense rows.
        lg = logits_ref[0]                                           # (3, NP)
        l0, l1, l2 = lg[0:1, :], lg[1:2, :], lg[2:3, :]
        pred = jnp.zeros(l0.shape, jnp.int32)
        best = l0
        u1 = l1 > best
        pred = jnp.where(u1, 1, pred)
        best = jnp.where(u1, l1, best)
        u2 = l2 > best
        pred = jnp.where(u2, 2, pred)

        seg = seg_ref[0]                                             # (1, NP) int32, -1 = padding
        valid = (seg >= 0).astype(jnp.float32)

        d0 = dmin_ref[0:1, :]
        d1 = dmin_ref[1:2, :]
        d2 = dmin_ref[2:3, :]

        total = jnp.zeros(l0.shape, jnp.float32)
        for c, dpos2, dneg2 in ((1, d1, jnp.minimum(d0, d2)),        # SurfaceLoss.idc = [1, 2]
                                (2, d2, jnp.minimum(d0, d1))):
            pmask = seg == c
            n_pos = jnp.sum(pmask.astype(jnp.float32))
            # floor(sqrt(integer distance^2)); +0.5 guards the perfect-square
            # edge against f32 rounding; values stay < 2^16 -> no overflow.
            fpos = jnp.floor(jnp.sqrt(dpos2 + 0.5))
            fneg = jnp.floor(jnp.sqrt(dneg2 + 0.5))
            # one_hot2dist (stored into an int32 array, i.e. truncated):
            #   dist(neg)*neg - (dist(pos)-1)*pos
            dist = jnp.where(pmask, 1.0 - fneg, fpos)
            # scipy path is skipped entirely when the class has no foreground
            dist = jnp.where(n_pos > 0.5, dist, 0.0)
            # TODO(synk): scipy's behavior when a class fills the *entire*
            # volume (empty negmask) is not replicated here.
            pm = (pred == c).astype(jnp.float32)
            total = total + pm * dist

        loss = jnp.sum(total * valid) / jnp.float32(2 * n_real)      # .mean() over (1,2,W,H,D)
        out_ref[...] = loss * jnp.ones(out_ref.shape, jnp.float32)


@jax.jit
def boundary_loss(probs, seg):
    """probs: (B, 3, W, H, D) float logits; seg: (B, 1, W, H, D) int labels in {0,1,2}.

    Returns the sum of the two per-sample SurfaceLoss values (forward() of BoundaryLoss)."""
    b, n_cls, w, h, d = probs.shape
    assert n_cls == 3 and b >= 2
    n = w * h * d

    # lane-dense padded voxel count; q tiles of at most 512 rows
    np_ = _round_up(n, 128)
    tq = np_ if np_ <= 512 else 512
    np_ = _round_up(np_, tq)
    n_qt = np_ // tq
    pad = np_ - n
    # TODO(synk): for very large volumes the p axis (lanes) should be tiled too.

    # logits: classes on sublanes, voxels on lanes; padded voxels argmax to 0 and are masked out
    logits = probs[:2].astype(jnp.float32).reshape(2, n_cls, n)
    logits = jnp.pad(logits, ((0, 0), (0, 0), (0, pad)))

    seg_flat = seg[:2, 0].astype(jnp.int32).reshape(2, n)
    seg_pad = jnp.pad(seg_flat, ((0, 0), (0, pad)), constant_values=-1)   # (2, NP)
    seg_in = seg_pad[:, None, :]                                          # (2, 1, NP)

    ii, jj, kk = jnp.meshgrid(jnp.arange(w), jnp.arange(h), jnp.arange(d), indexing="ij")
    coords = jnp.stack([ii, jj, kk], axis=0).reshape(3, n).astype(jnp.float32)
    coords = jnp.pad(coords, ((0, 0), (0, pad)))                          # (3, NP)
    r2 = jnp.sum(coords * coords, axis=0, keepdims=True)                  # (1, NP)

    # p-side MXU operand (shared by both samples): rows [-2x, -2y, -2z, 1, r2, 0, 0, 0]
    pmat = jnp.concatenate([-2.0 * coords,
                            jnp.ones((1, np_), jnp.float32),
                            r2,
                            jnp.zeros((3, np_), jnp.float32)], axis=0)    # (8, NP)

    # q-side MXU operand, one 8-wide lane block per class:
    #   [x, y, z, r2 + BIG*(seg != c), 1, 0, 0, 0]   (padded q rows get seg=-1 -> BIG penalty)
    cols = []
    for c in range(3):
        pen_c = jnp.where(seg_pad == c, 0.0, _BIG)                        # (2, NP)
        cols += [jnp.broadcast_to(coords[0][None], (2, np_)),
                 jnp.broadcast_to(coords[1][None], (2, np_)),
                 jnp.broadcast_to(coords[2][None], (2, np_)),
                 jnp.broadcast_to(r2, (2, np_)) + pen_c,
                 jnp.ones((2, np_), jnp.float32),
                 jnp.zeros((2, np_), jnp.float32),
                 jnp.zeros((2, np_), jnp.float32),
                 jnp.zeros((2, np_), jnp.float32)]
    qmat = jnp.stack(cols, axis=-1)                                       # (2, NP, 24)

    # VMEM budget: ~4 live (TQ, NP) f32 slabs + lane-padded inputs; capped well
    # below v7x's 64 MiB physical VMEM (do NOT request the whole chip).
    est = 4 * tq * np_ * 4 + 8 * np_ * 512 + (1 << 21)
    vmem_limit = int(min(48 * 1024 * 1024, max(16 * 1024 * 1024, est)))

    kernel = functools.partial(_boundary_loss_kernel, n_real=n)

    out = pl.pallas_call(
        kernel,
        out_shape=jax.ShapeDtypeStruct((2, 8, 128), jnp.float32),
        grid=(2, n_qt),
        in_specs=[
            pl.BlockSpec((1, n_cls, np_), lambda i, t: (i, 0, 0)),   # logits  (per sample)
            pl.BlockSpec((1, 1, np_), lambda i, t: (i, 0, 0)),       # seg row (per sample)
            pl.BlockSpec((1, tq, 24), lambda i, t: (i, t, 0)),       # q-side tile
            pl.BlockSpec((8, np_), lambda i, t: (0, 0)),             # p-side (shared)
        ],
        out_specs=pl.BlockSpec((1, 8, 128), lambda i, t: (i, 0, 0)),
        scratch_shapes=[pltpu.VMEM((3, np_), jnp.float32)],          # per-class min maps
        compiler_params=pltpu.CompilerParams(
            dimension_semantics=("parallel", "arbitrary"),
            vmem_limit_bytes=vmem_limit),
    )(logits, seg_in, qmat, pmat)

    # forward() returns the sum of the two per-sample .item() losses
    return out[0, 0, 0] + out[1, 0, 0]


if __name__ == "__main__":
    key = jax.random.PRNGKey(0)
    kp, ks = jax.random.split(key)
    B, C, W, H, D = 2, 3, 8, 8, 8
    probs = jax.random.normal(kp, (B, C, W, H, D), dtype=jnp.float32)
    seg = jax.random.randint(ks, (B, 1, W, H, D), 0, 3, dtype=jnp.int32)

    loss = boundary_loss(probs, seg)
    jax.block_until_ready(loss)
    print("KERNEL_OK")
</pallas_src>

<mosaic_0001>
module attributes {stable_mosaic.version = 11 : i64} {
  func.func @_boundary_loss_kernel(%arg0: i32, %arg1: i32, %arg2: memref<1x3x512xf32, #tpu.memory_space<vmem>>, %arg3: memref<1x1x512xi32, #tpu.memory_space<vmem>>, %arg4: memref<1x512x24xf32, #tpu.memory_space<vmem>>, %arg5: memref<8x512xf32, #tpu.memory_space<vmem>>, %arg6: memref<1x8x128xf32, #tpu.memory_space<vmem>>, %arg7: memref<3x512xf32, #tpu.memory_space<vmem>>) attributes {dimension_semantics = [#tpu.dimension_semantics<parallel>, #tpu.dimension_semantics<arbitrary>], iteration_bounds = array<i64: 2, 1>, scalar_prefetch = 0 : i64, scratch_operands = 1 : i64, tpu.core_type = #tpu.core_type<tc>, window_params = [{transform_indices = @transform_0, window_bounds = array<i64: 1, 3, 512>}, {transform_indices = @transform_1, window_bounds = array<i64: 1, 1, 512>}, {transform_indices = @transform_2, window_bounds = array<i64: 1, 512, 24>}, {pipeline_mode = #tpu.pipeline_mode<synchronous>, transform_indices = @transform_3, window_bounds = array<i64: 8, 512>}, {transform_indices = @transform_4, window_bounds = array<i64: 1, 8, 128>}]} {
    %c0_i32 = arith.constant 0 : i32
    %0 = arith.cmpi eq, %arg1, %c0_i32 : i32
    %1 = arith.extui %0 : i1 to i32
    %c0_i32_0 = arith.constant 0 : i32
    %2 = arith.cmpi ne, %1, %c0_i32_0 : i32
    scf.if %2 {
      %cst_26 = arith.constant 1.000000e+09 : f32
      %31 = vector.broadcast %cst_26 : f32 to vector<3x512xf32>
      %c0_27 = arith.constant 0 : index
      %c0_28 = arith.constant 0 : index
      %32 = vector.load %arg7[%c0_27, %c0_28] : memref<3x512xf32, #tpu.memory_space<vmem>>, vector<3x512xf32>
      tpu.vector_store %arg7[%c0_27, %c0_28], %31 {strides = array<i32>} : memref<3x512xf32, #tpu.memory_space<vmem>>, vector<3x512xf32>,
    } else {
    }
    %c0 = arith.constant 0 : index
    %c0_1 = arith.constant 0 : index
    %3 = vector.load %arg5[%c0, %c0_1] : memref<8x512xf32, #tpu.memory_space<vmem>>, vector<8x512xf32>
    %c0_2 = arith.constant 0 : index
    %c0_3 = arith.constant 0 : index
    %c0_4 = arith.constant 0 : index
    %4 = vector.load %arg4[%c0_2, %c0_3, %c0_4] : memref<1x512x24xf32, #tpu.memory_space<vmem>>, vector<1x512x8xf32>
    %5 = vector.shape_cast %4 : vector<1x512x8xf32> to vector<512x8xf32>
    %cst = arith.constant dense<0.000000e+00> : vector<512x512xf32>
    %6 = tpu.matmul %5, %3, %cst {dimension_numbers = #tpu.dot_dimension_numbers<[1], [0], [0], [1], [0, 0, 1, 1], [], []>} : vector<512x8xf32>, vector<8x512xf32>, vector<512x512xf32> -> vector<512x512xf32>
    %cst_5 = arith.constant dense<0x7F800000> : vector<512xf32>
    %7 = vector.multi_reduction <minimumf>, %6, %cst_5 [0] : vector<512x512xf32> to vector<512xf32>
    %8 = vector.shape_cast %7 : vector<512xf32> to vector<1x512xf32>
    %c0_6 = arith.constant 0 : index
    %c0_7 = arith.constant 0 : index
    %9 = vector.load %arg7[%c0_6, %c0_7] : memref<3x512xf32, #tpu.memory_space<vmem>>, vector<1x512xf32>
    %10 = arith.minimumf %9, %8 : vector<1x512xf32>
    %c0_8 = arith.constant 0 : index
    %c0_9 = arith.constant 0 : index
    %11 = vector.load %arg7[%c0_8, %c0_9] : memref<3x512xf32, #tpu.memory_space<vmem>>, vector<1x512xf32>
    tpu.vector_store %arg7[%c0_8, %c0_9], %10 {strides = array<i32>} : memref<3x512xf32, #tpu.memory_space<vmem>>, vector<1x512xf32>,
    %c0_10 = arith.constant 0 : index
    %c0_11 = arith.constant 0 : index
    %c8 = arith.constant 8 : index
    %12 = vector.load %arg4[%c0_10, %c0_11, %c8] : memref<1x512x24xf32, #tpu.memory_space<vmem>>, vector<1x512x8xf32>
    %13 = vector.shape_cast %12 : vector<1x512x8xf32> to vector<512x8xf32>
    %cst_12 = arith.constant dense<0.000000e+00> : vector<512x512xf32>
    %14 = tpu.matmul %13, %3, %cst_12 {dimension_numbers = #tpu.dot_dimension_numbers<[1], [0], [0], [1], [0, 0, 1, 1], [], []>} : vector<512x8xf32>, vector<8x512xf32>, vector<512x512xf32> -> vector<512x512xf32>
    %cst_13 = arith.constant dense<0x7F800000> : vector<512xf32>
    %15 = vector.multi_reduction <minimumf>, %14, %cst_13 [0] : vector<512x512xf32> to vector<512xf32>
    %16 = vector.shape_cast %15 : vector<512xf32> to vector<1x512xf32>
    %c1 = arith.constant 1 : index
    %c0_14 = arith.constant 0 : index
    %17 = vector.load %arg7[%c1, %c0_14] : memref<3x512xf32, #tpu.memory_space<vmem>>, vector<1x512xf32>
    %18 = arith.minimumf %17, %16 : vector<1x512xf32>
    %c1_15 = arith.constant 1 : index
    %c0_16 = arith.constant 0 : index
    %19 = vector.load %arg7[%c1_15, %c0_16] : memref<3x512xf32, #tpu.memory_space<vmem>>, vector<1x512xf32>
    tpu.vector_store %arg7[%c1_15, %c0_16], %18 {strides = array<i32>} : memref<3x512xf32, #tpu.memory_space<vmem>>, vector<1x512xf32>,
    %c0_17 = arith.constant 0 : index
    %c0_18 = arith.constant 0 : index
    %c16 = arith.constant 16 : index
    %20 = vector.load %arg4[%c0_17, %c0_18, %c16] : memref<1x512x24xf32, #tpu.memory_space<vmem>>, vector<1x512x8xf32>
    %21 = vector.shape_cast %20 : vector<1x512x8xf32> to vector<512x8xf32>
    %cst_19 = arith.constant dense<0.000000e+00> : vector<512x512xf32>
    %22 = tpu.matmul %21, %3, %cst_19 {dimension_numbers = #tpu.dot_dimension_numbers<[1], [0], [0], [1], [0, 0, 1, 1], [], []>} : vector<512x8xf32>, vector<8x512xf32>, vector<512x512xf32> -> vector<512x512xf32>
    %cst_20 = arith.constant dense<0x7F800000> : vector<512xf32>
    %23 = vector.multi_reduction <minimumf>, %22, %cst_20 [0] : vector<512x512xf32> to vector<512xf32>
    %24 = vector.shape_cast %23 : vector<512xf32> to vector<1x512xf32>
    %c2 = arith.constant 2 : index
    %c0_21 = arith.constant 0 : index
    %25 = vector.load %arg7[%c2, %c0_21] : memref<3x512xf32, #tpu.memory_space<vmem>>, vector<1x512xf32>
    %26 = arith.minimumf %25, %24 : vector<1x512xf32>
    %c2_22 = arith.constant 2 : index
    %c0_23 = arith.constant 0 : index
    %27 = vector.load %arg7[%c2_22, %c0_23] : memref<3x512xf32, #tpu.memory_space<vmem>>, vector<1x512xf32>
    tpu.vector_store %arg7[%c2_22, %c0_23], %26 {strides = array<i32>} : memref<3x512xf32, #tpu.memory_space<vmem>>, vector<1x512xf32>,
    %c0_i32_24 = arith.constant 0 : i32
    %28 = arith.cmpi eq, %arg1, %c0_i32_24 : i32
    %29 = arith.extui %28 : i1 to i32
    %c0_i32_25 = arith.constant 0 : i32
    %30 = arith.cmpi ne, %29, %c0_i32_25 : i32
    scf.if %30 {
      %c0_26 = arith.constant 0 : index
      %c0_27 = arith.constant 0 : index
      %c0_28 = arith.constant 0 : index
      %31 = vector.load %arg2[%c0_26, %c0_27, %c0_28] : memref<1x3x512xf32, #tpu.memory_space<vmem>>, vector<1x3x512xf32>
      %32 = vector.shape_cast %31 : vector<1x3x512xf32> to vector<3x512xf32>
      %33 = vector.extract_strided_slice %32 {offsets = [0, 0], sizes = [1, 512], strides = [1, 1]} : vector<3x512xf32> to vector<1x512xf32>
      %34 = vector.extract_strided_slice %32 {offsets = [1, 0], sizes = [1, 512], strides = [1, 1]} : vector<3x512xf32> to vector<1x512xf32>
      %35 = vector.extract_strided_slice %32 {offsets = [2, 0], sizes = [1, 512], strides = [1, 1]} : vector<3x512xf32> to vector<1x512xf32>
      %c0_i32_29 = arith.constant 0 : i32
      %36 = vector.broadcast %c0_i32_29 : i32 to vector<1x512xi32>
      %37 = arith.cmpf ogt, %34, %33 : vector<1x512xf32>
      %c1_i32 = arith.constant 1 : i32
      %38 = vector.broadcast %c1_i32 : i32 to vector<1x512xi32>
      %39 = arith.select %37, %38, %36 : vector<1x512xi1>, vector<1x512xi32>
      %40 = arith.select %37, %34, %33 : vector<1x512xi1>, vector<1x512xf32>
      %41 = arith.cmpf ogt, %35, %40 : vector<1x512xf32>
      %c2_i32 = arith.constant 2 : i32
      %42 = vector.broadcast %c2_i32 : i32 to vector<1x512xi32>
      %43 = arith.select %41, %42, %39 : vector<1x512xi1>, vector<1x512xi32>
      %c0_30 = arith.constant 0 : index
      %c0_31 = arith.constant 0 : index
      %c0_32 = arith.constant 0 : index
      %44 = vector.load %arg3[%c0_30, %c0_31, %c0_32] : memref<1x1x512xi32, #tpu.memory_space<vmem>>, vector<1x1x512xi32>
      %45 = vector.shape_cast %44 : vector<1x1x512xi32> to vector<1x512xi32>
      %c0_i32_33 = arith.constant 0 : i32
      %46 = vector.broadcast %c0_i32_33 : i32 to vector<1x512xi32>
      %47 = arith.cmpi sge, %45, %46 : vector<1x512xi32>
      %48 = arith.extui %47 : vector<1x512xi1> to vector<1x512xi32>
      %49 = arith.sitofp %48 : vector<1x512xi32> to vector<1x512xf32>
      %c0_34 = arith.constant 0 : index
      %c0_35 = arith.constant 0 : index
      %50 = vector.load %arg7[%c0_34, %c0_35] : memref<3x512xf32, #tpu.memory_space<vmem>>, vector<1x512xf32>
      %c1_36 = arith.constant 1 : index
      %c0_37 = arith.constant 0 : index
      %51 = vector.load %arg7[%c1_36, %c0_37] : memref<3x512xf32, #tpu.memory_space<vmem>>, vector<1x512xf32>
      %c2_38 = arith.constant 2 : index
      %c0_39 = arith.constant 0 : index
      %52 = vector.load %arg7[%c2_38, %c0_39] : memref<3x512xf32, #tpu.memory_space<vmem>>, vector<1x512xf32>
      %cst_40 = arith.constant 0.000000e+00 : f32
      %53 = vector.broadcast %cst_40 : f32 to vector<1x512xf32>
      %54 = arith.minimumf %50, %52 : vector<1x512xf32>
      %55 = arith.minimumf %50, %51 : vector<1x512xf32>
      %c1_i32_41 = arith.constant 1 : i32
      %56 = vector.broadcast %c1_i32_41 : i32 to vector<1x512xi32>
      %57 = arith.cmpi eq, %45, %56 : vector<1x512xi32>
      %58 = arith.extui %57 : vector<1x512xi1> to vector<1x512xi32>
      %59 = arith.sitofp %58 : vector<1x512xi32> to vector<1x512xf32>
      %60 = vector.shape_cast %59 : vector<1x512xf32> to vector<1x1x512xf32>
      %cst_42 = arith.constant dense<0.000000e+00> : vector<1xf32>
      %61 = vector.multi_reduction <add>, %60, %cst_42 [1, 2] : vector<1x1x512xf32> to vector<1xf32>
      %62 = vector.shape_cast %61 : vector<1xf32> to vector<1x1x1xf32>
      %63 = vector.extract %62[0, 0, 0] : f32 from vector<1x1x1xf32>
      %cst_43 = arith.constant 5.000000e-01 : f32
      %64 = vector.broadcast %cst_43 : f32 to vector<1x512xf32>
      %65 = arith.addf %51, %64 : vector<1x512xf32>
      %66 = math.sqrt %65 : vector<1x512xf32>
      %67 = math.floor %66 : vector<1x512xf32>
      %cst_44 = arith.constant 5.000000e-01 : f32
      %68 = vector.broadcast %cst_44 : f32 to vector<1x512xf32>
      %69 = arith.addf %54, %68 : vector<1x512xf32>
      %70 = math.sqrt %69 : vector<1x512xf32>
      %71 = math.floor %70 : vector<1x512xf32>
      %cst_45 = arith.constant 1.000000e+00 : f32
      %72 = vector.broadcast %cst_45 : f32 to vector<1x512xf32>
      %73 = arith.subf %72, %71 : vector<1x512xf32>
      %74 = arith.select %57, %73, %67 : vector<1x512xi1>, vector<1x512xf32>
      %cst_46 = arith.constant 5.000000e-01 : f32
      %75 = arith.cmpf ogt, %63, %cst_46 : f32
      %cst_47 = arith.constant 0.000000e+00 : f32
      %76 = vector.broadcast %cst_47 : f32 to vector<1x512xf32>
      %77 = arith.select %75, %74, %76 : vector<1x512xf32>
      %c1_i32_48 = arith.constant 1 : i32
      %78 = vector.broadcast %c1_i32_48 : i32 to vector<1x512xi32>
      %79 = arith.cmpi eq, %43, %78 : vector<1x512xi32>
      %80 = arith.extui %79 : vector<1x512xi1> to vector<1x512xi32>
      %81 = arith.sitofp %80 : vector<1x512xi32> to vector<1x512xf32>
      %82 = arith.mulf %81, %77 : vector<1x512xf32>
      %83 = arith.addf %53, %82 : vector<1x512xf32>
      %c2_i32_49 = arith.constant 2 : i32
      %84 = vector.broadcast %c2_i32_49 : i32 to vector<1x512xi32>
      %85 = arith.cmpi eq, %45, %84 : vector<1x512xi32>
      %86 = arith.extui %85 : vector<1x512xi1> to vector<1x512xi32>
      %87 = arith.sitofp %86 : vector<1x512xi32> to vector<1x512xf32>
      %88 = vector.shape_cast %87 : vector<1x512xf32> to vector<1x1x512xf32>
      %cst_50 = arith.constant dense<0.000000e+00> : vector<1xf32>
      %89 = vector.multi_reduction <add>, %88, %cst_50 [1, 2] : vector<1x1x512xf32> to vector<1xf32>
      %90 = vector.shape_cast %89 : vector<1xf32> to vector<1x1x1xf32>
      %91 = vector.extract %90[0, 0, 0] : f32 from vector<1x1x1xf32>
      %cst_51 = arith.constant 5.000000e-01 : f32
      %92 = vector.broadcast %cst_51 : f32 to vector<1x512xf32>
      %93 = arith.addf %52, %92 : vector<1x512xf32>
      %94 = math.sqrt %93 : vector<1x512xf32>
      %95 = math.floor %94 : vector<1x512xf32>
      %cst_52 = arith.constant 5.000000e-01 : f32
      %96 = vector.broadcast %cst_52 : f32 to vector<1x512xf32>
      %97 = arith.addf %55, %96 : vector<1x512xf32>
      %98 = math.sqrt %97 : vector<1x512xf32>
      %99 = math.floor %98 : vector<1x512xf32>
      %cst_53 = arith.constant 1.000000e+00 : f32
      %100 = vector.broadcast %cst_53 : f32 to vector<1x512xf32>
      %101 = arith.subf %100, %99 : vector<1x512xf32>
      %102 = arith.select %85, %101, %95 : vector<1x512xi1>, vector<1x512xf32>
      %cst_54 = arith.constant 5.000000e-01 : f32
      %103 = arith.cmpf ogt, %91, %cst_54 : f32
      %cst_55 = arith.constant 0.000000e+00 : f32
      %104 = vector.broadcast %cst_55 : f32 to vector<1x512xf32>
      %105 = arith.select %103, %102, %104 : vector<1x512xf32>
      %c2_i32_56 = arith.constant 2 : i32
      %106 = vector.broadcast %c2_i32_56 : i32 to vector<1x512xi32>
      %107 = arith.cmpi eq, %43, %106 : vector<1x512xi32>
      %108 = arith.extui %107 : vector<1x512xi1> to vector<1x512xi32>
      %109 = arith.sitofp %108 : vector<1x512xi32> to vector<1x512xf32>
      %110 = arith.mulf %109, %105 : vector<1x512xf32>
      %111 = arith.addf %83, %110 : vector<1x512xf32>
      %112 = arith.mulf %111, %49 : vector<1x512xf32>
      %113 = vector.shape_cast %112 : vector<1x512xf32> to vector<1x1x512xf32>
      %cst_57 = arith.constant dense<0.000000e+00> : vector<1xf32>
      %114 = vector.multi_reduction <add>, %113, %cst_57 [1, 2] : vector<1x1x512xf32> to vector<1xf32>
      %115 = vector.shape_cast %114 : vector<1xf32> to vector<1x1x1xf32>
      %116 = vector.extract %115[0, 0, 0] : f32 from vector<1x1x1xf32>
      %cst_58 = arith.constant 1.024000e+03 : f32
      %117 = arith.divf %116, %cst_58 : f32
      %cst_59 = arith.constant 1.000000e+00 : f32
      %118 = vector.broadcast %cst_59 : f32 to vector<1x8x128xf32>
      %119 = vector.broadcast %117 : f32 to vector<1x8x128xf32>
      %120 = arith.mulf %119, %118 : vector<1x8x128xf32>
      %c0_60 = arith.constant 0 : index
      %c0_61 = arith.constant 0 : index
      %c0_62 = arith.constant 0 : index
      %121 = vector.load %arg6[%c0_60, %c0_61, %c0_62] : memref<1x8x128xf32, #tpu.memory_space<vmem>>, vector<1x8x128xf32>
      tpu.vector_store %arg6[%c0_60, %c0_61, %c0_62], %120 {strides = array<i32>} : memref<1x8x128xf32, #tpu.memory_space<vmem>>, vector<1x8x128xf32>,
    } else {
    }
    return
  }
  func.func @transform_0(%arg0: i32, %arg1: i32) -> (i32, i32, i32) {
    %c0_i32 = arith.constant 0 : i32
    %c0_i32_0 = arith.constant 0 : i32
    %c0_i32_1 = arith.constant 0 : i32
    return %arg0, %c0_i32, %c0_i32_0 : i32, i32, i32
  }
  func.func @transform_1(%arg0: i32, %arg1: i32) -> (i32, i32, i32) {
    %c0_i32 = arith.constant 0 : i32
    %c0_i32_0 = arith.constant 0 : i32
    %c0_i32_1 = arith.constant 0 : i32
    return %arg0, %c0_i32, %c0_i32_0 : i32, i32, i32
  }
  func.func @transform_2(%arg0: i32, %arg1: i32) -> (i32, i32, i32) {
    %c0_i32 = arith.constant 0 : i32
    %c0_i32_0 = arith.constant 0 : i32
    return %arg0, %arg1, %c0_i32 : i32, i32, i32
  }
  func.func @transform_3(%arg0: i32, %arg1: i32) -> (i32, i32) {
    %c0_i32 = arith.constant 0 : i32
    %c0_i32_0 = arith.constant 0 : i32
    %c0_i32_1 = arith.constant 0 : i32
    return %c0_i32, %c0_i32_0 : i32, i32
  }
  func.func @transform_4(%arg0: i32, %arg1: i32) -> (i32, i32, i32) {
    %c0_i32 = arith.constant 0 : i32
    %c0_i32_0 = arith.constant 0 : i32
    %c0_i32_1 = arith.constant 0 : i32
    return %arg0, %c0_i32, %c0_i32_0 : i32, i32, i32
  }
}

</mosaic_0001>

<llo_original>
// kernel: boundary_loss.1
$region0: #{boundary_loss.1}
  #allocation0 [shape = 'u32[]', space=smem, size = 0x4, offset = 0x4, fixed_abs, tag = 'smem constant byte address 0x4 - core index']
  #allocation1 [shape = 'u32[72,128]{1,0:T(1,128)}', space=vmem, size = 0x9000, scoped, tag = 'internal scratch']
  #allocation2 [shape = 'f32[3,512]{1,0:T(4,128)}', space=vmem, size = 0x2000, scoped, tag = 'scratch operand']
  %s0 = inlined_call_operand.vmem [shape: f32[2,3,512], index: 0, kind: input, shape index: {}]
  %s1 = inlined_call_operand.vmem [shape: s32[2,1,512], index: 1, kind: input, shape index: {}]
  %s2 = inlined_call_operand.vmem [shape: f32[2,512,24], index: 2, kind: input, shape index: {}]
  %s3 = inlined_call_operand.vmem [shape: f32[8,512], index: 3, kind: input, shape index: {}]
  %s4 = inlined_call_operand.vmem [shape: f32[2,8,128], index: 4, kind: output, shape index: {}]
  %s5 = sld [smem:[#allocation0]]
  $region57: #{boundary_loss.1} parent=0
    _
  %s7 = ssub.s32 1, %s5
  %s8 = scalar_select 0, %s7, %s5
  loop: start=0, step=1, limit=4
  $region2: #{boundary_loss.1} parent=0 // loop_pre_header
    _
  $region3: #{boundary_loss.1} parent=0 // loop_header
    %s10 = sphi 0, %s14
    %p11 = scmp.ge.s32.totalorder %s10, 4
    %s17 = sphi 0, %s29
    %s18 = sphi 0, %s25
    %s19 = sphi 0, %s17
    %s20 = sphi 0, %s18
    %s21 = sphi 0, %s19
    %s22 = sphi 0, %s20
    %s32 = sphi 0, %s34
    %s35 = sphi 0, %s32
    %s36 = sphi 0, %s35
    %s52 = sphi 0, %s36
    %s58 = sphi 0, %s60
    %s61 = sphi 0, %s58
    %s62 = sphi 0, %s61
    %s78 = sphi 0, %s62
    %s86 = sphi 0, %s88
    %s89 = sphi 0, %s86
    %s90 = sphi 0, %s89
    %s106 = sphi 0, %s90
    %s110 = sphi 0, %s110
    %s112 = sphi 0, %s110
    %s113 = sphi 0, %s112
    %s127 = sphi 0, %s113
    %s133 = sphi 0, %s135
    %s136 = sphi 0, %s133
    %s137 = sphi 0, %s136
    %s153 = sphi 0, %s137
  $region4: #{boundary_loss.1} parent=0 // loop_header_branch
    %13 = sbr.rel (%p11) target = $region8
  $region5: #{boundary_loss.1} parent=0 // loop_body
    %s15 = ssub.s32 %s10, 1
    %s16 = ssub.s32 %s10, 2
    %s23 = sadd.s32 1, %s18
    %p24 = scmp.ge.s32.totalorder %s23, 1
    %s25 = scalar_select %p24, 0, %s23
    %s26 = sadd.s32 1, %s17
    %s27 = scalar_select %p24, %s26, %s17
    %p28 = scmp.ge.s32.totalorder %s27, 2
    %s29 = scalar_select %p28, 0, %s27
    %s30 = ssub.s32 %s17, %s29
    %p31 = scmp.eq.s32.totalorder %s30, 0
    %s33 = sadd.s32 %s32, 1
    %s34 = scalar_select %p31, %s32, %s33
    %p37 = pneg %p31
    %p38 = scmp.eq.s32.totalorder %s10, 1
    %p39 = por %p37, %p38
    %p40 = scmp.ne.s32.totalorder %s32, %s35
    %p41 = scmp.eq.s32.totalorder %s10, 0
    %p42 = por %p40, %p41
    %p43 = scmp.ne.s32.totalorder %s32, %s35
    %p44 = scmp.eq.s32.totalorder %s15, 1
    %p45 = por %p43, %p44
    %p46 = scmp.ne.s32.totalorder %s35, %s36
    %p47 = scmp.eq.s32.totalorder %s15, 0
    %p48 = por %p46, %p47
    %p49 = scmp.ne.s32.totalorder %s35, %s36
    %p50 = scmp.eq.s32.totalorder %s16, 1
    %p51 = por %p49, %p50
    %p53 = scmp.ne.s32.totalorder %s36, %s52
    %p54 = scmp.eq.s32.totalorder %s16, 0
    %p55 = por %p53, %p54
    %s56 = ssub.s32 %s17, %s29
    %p57 = scmp.eq.s32.totalorder %s56, 0
    %s59 = sadd.s32 %s58, 1
    %s60 = scalar_select %p57, %s58, %s59
    %p63 = pneg %p57
    %p64 = scmp.eq.s32.totalorder %s10, 1
    %p65 = por %p63, %p64
    %p66 = scmp.ne.s32.totalorder %s58, %s61
    %p67 = scmp.eq.s32.totalorder %s10, 0
    %p68 = por %p66, %p67
    %p69 = scmp.ne.s32.totalorder %s58, %s61
    %p70 = scmp.eq.s32.totalorder %s15, 1
    %p71 = por %p69, %p70
    %p72 = scmp.ne.s32.totalorder %s61, %s62
    %p73 = scmp.eq.s32.totalorder %s15, 0
    %p74 = por %p72, %p73
    %p75 = scmp.ne.s32.totalorder %s61, %s62
    %p76 = scmp.eq.s32.totalorder %s16, 1
    %p77 = por %p75, %p76
    %p79 = scmp.ne.s32.totalorder %s62, %s78
    %p80 = scmp.eq.s32.totalorder %s16, 0
    %p81 = por %p79, %p80
    %s82 = ssub.s32 %s17, %s29
    %s83 = ssub.s32 %s18, %s25
    %s84 = sor.u32 %s82, %s83
    %p85 = scmp.eq.s32.totalorder %s84, 0
    %s87 = sadd.s32 %s86, 1
    %s88 = scalar_select %p85, %s86, %s87
    %p91 = pneg %p85
    %p92 = scmp.eq.s32.totalorder %s10, 1
    %p93 = por %p91, %p92
    %p94 = scmp.ne.s32.totalorder %s86, %s89
    %p95 = scmp.eq.s32.totalorder %s10, 0
    %p96 = por %p94, %p95
    %p97 = scmp.ne.s32.totalorder %s86, %s89
    %p98 = scmp.eq.s32.totalorder %s15, 1
    %p99 = por %p97, %p98
    %p100 = scmp.ne.s32.totalorder %s89, %s90
    %p101 = scmp.eq.s32.totalorder %s15, 0
    %p102 = por %p100, %p101
    %p103 = scmp.ne.s32.totalorder %s89, %s90
    %p104 = scmp.eq.s32.totalorder %s16, 1
    %p105 = por %p103, %p104
    %p107 = scmp.ne.s32.totalorder %s90, %s106
    %p108 = scmp.eq.s32.totalorder %s16, 0
    %p109 = por %p107, %p108
    %s111 = sadd.s32 %s110, 1
    %p114 = scmp.eq.s32.totalorder %s10, 1
    %p115 = scmp.ne.s32.totalorder %s110, %s112
    %p116 = scmp.eq.s32.totalorder %s10, 0
    %p117 = por %p115, %p116
    %p118 = scmp.ne.s32.totalorder %s110, %s112
    %p119 = scmp.eq.s32.totalorder %s15, 1
    %p120 = por %p118, %p119
    %p121 = scmp.ne.s32.totalorder %s112, %s113
    %p122 = scmp.eq.s32.totalorder %s15, 0
    %p123 = por %p121, %p122
    %p124 = scmp.ne.s32.totalorder %s112, %s113
    %p125 = scmp.eq.s32.totalorder %s16, 1
    %p126 = por %p124, %p125
    %p128 = scmp.ne.s32.totalorder %s113, %s127
    %p129 = scmp.eq.s32.totalorder %s16, 0
    %p130 = por %p128, %p129
    %s131 = ssub.s32 %s17, %s29
    %p132 = scmp.eq.s32.totalorder %s131, 0
    %s134 = sadd.s32 %s133, 1
    %s135 = scalar_select %p132, %s133, %s134
    %p138 = pneg %p132
    %p139 = scmp.eq.s32.totalorder %s10, 1
    %p140 = por %p138, %p139
    %p141 = scmp.ne.s32.totalorder %s133, %s136
    %p142 = scmp.eq.s32.totalorder %s10, 0
    %p143 = por %p141, %p142
    %p144 = scmp.ne.s32.totalorder %s133, %s136
    %p145 = scmp.eq.s32.totalorder %s15, 1
    %p146 = por %p144, %p145
    %p147 = scmp.ne.s32.totalorder %s136, %s137
    %p148 = scmp.eq.s32.totalorder %s15, 0
    %p149 = por %p147, %p148
    %p150 = scmp.ne.s32.totalorder %s136, %s137
    %p151 = scmp.eq.s32.totalorder %s16, 1
    %p152 = por %p150, %p151
    %p154 = scmp.ne.s32.totalorder %s137, %s153
    %p155 = scmp.eq.s32.totalorder %s16, 0
    %p156 = por %p154, %p155
    %p157 = scmp.le.s32.totalorder 1, %s10
    %p158 = scmp.lt.s32.totalorder %s10, 3
    %p159 = pnand %p157, %p158
    %p160 = pneg %p159
    // Predicated region
    $region9: #{boundary_loss.1} parent=5 // pred_check
      _
    $region10: #{boundary_loss.1} parent=5 // pred_check_branch
      %162 = sbr.rel (%p159) target = $region12
    $region11: #{boundary_loss.1} parent=5 // pred_region
      %s163 = ssub.s32 %s10, 1
      // Predicated region
      $region13: #{boundary_loss.1} parent=11 // pred_check
        %p164 = pneg %p123
      $region14: #{boundary_loss.1} parent=11 // pred_check_branch
        %166 = sbr.rel (%p164) target = $region16
      $region15: #{boundary_loss.1} parent=11 // pred_region
        _
      $region16: #{boundary_loss.1} parent=11 // pred_fallthru
        _
    $region12: #{boundary_loss.1} parent=5 // pred_fallthru
      _
    %p167 = scmp.lt.s32.totalorder %s10, 2
    // Predicated region
    $region17: #{boundary_loss.1} parent=5 // pred_check
      %p168 = pneg %p167
    $region18: #{boundary_loss.1} parent=5 // pred_check_branch
      %170 = sbr.rel (%p168) target = $region20
    $region19: #{boundary_loss.1} parent=5 // pred_region
      // Predicated region
      $region21: #{boundary_loss.1} parent=19 // pred_check
        %p171 = pneg %p42
      $region22: #{boundary_loss.1} parent=19 // pred_check_branch
        %173 = sbr.rel (%p171) target = $region24
      $region23: #{boundary_loss.1} parent=19 // pred_region
        %p174 = scmp.lt.s32.totalorder %s17, 1
        %s175 = scalar_select %p174, %s17, 1
        %s176 = smul.addr %s175, 4
        %s177 = smul.addr %s176, 4
        %s178 = scalar_lea.vmem %s0, %s177
      $region24: #{boundary_loss.1} parent=19 // pred_fallthru
        _
      // Predicated region
      $region25: #{boundary_loss.1} parent=19 // pred_check
        %p179 = pneg %p68
      $region26: #{boundary_loss.1} parent=19 // pred_check_branch
        %181 = sbr.rel (%p179) target = $region28
      $region27: #{boundary_loss.1} parent=19 // pred_region
        %p182 = scmp.lt.s32.totalorder %s17, 1
        %s183 = scalar_select %p182, %s17, 1
        %s184 = smul.addr %s183, 4
        %s185 = scalar_lea.vmem %s1, %s184
      $region28: #{boundary_loss.1} parent=19 // pred_fallthru
        _
      // Predicated region
      $region29: #{boundary_loss.1} parent=19 // pred_check
        %p186 = pneg %p96
      $region30: #{boundary_loss.1} parent=19 // pred_check_branch
        %188 = sbr.rel (%p186) target = $region32
      $region31: #{boundary_loss.1} parent=19 // pred_region
        %s189 = smul.u32 64, %s18
        %p190 = scmp.lt.s32.totalorder %s17, 1
        %s191 = scalar_select %p190, %s17, 1
        %p192 = scmp.lt.s32.totalorder %s189, 63
        %s193 = scalar_select %p192, %s189, 63
        %s194 = smul.addr %s191, 64
        %s195 = sadd.s32 %s193, %s194
        %s196 = smul.addr %s195, 8
        %s197 = scalar_lea.vmem %s2, %s196
        %s198 = smul.u32 64, %s18
      $region32: #{boundary_loss.1} parent=19 // pred_fallthru
        _
    $region20: #{boundary_loss.1} parent=5 // pred_fallthru
      _
    %p199 = scmp.le.s32.totalorder 1, %s10
    %p200 = scmp.lt.s32.totalorder %s10, 3
    %p201 = pnand %p199, %p200
    %p202 = pneg %p201
    // Predicated region
    $region33: #{boundary_loss.1} parent=5 // pred_check
      _
    $region34: #{boundary_loss.1} parent=5 // pred_check_branch
      %204 = sbr.rel (%p201) target = $region36
    $region35: #{boundary_loss.1} parent=5 // pred_region
      %s205 = ssub.s32 %s10, 1
      %p206 = scmp.lt.s32.totalorder %s19, 1
      %s207 = scalar_select %p206, %s19, 1
      %s208 = smul.addr %s207, 4
      %s209 = smul.addr %s208, 4
      %s210 = scalar_lea.vmem %s0, %s209
      %p211 = pneg %p48
      %p212 = pneg %p45
      %p213 = scmp.lt.s32.totalorder %s19, 1
      %s214 = scalar_select %p213, %s19, 1
      %s215 = smul.addr %s214, 4
      %s216 = scalar_lea.vmem %s1, %s215
      %p217 = pneg %p74
      %p218 = pneg %p71
      %s219 = smul.u32 64, %s20
      %p220 = scmp.lt.s32.totalorder %s19, 1
      %s221 = scalar_select %p220, %s19, 1
      %p222 = scmp.lt.s32.totalorder %s219, 63
      %s223 = scalar_select %p222, %s219, 63
      %s224 = smul.addr %s221, 64
      %s225 = sadd.s32 %s223, %s224
      %s226 = smul.addr %s225, 8
      %s227 = scalar_lea.vmem %s2, %s226
      %p228 = pneg %p102
      %p229 = pneg %p99
      %p230 = pneg %p123
      %p231 = pneg %p120
      %p232 = pneg %p149
      %p233 = pneg %p146
      %p234 = scmp.lt.s32.totalorder %s19, 1
      %s235 = scalar_select %p234, %s19, 1
      %s236 = smul.addr %s235, 8
      %s237 = scalar_lea.vmem %s4, %s236
      %p238 = scmp.lt.s32.totalorder %s19, 1
      %s239 = scalar_select %p238, %s19, 1
      %s240 = smul.addr %s239, 4
      %s241 = smul.addr %s240, 4
      %s242 = scalar_lea.vmem %s0, %s241
      %p243 = scmp.lt.s32.totalorder %s19, 1
      %s244 = scalar_select %p243, %s19, 1
      %s245 = smul.addr %s244, 4
      %s246 = scalar_lea.vmem %s1, %s245
      %s247 = smul.u32 64, %s20
      %p248 = scmp.lt.s32.totalorder %s19, 1
      %s249 = scalar_select %p248, %s19, 1
      %p250 = scmp.lt.s32.totalorder %s247, 63
      %s251 = scalar_select %p250, %s247, 63
      %s252 = smul.addr %s249, 64
      %s253 = sadd.s32 %s251, %s252
      %s254 = smul.addr %s253, 8
      %s255 = scalar_lea.vmem %s2, %s254
      %s256 = smul.u32 64, %s20
      %p257 = scmp.lt.s32.totalorder %s19, 1
      %s258 = scalar_select %p257, %s19, 1
      %s259 = smul.addr %s258, 8
      %s260 = scalar_lea.vmem %s4, %s259
      %p261 = scmp.eq.s32.totalorder %s20, 0
      // Predicated region
      $region37: #{boundary_loss.1} parent=35 // pred_check
        %p262 = pneg %p261
      $region38: #{boundary_loss.1} parent=35 // pred_check_branch
        %264 = sbr.rel (%p262) target = $region40
      $region39: #{boundary_loss.1} parent=35 // pred_region
        %265 = vst [vmem:[#allocation2] sm:$0x77] 1e+09
        %266 = vst [vmem:[#allocation2 + $0x8] sm:$0x77] 1e+09
      $region40: #{boundary_loss.1} parent=35 // pred_fallthru
        _
      %v267 = vld [vmem:[%s3] sm:$0xff]
      %v268 = vld [vmem:[%s3 + $0x8] sm:$0xff]
      %v269 = vld [vmem:[%s3 + $0x10] sm:$0xff]
      %v270 = vld [vmem:[%s3 + $0x18] sm:$0xff]
      %v271 = vld [vmem:[%s255] sm:$0xff]
      %v272 = vld [vmem:[%s255 + $0x8] sm:$0xff]
      %v273 = vld [vmem:[%s255 + $0x10] sm:$0xff]
      %v274 = vld [vmem:[%s255 + $0x18] sm:$0xff]
      %v275 = vld [vmem:[%s255 + $0x20] sm:$0xff]
      %v276 = vld [vmem:[%s255 + $0x28] sm:$0xff]
      %v277 = vld [vmem:[%s255 + $0x30] sm:$0xff]
      %v278 = vld [vmem:[%s255 + $0x38] sm:$0xff]
      %v279 = vld [vmem:[%s255 + $0x40] sm:$0xff]
      %v280 = vld [vmem:[%s255 + $0x48] sm:$0xff]
      %v281 = vld [vmem:[%s255 + $0x50] sm:$0xff]
      %v282 = vld [vmem:[%s255 + $0x58] sm:$0xff]
      %v283 = vld [vmem:[%s255 + $0x60] sm:$0xff]
      %v284 = vld [vmem:[%s255 + $0x68] sm:$0xff]
      %v285 = vld [vmem:[%s255 + $0x70] sm:$0xff]
      %v286 = vld [vmem:[%s255 + $0x78] sm:$0xff]
      %v287 = vld [vmem:[%s255 + $0x80] sm:$0xff]
      %v288 = vld [vmem:[%s255 + $0x88] sm:$0xff]
      %v289 = vld [vmem:[%s255 + $0x90] sm:$0xff]
      %v290 = vld [vmem:[%s255 + $0x98] sm:$0xff]
      %v291 = vld [vmem:[%s255 + $0xa0] sm:$0xff]
      %v292 = vld [vmem:[%s255 + $0xa8] sm:$0xff]
      %v293 = vld [vmem:[%s255 + $0xb0] sm:$0xff]
      %v294 = vld [vmem:[%s255 + $0xb8] sm:$0xff]
      %v295 = vld [vmem:[%s255 + $0xc0] sm:$0xff]
      %v296 = vld [vmem:[%s255 + $0xc8] sm:$0xff]
      %v297 = vld [vmem:[%s255 + $0xd0] sm:$0xff]
      %v298 = vld [vmem:[%s255 + $0xd8] sm:$0xff]
      %v299 = vld [vmem:[%s255 + $0xe0] sm:$0xff]
      %v300 = vld [vmem:[%s255 + $0xe8] sm:$0xff]
      %v301 = vld [vmem:[%s255 + $0xf0] sm:$0xff]
      %v302 = vld [vmem:[%s255 + $0xf8] sm:$0xff]
      %v303 = vld [vmem:[%s255 + $0x100] sm:$0xff]
      %v304 = vld [vmem:[%s255 + $0x108] sm:$0xff]
      %v305 = vld [vmem:[%s255 + $0x110] sm:$0xff]
      %v306 = vld [vmem:[%s255 + $0x118] sm:$0xff]
      %v307 = vld [vmem:[%s255 + $0x120] sm:$0xff]
      %v308 = vld [vmem:[%s255 + $0x128] sm:$0xff]
      %v309 = vld [vmem:[%s255 + $0x130] sm:$0xff]
      %v310 = vld [vmem:[%s255 + $0x138] sm:$0xff]
      %v311 = vld [vmem:[%s255 + $0x140] sm:$0xff]
      %v312 = vld [vmem:[%s255 + $0x148] sm:$0xff]
      %v313 = vld [vmem:[%s255 + $0x150] sm:$0xff]
      %v314 = vld [vmem:[%s255 + $0x158] sm:$0xff]
      %v315 = vld [vmem:[%s255 + $0x160] sm:$0xff]
      %v316 = vld [vmem:[%s255 + $0x168] sm:$0xff]
      %v317 = vld [vmem:[%s255 + $0x170] sm:$0xff]
      %v318 = vld [vmem:[%s255 + $0x178] sm:$0xff]
      %v319 = vld [vmem:[%s255 + $0x180] sm:$0xff]
      %v320 = vld [vmem:[%s255 + $0x188] sm:$0xff]
      %v321 = vld [vmem:[%s255 + $0x190] sm:$0xff]
      %v322 = vld [vmem:[%s255 + $0x198] sm:$0xff]
      %v323 = vld [vmem:[%s255 + $0x1a0] sm:$0xff]
      %v324 = vld [vmem:[%s255 + $0x1a8] sm:$0xff]
      %v325 = vld [vmem:[%s255 + $0x1b0] sm:$0xff]
      %v326 = vld [vmem:[%s255 + $0x1b8] sm:$0xff]
      %v327 = vld [vmem:[%s255 + $0x1c0] sm:$0xff]
      %v328 = vld [vmem:[%s255 + $0x1c8] sm:$0xff]
      %v329 = vld [vmem:[%s255 + $0x1d0] sm:$0xff]
      %v330 = vld [vmem:[%s255 + $0x1d8] sm:$0xff]
      %v331 = vld [vmem:[%s255 + $0x1e0] sm:$0xff]
      %v332 = vld [vmem:[%s255 + $0x1e8] sm:$0xff]
      %v333 = vld [vmem:[%s255 + $0x1f0] sm:$0xff]
      %v334 = vld [vmem:[%s255 + $0x1f8] sm:$0xff]
      %vm335 = vcmask 64512
      %v337 = vsel %vm335, %v271, 0
      %v340 = vsel %vm335, %v272, 0
      %v343 = vsel %vm335, %v273, 0
      %v346 = vsel %vm335, %v274, 0
      %v349 = vsel %vm335, %v275, 0
      %v352 = vsel %vm335, %v276, 0
      %v355 = vsel %vm335, %v277, 0
      %v358 = vsel %vm335, %v278, 0
      %v361 = vsel %vm335, %v279, 0
      %v364 = vsel %vm335, %v280, 0
      %v367 = vsel %vm335, %v281, 0
      %v370 = vsel %vm335, %v282, 0
      %v373 = vsel %vm335, %v283, 0
      %v376 = vsel %vm335, %v284, 0
      %v379 = vsel %vm335, %v285, 0
      %v382 = vsel %vm335, %v286, 0
      %v385 = vsel %vm335, %v287, 0
      %v388 = vsel %vm335, %v288, 0
      %v391 = vsel %vm335, %v289, 0
      %v394 = vsel %vm335, %v290, 0
      %v397 = vsel %vm335, %v291, 0
      %v400 = vsel %vm335, %v292, 0
      %v403 = vsel %vm335, %v293, 0
      %v406 = vsel %vm335, %v294, 0
      %v409 = vsel %vm335, %v295, 0
      %v412 = vsel %vm335, %v296, 0
      %v415 = vsel %vm335, %v297, 0
      %v418 = vsel %vm335, %v298, 0
      %v421 = vsel %vm335, %v299, 0
      %v424 = vsel %vm335, %v300, 0
      %v427 = vsel %vm335, %v301, 0
      %v430 = vsel %vm335, %v302, 0
      %v433 = vsel %vm335, %v303, 0
      %v436 = vsel %vm335, %v304, 0
      %v439 = vsel %vm335, %v305, 0
      %v442 = vsel %vm335, %v306, 0
      %v445 = vsel %vm335, %v307, 0
      %v448 = vsel %vm335, %v308, 0
      %v451 = vsel %vm335, %v309, 0
      %v454 = vsel %vm335, %v310, 0
      %v457 = vsel %vm335, %v311, 0
      %v460 = vsel %vm335, %v312, 0
      %v463 = vsel %vm335, %v313, 0
      %v466 = vsel %vm335, %v314, 0
      %v469 = vsel %vm335, %v315, 0
      %v472 = vsel %vm335, %v316, 0
      %v475 = vsel %vm335, %v317, 0
      %v478 = vsel %vm335, %v318, 0
      %v481 = vsel %vm335, %v319, 0
      %v484 = vsel %vm335, %v320, 0
      %v487 = vsel %vm335, %v321, 0
      %v490 = vsel %vm335, %v322, 0
      %v493 = vsel %vm335, %v323, 0
      %v496 = vsel %vm335, %v324, 0
      %v499 = vsel %vm335, %v325, 0
      %v502 = vsel %vm335, %v326, 0
      %v505 = vsel %vm335, %v327, 0
      %v508 = vsel %vm335, %v328, 0
      %v511 = vsel %vm335, %v329, 0
      %v514 = vsel %vm335, %v330, 0
      %v517 = vsel %vm335, %v331, 0
      %v520 = vsel %vm335, %v332, 0
      %v523 = vsel %vm335, %v333, 0
      %v526 = vsel %vm335, %v334, 0
      %528 = vmatpush.msra.mxu0 0.0
      %529 = vmatpush.msra.mxu0 0.0
      %530 = vmatpush.msra.mxu0 0.0
      %531 = vmatpush.msra.mxu0 0.0
      %532 = vmatpush.msra.mxu0 0.0
      %533 = vmatpush.msra.mxu0 0.0
      %534 = vmatpush.msra.mxu0 0.0
      %535 = vmatpush.msra.mxu0 0.0
      %536 = vmatpush.msra.mxu0 0.0
      %537 = vmatpush.msra.mxu0 0.0
      %538 = vmatpush.msra.mxu0 0.0
      %539 = vmatpush.msra.mxu0 0.0
      %540 = vmatpush.msra.mxu0 0.0
      %541 = vmatpush.msra.mxu0 0.0
      %542 = vmatpush.msra.mxu0 0.0
      %543 = vmatpush.msra.mxu0 %v267
      %544 = vmatmul.f32.gmra.mxu0 %v337
      %v545 = vpop.f32.mrf.mxu0
      %v546 = vadd.f32 0.0, %v545
      %547 = vmatmul.f32.gmra.mxu0 %v340
      %v548 = vpop.f32.mrf.mxu0
      %v549 = vadd.f32 0.0, %v548
      %550 = vmatmul.f32.gmra.mxu0 %v343
      %v551 = vpop.f32.mrf.mxu0
      %v552 = vadd.f32 0.0, %v551
      %553 = vmatmul.f32.gmra.mxu0 %v346
      %v554 = vpop.f32.mrf.mxu0
      %v555 = vadd.f32 0.0, %v554
      %556 = vmatmul.f32.gmra.mxu0 %v349
      %v557 = vpop.f32.mrf.mxu0
      %v558 = vadd.f32 0.0, %v557
      %559 = vmatmul.f32.gmra.mxu0 %v352
      %v560 = vpop.f32.mrf.mxu0
      %v561 = vadd.f32 0.0, %v560
      %562 = vmatmul.f32.gmra.mxu0 %v355
      %v563 = vpop.f32.mrf.mxu0
      %v564 = vadd.f32 0.0, %v563
      %565 = vmatmul.f32.gmra.mxu0 %v358
      %v566 = vpop.f32.mrf.mxu0
      %v567 = vadd.f32 0.0, %v566
      %568 = vmatmul.f32.gmra.mxu0 %v361
      %v569 = vpop.f32.mrf.mxu0
      %v570 = vadd.f32 0.0, %v569
      %571 = vmatmul.f32.gmra.mxu0 %v364
      %v572 = vpop.f32.mrf.mxu0
      %v573 = vadd.f32 0.0, %v572
      %574 = vmatmul.f32.gmra.mxu0 %v367
      %v575 = vpop.f32.mrf.mxu0
      %v576 = vadd.f32 0.0, %v575
      %577 = vmatmul.f32.gmra.mxu0 %v370
      %v578 = vpop.f32.mrf.mxu0
      %v579 = vadd.f32 0.0, %v578
      %580 = vmatmul.f32.gmra.mxu0 %v373
      %v581 = vpop.f32.mrf.mxu0
      %v582 = vadd.f32 0.0, %v581
      %583 = vmatmul.f32.gmra.mxu0 %v376
      %v584 = vpop.f32.mrf.mxu0
      %v585 = vadd.f32 0.0, %v584
      %586 = vmatmul.f32.gmra.mxu0 %v379
      %v587 = vpop.f32.mrf.mxu0
      %v588 = vadd.f32 0.0, %v587
      %589 = vmatmul.f32.gmra.mxu0 %v382
      %v590 = vpop.f32.mrf.mxu0
      %v591 = vadd.f32 0.0, %v590
      %592 = vmatmul.f32.gmra.mxu0 %v385
      %v593 = vpop.f32.mrf.mxu0
      %v594 = vadd.f32 0.0, %v593
      %595 = vmatmul.f32.gmra.mxu0 %v388
      %v596 = vpop.f32.mrf.mxu0
      %v597 = vadd.f32 0.0, %v596
      %598 = vmatmul.f32.gmra.mxu0 %v391
      %v599 = vpop.f32.mrf.mxu0
      %v600 = vadd.f32 0.0, %v599
      %601 = vmatmul.f32.gmra.mxu0 %v394
      %v602 = vpop.f32.mrf.mxu0
      %v603 = vadd.f32 0.0, %v602
      %604 = vmatmul.f32.gmra.mxu0 %v397
      %v605 = vpop.f32.mrf.mxu0
      %v606 = vadd.f32 0.0, %v605
      %607 = vmatmul.f32.gmra.mxu0 %v400
      %v608 = vpop.f32.mrf.mxu0
      %v609 = vadd.f32 0.0, %v608
      %610 = vmatmul.f32.gmra.mxu0 %v403
      %v611 = vpop.f32.mrf.mxu0
      %v612 = vadd.f32 0.0, %v611
      %613 = vmatmul.f32.gmra.mxu0 %v406
      %v614 = vpop.f32.mrf.mxu0
      %v615 = vadd.f32 0.0, %v614
      %616 = vmatmul.f32.gmra.mxu0 %v409
      %v617 = vpop.f32.mrf.mxu0
      %v618 = vadd.f32 0.0, %v617
      %619 = vmatmul.f32.gmra.mxu0 %v412
      %v620 = vpop.f32.mrf.mxu0
      %v621 = vadd.f32 0.0, %v620
      %622 = vmatmul.f32.gmra.mxu0 %v415
      %v623 = vpop.f32.mrf.mxu0
      %v624 = vadd.f32 0.0, %v623
      %625 = vmatmul.f32.gmra.mxu0 %v418
      %v626 = vpop.f32.mrf.mxu0
      %v627 = vadd.f32 0.0, %v626
      %628 = vmatmul.f32.gmra.mxu0 %v421
      %v629 = vpop.f32.mrf.mxu0
      %v630 = vadd.f32 0.0, %v629
      %631 = vmatmul.f32.gmra.mxu0 %v424
      %v632 = vpop.f32.mrf.mxu0
      %v633 = vadd.f32 0.0, %v632
      %634 = vmatmul.f32.gmra.mxu0 %v427
      %v635 = vpop.f32.mrf.mxu0
      %v636 = vadd.f32 0.0, %v635
      %637 = vmatmul.f32.gmra.mxu0 %v430
      %v638 = vpop.f32.mrf.mxu0
      %v639 = vadd.f32 0.0, %v638
      %640 = vmatmul.f32.gmra.mxu0 %v433
      %v641 = vpop.f32.mrf.mxu0
      %v642 = vadd.f32 0.0, %v641
      %643 = vmatmul.f32.gmra.mxu0 %v436
      %v644 = vpop.f32.mrf.mxu0
      %v645 = vadd.f32 0.0, %v644
      %646 = vmatmul.f32.gmra.mxu0 %v439
      %v647 = vpop.f32.mrf.mxu0
      %v648 = vadd.f32 0.0, %v647
      %649 = vmatmul.f32.gmra.mxu0 %v442
      %v650 = vpop.f32.mrf.mxu0
      %v651 = vadd.f32 0.0, %v650
      %652 = vmatmul.f32.gmra.mxu0 %v445
      %v653 = vpop.f32.mrf.mxu0
      %v654 = vadd.f32 0.0, %v653
      %655 = vmatmul.f32.gmra.mxu0 %v448
      %v656 = vpop.f32.mrf.mxu0
      %v657 = vadd.f32 0.0, %v656
      %658 = vmatmul.f32.gmra.mxu0 %v451
      %v659 = vpop.f32.mrf.mxu0
      %v660 = vadd.f32 0.0, %v659
      %661 = vmatmul.f32.gmra.mxu0 %v454
      %v662 = vpop.f32.mrf.mxu0
      %v663 = vadd.f32 0.0, %v662
      %664 = vmatmul.f32.gmra.mxu0 %v457
      %v665 = vpop.f32.mrf.mxu0
      %v666 = vadd.f32 0.0, %v665
      %667 = vmatmul.f32.gmra.mxu0 %v460
      %v668 = vpop.f32.mrf.mxu0
      %v669 = vadd.f32 0.0, %v668
      %670 = vmatmul.f32.gmra.mxu0 %v463
      %v671 = vpop.f32.mrf.mxu0
      %v672 = vadd.f32 0.0, %v671
      %673 = vmatmul.f32.gmra.mxu0 %v466
      %v674 = vpop.f32.mrf.mxu0
      %v675 = vadd.f32 0.0, %v674
      %676 = vmatmul.f32.gmra.mxu0 %v469
      %v677 = vpop.f32.mrf.mxu0
      %v678 = vadd.f32 0.0, %v677
      %679 = vmatmul.f32.gmra.mxu0 %v472
      %v680 = vpop.f32.mrf.mxu0
      %v681 = vadd.f32 0.0, %v680
      %682 = vmatmul.f32.gmra.mxu0 %v475
      %v683 = vpop.f32.mrf.mxu0
      %v684 = vadd.f32 0.0, %v683
      %685 = vmatmul.f32.gmra.mxu0 %v478
      %v686 = vpop.f32.mrf.mxu0
      %v687 = vadd.f32 0.0, %v686
      %688 = vmatmul.f32.gmra.mxu0 %v481
      %v689 = vpop.f32.mrf.mxu0
      %v690 = vadd.f32 0.0, %v689
      %691 = vmatmul.f32.gmra.mxu0 %v484
      %v692 = vpop.f32.mrf.mxu0
      %v693 = vadd.f32 0.0, %v692
      %694 = vmatmul.f32.gmra.mxu0 %v487
      %v695 = vpop.f32.mrf.mxu0
      %v696 = vadd.f32 0.0, %v695
      %697 = vmatmul.f32.gmra.mxu0 %v490
      %v698 = vpop.f32.mrf.mxu0
      %v699 = vadd.f32 0.0, %v698
      %700 = vmatmul.f32.gmra.mxu0 %v493
      %v701 = vpop.f32.mrf.mxu0
      %v702 = vadd.f32 0.0, %v701
      %703 = vmatmul.f32.gmra.mxu0 %v496
      %v704 = vpop.f32.mrf.mxu0
      %v705 = vadd.f32 0.0, %v704
      %706 = vmatmul.f32.gmra.mxu0 %v499
      %v707 = vpop.f32.mrf.mxu0
      %v708 = vadd.f32 0.0, %v707
      %709 = vmatmul.f32.gmra.mxu0 %v502
      %v710 = vpop.f32.mrf.mxu0
      %v711 = vadd.f32 0.0, %v710
      %712 = vmatmul.f32.gmra.mxu0 %v505
      %v713 = vpop.f32.mrf.mxu0
      %v714 = vadd.f32 0.0, %v713
      %715 = vmatmul.f32.gmra.mxu0 %v508
      %v716 = vpop.f32.mrf.mxu0
      %v717 = vadd.f32 0.0, %v716
      %718 = vmatmul.f32.gmra.mxu0 %v511
      %v719 = vpop.f32.mrf.mxu0
      %v720 = vadd.f32 0.0, %v719
      %721 = vmatmul.f32.gmra.mxu0 %v514
      %v722 = vpop.f32.mrf.mxu0
      %v723 = vadd.f32 0.0, %v722
      %724 = vmatmul.f32.gmra.mxu0 %v517
      %v725 = vpop.f32.mrf.mxu0
      %v726 = vadd.f32 0.0, %v725
      %727 = vmatmul.f32.gmra.mxu0 %v520
      %v728 = vpop.f32.mrf.mxu0
      %v729 = vadd.f32 0.0, %v728
      %730 = vmatmul.f32.gmra.mxu0 %v523
      %v731 = vpop.f32.mrf.mxu0
      %v732 = vadd.f32 0.0, %v731
      %733 = vmatmul.f32.gmra.mxu0 %v526
      %v734 = vpop.f32.mrf.mxu0
      %v735 = vadd.f32 0.0, %v734
      %736 = vdwg.mxu0
      %737 = vmatpush.msra.mxu0 0.0
      %738 = vmatpush.msra.mxu0 0.0
      %739 = vmatpush.msra.mxu0 0.0
      %740 = vmatpush.msra.mxu0 0.0
      %741 = vmatpush.msra.mxu0 0.0
      %742 = vmatpush.msra.mxu0 0.0
      %743 = vmatpush.msra.mxu0 0.0
      %744 = vmatpush.msra.mxu0 0.0
      %745 = vmatpush.msra.mxu0 0.0
      %746 = vmatpush.msra.mxu0 0.0
      %747 = vmatpush.msra.mxu0 0.0
      %748 = vmatpush.msra.mxu0 0.0
      %749 = vmatpush.msra.mxu0 0.0
      %750 = vmatpush.msra.mxu0 0.0
      %751 = vmatpush.msra.mxu0 0.0
      %752 = vmatpush.msra.mxu0 %v268
      %753 = vmatmul.f32.gmra.mxu0 %v337
      %v754 = vpop.f32.mrf.mxu0
      %v755 = vadd.f32 0.0, %v754
      %756 = vmatmul.f32.gmra.mxu0 %v340
      %v757 = vpop.f32.mrf.mxu0
      %v758 = vadd.f32 0.0, %v757
      %759 = vmatmul.f32.gmra.mxu0 %v343
      %v760 = vpop.f32.mrf.mxu0
      %v761 = vadd.f32 0.0, %v760
      %762 = vmatmul.f32.gmra.mxu0 %v346
      %v763 = vpop.f32.mrf.mxu0
      %v764 = vadd.f32 0.0, %v763
      %765 = vmatmul.f32.gmra.mxu0 %v349
      %v766 = vpop.f32.mrf.mxu0
      %v767 = vadd.f32 0.0, %v766
      %768 = vmatmul.f32.gmra.mxu0 %v352
      %v769 = vpop.f32.mrf.mxu0
      %v770 = vadd.f32 0.0, %v769
      %771 = vmatmul.f32.gmra.mxu0 %v355
      %v772 = vpop.f32.mrf.mxu0
      %v773 = vadd.f32 0.0, %v772
      %774 = vmatmul.f32.gmra.mxu0 %v358
      %v775 = vpop.f32.mrf.mxu0
      %v776 = vadd.f32 0.0, %v775
      %777 = vmatmul.f32.gmra.mxu0 %v361
      %v778 = vpop.f32.mrf.mxu0
      %v779 = vadd.f32 0.0, %v778
      %780 = vmatmul.f32.gmra.mxu0 %v364
      %v781 = vpop.f32.mrf.mxu0
      %v782 = vadd.f32 0.0, %v781
      %783 = vmatmul.f32.gmra.mxu0 %v367
      %v784 = vpop.f32.mrf.mxu0
      %v785 = vadd.f32 0.0, %v784
      %786 = vmatmul.f32.gmra.mxu0 %v370
      %v787 = vpop.f32.mrf.mxu0
      %v788 = vadd.f32 0.0, %v787
      %789 = vmatmul.f32.gmra.mxu0 %v373
      %v790 = vpop.f32.mrf.mxu0
      %v791 = vadd.f32 0.0, %v790
      %792 = vmatmul.f32.gmra.mxu0 %v376
      %v793 = vpop.f32.mrf.mxu0
      %v794 = vadd.f32 0.0, %v793
      %795 = vmatmul.f32.gmra.mxu0 %v379
      %v796 = vpop.f32.mrf.mxu0
      %v797 = vadd.f32 0.0, %v796
      %798 = vmatmul.f32.gmra.mxu0 %v382
      %v799 = vpop.f32.mrf.mxu0
      %v800 = vadd.f32 0.0, %v799
      %801 = vmatmul.f32.gmra.mxu0 %v385
      %v802 = vpop.f32.mrf.mxu0
      %v803 = vadd.f32 0.0, %v802
      %804 = vmatmul.f32.gmra.mxu0 %v388
      %v805 = vpop.f32.mrf.mxu0
      %v806 = vadd.f32 0.0, %v805
      %807 = vmatmul.f32.gmra.mxu0 %v391
      %v808 = vpop.f32.mrf.mxu0
      %v809 = vadd.f32 0.0, %v808
      %810 = vmatmul.f32.gmra.mxu0 %v394
      %v811 = vpop.f32.mrf.mxu0
      %v812 = vadd.f32 0.0, %v811
      %813 = vmatmul.f32.gmra.mxu0 %v397
      %v814 = vpop.f32.mrf.mxu0
      %v815 = vadd.f32 0.0, %v814
      %816 = vmatmul.f32.gmra.mxu0 %v400
      %v817 = vpop.f32.mrf.mxu0
      %v818 = vadd.f32 0.0, %v817
      %819 = vmatmul.f32.gmra.mxu0 %v403
      %v820 = vpop.f32.mrf.mxu0
      %v821 = vadd.f32 0.0, %v820
      %822 = vmatmul.f32.gmra.mxu0 %v406
      %v823 = vpop.f32.mrf.mxu0
      %v824 = vadd.f32 0.0, %v823
      %825 = vmatmul.f32.gmra.mxu0 %v409
      %v826 = vpop.f32.mrf.mxu0
      %v827 = vadd.f32 0.0, %v826
      %828 = vmatmul.f32.gmra.mxu0 %v412
      %v829 = vpop.f32.mrf.mxu0
      %v830 = vadd.f32 0.0, %v829
      %831 = vmatmul.f32.gmra.mxu0 %v415
      %v832 = vpop.f32.mrf.mxu0
      %v833 = vadd.f32 0.0, %v832
      %834 = vmatmul.f32.gmra.mxu0 %v418
      %v835 = vpop.f32.mrf.mxu0
      %v836 = vadd.f32 0.0, %v835
      %837 = vmatmul.f32.gmra.mxu0 %v421
      %v838 = vpop.f32.mrf.mxu0
      %v839 = vadd.f32 0.0, %v838
      %840 = vmatmul.f32.gmra.mxu0 %v424
      %v841 = vpop.f32.mrf.mxu0
      %v842 = vadd.f32 0.0, %v841
      %843 = vmatmul.f32.gmra.mxu0 %v427
      %v844 = vpop.f32.mrf.mxu0
      %v845 = vadd.f32 0.0, %v844
      %846 = vmatmul.f32.gmra.mxu0 %v430
      %v847 = vpop.f32.mrf.mxu0
      %v848 = vadd.f32 0.0, %v847
      %849 = vmatmul.f32.gmra.mxu0 %v433
      %v850 = vpop.f32.mrf.mxu0
      %v851 = vadd.f32 0.0, %v850
      %852 = vmatmul.f32.gmra.mxu0 %v436
      %v853 = vpop.f32.mrf.mxu0
      %v854 = vadd.f32 0.0, %v853
      %855 = vmatmul.f32.gmra.mxu0 %v439
      %v856 = vpop.f32.mrf.mxu0
      %v857 = vadd.f32 0.0, %v856
      %858 = vmatmul.f32.gmra.mxu0 %v442
      %v859 = vpop.f32.mrf.mxu0
      %v860 = vadd.f32 0.0, %v859
      %861 = vmatmul.f32.gmra.mxu0 %v445
      %v862 = vpop.f32.mrf.mxu0
      %v863 = vadd.f32 0.0, %v862
      %864 = vmatmul.f32.gmra.mxu0 %v448
      %v865 = vpop.f32.mrf.mxu0
      %v866 = vadd.f32 0.0, %v865
      %867 = vmatmul.f32.gmra.mxu0 %v451
      %v868 = vpop.f32.mrf.mxu0
      %v869 = vadd.f32 0.0, %v868
      %870 = vmatmul.f32.gmra.mxu0 %v454
      %v871 = vpop.f32.mrf.mxu0
      %v872 = vadd.f32 0.0, %v871
      %873 = vmatmul.f32.gmra.mxu0 %v457
      %v874 = vpop.f32.mrf.mxu0
      %v875 = vadd.f32 0.0, %v874
      %876 = vmatmul.f32.gmra.mxu0 %v460
      %v877 = vpop.f32.mrf.mxu0
      %v878 = vadd.f32 0.0, %v877
      %879 = vmatmul.f32.gmra.mxu0 %v463
      %v880 = vpop.f32.mrf.mxu0
      %v881 = vadd.f32 0.0, %v880
      %882 = vmatmul.f32.gmra.mxu0 %v466
      %v883 = vpop.f32.mrf.mxu0
      %v884 = vadd.f32 0.0, %v883
      %885 = vmatmul.f32.gmra.mxu0 %v469
      %v886 = vpop.f32.mrf.mxu0
      %v887 = vadd.f32 0.0, %v886
      %888 = vmatmul.f32.gmra.mxu0 %v472
      %v889 = vpop.f32.mrf.mxu0
      %v890 = vadd.f32 0.0, %v889
      %891 = vmatmul.f32.gmra.mxu0 %v475
      %v892 = vpop.f32.mrf.mxu0
      %v893 = vadd.f32 0.0, %v892
      %894 = vmatmul.f32.gmra.mxu0 %v478
      %v895 = vpop.f32.mrf.mxu0
      %v896 = vadd.f32 0.0, %v895
      %897 = vmatmul.f32.gmra.mxu0 %v481
      %v898 = vpop.f32.mrf.mxu0
      %v899 = vadd.f32 0.0, %v898
      %900 = vmatmul.f32.gmra.mxu0 %v484
      %v901 = vpop.f32.mrf.mxu0
      %v902 = vadd.f32 0.0, %v901
      %903 = vmatmul.f32.gmra.mxu0 %v487
      %v904 = vpop.f32.mrf.mxu0
      %v905 = vadd.f32 0.0, %v904
      %906 = vmatmul.f32.gmra.mxu0 %v490
      %v907 = vpop.f32.mrf.mxu0
      %v908 = vadd.f32 0.0, %v907
      %909 = vmatmul.f32.gmra.mxu0 %v493
      %v910 = vpop.f32.mrf.mxu0
      %v911 = vadd.f32 0.0, %v910
      %912 = vmatmul.f32.gmra.mxu0 %v496
      %v913 = vpop.f32.mrf.mxu0
      %v914 = vadd.f32 0.0, %v913
      %915 = vmatmul.f32.gmra.mxu0 %v499
      %v916 = vpop.f32.mrf.mxu0
      %v917 = vadd.f32 0.0, %v916
      %918 = vmatmul.f32.gmra.mxu0 %v502
      %v919 = vpop.f32.mrf.mxu0
      %v920 = vadd.f32 0.0, %v919
      %921 = vmatmul.f32.gmra.mxu0 %v505
      %v922 = vpop.f32.mrf.mxu0
      %v923 = vadd.f32 0.0, %v922
      %924 = vmatmul.f32.gmra.mxu0 %v508
      %v925 = vpop.f32.mrf.mxu0
      %v926 = vadd.f32 0.0, %v925
      %927 = vmatmul.f32.gmra.mxu0 %v511
      %v928 = vpop.f32.mrf.mxu0
      %v929 = vadd.f32 0.0, %v928
      %930 = vmatmul.f32.gmra.mxu0 %v514
      %v931 = vpop.f32.mrf.mxu0
      %v932 = vadd.f32 0.0, %v931
      %933 = vmatmul.f32.gmra.mxu0 %v517
      %v934 = vpop.f32.mrf.mxu0
      %v935 = vadd.f32 0.0, %v934
      %936 = vmatmul.f32.gmra.mxu0 %v520
      %v937 = vpop.f32.mrf.mxu0
      %v938 = vadd.f32 0.0, %v937
      %939 = vmatmul.f32.gmra.mxu0 %v523
      %v940 = vpop.f32.mrf.mxu0
      %v941 = vadd.f32 0.0, %v940
      %942 = vmatmul.f32.gmra.mxu0 %v526
      %v943 = vpop.f32.mrf.mxu0
      %v944 = vadd.f32 0.0, %v943
      %945 = vdwg.mxu0
      %946 = vmatpush.msra.mxu0 0.0
      %947 = vmatpush.msra.mxu0 0.0
      %948 = vmatpush.msra.mxu0 0.0
      %949 = vmatpush.msra.mxu0 0.0
      %950 = vmatpush.msra.mxu0 0.0
      %951 = vmatpush.msra.mxu0 0.0
      %952 = vmatpush.msra.mxu0 0.0
      %953 = vmatpush.msra.mxu0 0.0
      %954 = vmatpush.msra.mxu0 0.0
      %955 = vmatpush.msra.mxu0 0.0
      %956 = vmatpush.msra.mxu0 0.0
      %957 = vmatpush.msra.mxu0 0.0
      %958 = vmatpush.msra.mxu0 0.0
      %959 = vmatpush.msra.mxu0 0.0
      %960 = vmatpush.msra.mxu0 0.0
      %961 = vmatpush.msra.mxu0 %v269
      %962 = vmatmul.f32.gmra.mxu0 %v337
      %v963 = vpop.f32.mrf.mxu0
      %v964 = vadd.f32 0.0, %v963
      %965 = vmatmul.f32.gmra.mxu0 %v340
      %v966 = vpop.f32.mrf.mxu0
      %v967 = vadd.f32 0.0, %v966
      %968 = vmatmul.f32.gmra.mxu0 %v343
      %v969 = vpop.f32.mrf.mxu0
      %v970 = vadd.f32 0.0, %v969
      %971 = vmatmul.f32.gmra.mxu0 %v346
      %v972 = vpop.f32.mrf.mxu0
      %v973 = vadd.f32 0.0, %v972
      %974 = vmatmul.f32.gmra.mxu0 %v349
      %v975 = vpop.f32.mrf.mxu0
      %v976 = vadd.f32 0.0, %v975
      %977 = vmatmul.f32.gmra.mxu0 %v352
      %v978 = vpop.f32.mrf.mxu0
      %v979 = vadd.f32 0.0, %v978
      %980 = vmatmul.f32.gmra.mxu0 %v355
      %v981 = vpop.f32.mrf.mxu0
      %v982 = vadd.f32 0.0, %v981
      %983 = vmatmul.f32.gmra.mxu0 %v358
      %v984 = vpop.f32.mrf.mxu0
      %v985 = vadd.f32 0.0, %v984
      %986 = vmatmul.f32.gmra.mxu0 %v361
      %v987 = vpop.f32.mrf.mxu0
      %v988 = vadd.f32 0.0, %v987
      %989 = vmatmul.f32.gmra.mxu0 %v364
      %v990 = vpop.f32.mrf.mxu0
      %v991 = vadd.f32 0.0, %v990
      %992 = vmatmul.f32.gmra.mxu0 %v367
      %v993 = vpop.f32.mrf.mxu0
      %v994 = vadd.f32 0.0, %v993
      %995 = vmatmul.f32.gmra.mxu0 %v370
      %v996 = vpop.f32.mrf.mxu0
      %v997 = vadd.f32 0.0, %v996
      %998 = vmatmul.f32.gmra.mxu0 %v373
      %v999 = vpop.f32.mrf.mxu0
      %v1000 = vadd.f32 0.0, %v999
      %1001 = vmatmul.f32.gmra.mxu0 %v376
      %v1002 = vpop.f32.mrf.mxu0
      %v1003 = vadd.f32 0.0, %v1002
      %1004 = vmatmul.f32.gmra.mxu0 %v379
      %v1005 = vpop.f32.mrf.mxu0
      %v1006 = vadd.f32 0.0, %v1005
      %1007 = vmatmul.f32.gmra.mxu0 %v382
      %v1008 = vpop.f32.mrf.mxu0
      %v1009 = vadd.f32 0.0, %v1008
      %1010 = vmatmul.f32.gmra.mxu0 %v385
      %v1011 = vpop.f32.mrf.mxu0
      %v1012 = vadd.f32 0.0, %v1011
      %1013 = vmatmul.f32.gmra.mxu0 %v388
      %v1014 = vpop.f32.mrf.mxu0
      %v1015 = vadd.f32 0.0, %v1014
      %1016 = vmatmul.f32.gmra.mxu0 %v391
      %v1017 = vpop.f32.mrf.mxu0
      %v1018 = vadd.f32 0.0, %v1017
      %1019 = vmatmul.f32.gmra.mxu0 %v394
      %v1020 = vpop.f32.mrf.mxu0
      %v1021 = vadd.f32 0.0, %v1020
      %1022 = vmatmul.f32.gmra.mxu0 %v397
      %v1023 = vpop.f32.mrf.mxu0
      %v1024 = vadd.f32 0.0, %v1023
      %1025 = vmatmul.f32.gmra.mxu0 %v400
      %v1026 = vpop.f32.mrf.mxu0
      %v1027 = vadd.f32 0.0, %v1026
      %1028 = vmatmul.f32.gmra.mxu0 %v403
      %v1029 = vpop.f32.mrf.mxu0
      %v1030 = vadd.f32 0.0, %v1029
      %1031 = vmatmul.f32.gmra.mxu0 %v406
      %v1032 = vpop.f32.mrf.mxu0
      %v1033 = vadd.f32 0.0, %v1032
      %1034 = vmatmul.f32.gmra.mxu0 %v409
      %v1035 = vpop.f32.mrf.mxu0
      %v1036 = vadd.f32 0.0, %v1035
      %1037 = vmatmul.f32.gmra.mxu0 %v412
      %v1038 = vpop.f32.mrf.mxu0
      %v1039 = vadd.f32 0.0, %v1038
      %1040 = vmatmul.f32.gmra.mxu0 %v415
      %v1041 = vpop.f32.mrf.mxu0
      %v1042 = vadd.f32 0.0, %v1041
      %1043 = vmatmul.f32.gmra.mxu0 %v418
      %v1044 = vpop.f32.mrf.mxu0
      %v1045 = vadd.f32 0.0, %v1044
      %1046 = vmatmul.f32.gmra.mxu0 %v421
      %v1047 = vpop.f32.mrf.mxu0
      %v1048 = vadd.f32 0.0, %v1047
      %1049 = vmatmul.f32.gmra.mxu0 %v424
      %v1050 = vpop.f32.mrf.mxu0
      %v1051 = vadd.f32 0.0, %v1050
      %1052 = vmatmul.f32.gmra.mxu0 %v427
      %v1053 = vpop.f32.mrf.mxu0
      %v1054 = vadd.f32 0.0, %v1053
      %1055 = vmatmul.f32.gmra.mxu0 %v430
      %v1056 = vpop.f32.mrf.mxu0
      %v1057 = vadd.f32 0.0, %v1056
      %1058 = vmatmul.f32.gmra.mxu0 %v433
      %v1059 = vpop.f32.mrf.mxu0
      %v1060 = vadd.f32 0.0, %v1059
      %1061 = vmatmul.f32.gmra.mxu0 %v436
      %v1062 = vpop.f32.mrf.mxu0
      %v1063 = vadd.f32 0.0, %v1062
      %1064 = vmatmul.f32.gmra.mxu0 %v439
      %v1065 = vpop.f32.mrf.mxu0
      %v1066 = vadd.f32 0.0, %v1065
      %1067 = vmatmul.f32.gmra.mxu0 %v442
      %v1068 = vpop.f32.mrf.mxu0
      %v1069 = vadd.f32 0.0, %v1068
      %1070 = vmatmul.f32.gmra.mxu0 %v445
      %v1071 = vpop.f32.mrf.mxu0
      %v1072 = vadd.f32 0.0, %v1071
      %1073 = vmatmul.f32.gmra.mxu0 %v448
      %v1074 = vpop.f32.mrf.mxu0
      %v1075 = vadd.f32 0.0, %v1074
      %1076 = vmatmul.f32.gmra.mxu0 %v451
      %v1077 = vpop.f32.mrf.mxu0
      %v1078 = vadd.f32 0.0, %v1077
      %1079 = vmatmul.f32.gmra.mxu0 %v454
      %v1080 = vpop.f32.mrf.mxu0
      %v1081 = vadd.f32 0.0, %v1080
      %1082 = vmatmul.f32.gmra.mxu0 %v457
      %v1083 = vpop.f32.mrf.mxu0
      %v1084 = vadd.f32 0.0, %v1083
      %1085 = vmatmul.f32.gmra.mxu0 %v460
      %v1086 = vpop.f32.mrf.mxu0
      %v1087 = vadd.f32 0.0, %v1086
      %1088 = vmatmul.f32.gmra.mxu0 %v463
      %v1089 = vpop.f32.mrf.mxu0
      %v1090 = vadd.f32 0.0, %v1089
      %1091 = vmatmul.f32.gmra.mxu0 %v466
      %v1092 = vpop.f32.mrf.mxu0
      %v1093 = vadd.f32 0.0, %v1092
      %1094 = vmatmul.f32.gmra.mxu0 %v469
      %v1095 = vpop.f32.mrf.mxu0
      %v1096 = vadd.f32 0.0, %v1095
      %1097 = vmatmul.f32.gmra.mxu0 %v472
      %v1098 = vpop.f32.mrf.mxu0
      %v1099 = vadd.f32 0.0, %v1098
      %1100 = vmatmul.f32.gmra.mxu0 %v475
      %v1101 = vpop.f32.mrf.mxu0
      %v1102 = vadd.f32 0.0, %v1101
      %1103 = vmatmul.f32.gmra.mxu0 %v478
      %v1104 = vpop.f32.mrf.mxu0
      %v1105 = vadd.f32 0.0, %v1104
      %1106 = vmatmul.f32.gmra.mxu0 %v481
      %v1107 = vpop.f32.mrf.mxu0
      %v1108 = vadd.f32 0.0, %v1107
      %1109 = vmatmul.f32.gmra.mxu0 %v484
      %v1110 = vpop.f32.mrf.mxu0
      %v1111 = vadd.f32 0.0, %v1110
      %1112 = vmatmul.f32.gmra.mxu0 %v487
      %v1113 = vpop.f32.mrf.mxu0
      %v1114 = vadd.f32 0.0, %v1113
      %1115 = vmatmul.f32.gmra.mxu0 %v490
      %v1116 = vpop.f32.mrf.mxu0
      %v1117 = vadd.f32 0.0, %v1116
      %1118 = vmatmul.f32.gmra.mxu0 %v493
      %v1119 = vpop.f32.mrf.mxu0
      %v1120 = vadd.f32 0.0, %v1119
      %1121 = vmatmul.f32.gmra.mxu0 %v496
      %v1122 = vpop.f32.mrf.mxu0
      %v1123 = vadd.f32 0.0, %v1122
      %1124 = vmatmul.f32.gmra.mxu0 %v499
      %v1125 = vpop.f32.mrf.mxu0
      %v1126 = vadd.f32 0.0, %v1125
      %1127 = vmatmul.f32.gmra.mxu0 %v502
      %v1128 = vpop.f32.mrf.mxu0
      %v1129 = vadd.f32 0.0, %v1128
      %1130 = vmatmul.f32.gmra.mxu0 %v505
      %v1131 = vpop.f32.mrf.mxu0
      %v1132 = vadd.f32 0.0, %v1131
      %1133 = vmatmul.f32.gmra.mxu0 %v508
      %v1134 = vpop.f32.mrf.mxu0
      %v1135 = vadd.f32 0.0, %v1134
      %1136 = vmatmul.f32.gmra.mxu0 %v511
      %v1137 = vpop.f32.mrf.mxu0
      %v1138 = vadd.f32 0.0, %v1137
      %1139 = vmatmul.f32.gmra.mxu0 %v514
      %v1140 = vpop.f32.mrf.mxu0
      %v1141 = vadd.f32 0.0, %v1140
      %1142 = vmatmul.f32.gmra.mxu0 %v517
      %v1143 = vpop.f32.mrf.mxu0
      %v1144 = vadd.f32 0.0, %v1143
      %1145 = vmatmul.f32.gmra.mxu0 %v520
      %v1146 = vpop.f32.mrf.mxu0
      %v1147 = vadd.f32 0.0, %v1146
      %1148 = vmatmul.f32.gmra.mxu0 %v523
      %v1149 = vpop.f32.mrf.mxu0
      %v1150 = vadd.f32 0.0, %v1149
      %1151 = vmatmul.f32.gmra.mxu0 %v526
      %v1152 = vpop.f32.mrf.mxu0
      %v1153 = vadd.f32 0.0, %v1152
      %1154 = vdwg.mxu0
      %1155 = vmatpush.msra.mxu0 0.0
      %1156 = vmatpush.msra.mxu0 0.0
      %1157 = vmatpush.msra.mxu0 0.0
      %1158 = vmatpush.msra.mxu0 0.0
      %1159 = vmatpush.msra.mxu0 0.0
      %1160 = vmatpush.msra.mxu0 0.0
      %1161 = vmatpush.msra.mxu0 0.0
      %1162 = vmatpush.msra.mxu0 0.0
      %1163 = vmatpush.msra.mxu0 0.0
      %1164 = vmatpush.msra.mxu0 0.0
      %1165 = vmatpush.msra.mxu0 0.0
      %1166 = vmatpush.msra.mxu0 0.0
      %1167 = vmatpush.msra.mxu0 0.0
      %1168 = vmatpush.msra.mxu0 0.0
      %1169 = vmatpush.msra.mxu0 0.0
      %1170 = vmatpush.msra.mxu0 %v270
      %1171 = vmatmul.f32.gmra.mxu0 %v337
      %v1172 = vpop.f32.mrf.mxu0
      %v1173 = vadd.f32 0.0, %v1172
      %1174 = vmatmul.f32.gmra.mxu0 %v340
      %v1175 = vpop.f32.mrf.mxu0
      %v1176 = vadd.f32 0.0, %v1175
      %1177 = vmatmul.f32.gmra.mxu0 %v343
      %v1178 = vpop.f32.mrf.mxu0
      %v1179 = vadd.f32 0.0, %v1178
      %1180 = vmatmul.f32.gmra.mxu0 %v346
      %v1181 = vpop.f32.mrf.mxu0
      %v1182 = vadd.f32 0.0, %v1181
      %1183 = vmatmul.f32.gmra.mxu0 %v349
      %v1184 = vpop.f32.mrf.mxu0
      %v1185 = vadd.f32 0.0, %v1184
      %1186 = vmatmul.f32.gmra.mxu0 %v352
      %v1187 = vpop.f32.mrf.mxu0
      %v1188 = vadd.f32 0.0, %v1187
      %1189 = vmatmul.f32.gmra.mxu0 %v355
      %v1190 = vpop.f32.mrf.mxu0
      %v1191 = vadd.f32 0.0, %v1190
      %1192 = vmatmul.f32.gmra.mxu0 %v358
      %v1193 = vpop.f32.mrf.mxu0
      %v1194 = vadd.f32 0.0, %v1193
      %1195 = vmatmul.f32.gmra.mxu0 %v361
      %v1196 = vpop.f32.mrf.mxu0
      %v1197 = vadd.f32 0.0, %v1196
      %1198 = vmatmul.f32.gmra.mxu0 %v364
      %v1199 = vpop.f32.mrf.mxu0
      %v1200 = vadd.f32 0.0, %v1199
      %1201 = vmatmul.f32.gmra.mxu0 %v367
      %v1202 = vpop.f32.mrf.mxu0
      %v1203 = vadd.f32 0.0, %v1202
      %1204 = vmatmul.f32.gmra.mxu0 %v370
      %v1205 = vpop.f32.mrf.mxu0
      %v1206 = vadd.f32 0.0, %v1205
      %1207 = vmatmul.f32.gmra.mxu0 %v373
      %v1208 = vpop.f32.mrf.mxu0
      %v1209 = vadd.f32 0.0, %v1208
      %1210 = vmatmul.f32.gmra.mxu0 %v376
      %v1211 = vpop.f32.mrf.mxu0
      %v1212 = vadd.f32 0.0, %v1211
      %1213 = vmatmul.f32.gmra.mxu0 %v379
      %v1214 = vpop.f32.mrf.mxu0
      %v1215 = vadd.f32 0.0, %v1214
      %1216 = vmatmul.f32.gmra.mxu0 %v382
      %v1217 = vpop.f32.mrf.mxu0
      %v1218 = vadd.f32 0.0, %v1217
      %1219 = vmatmul.f32.gmra.mxu0 %v385
      %v1220 = vpop.f32.mrf.mxu0
      %v1221 = vadd.f32 0.0, %v1220
      %1222 = vmatmul.f32.gmra.mxu0 %v388
      %v1223 = vpop.f32.mrf.mxu0
      %v1224 = vadd.f32 0.0, %v1223
      %1225 = vmatmul.f32.gmra.mxu0 %v391
      %v1226 = vpop.f32.mrf.mxu0
      %v1227 = vadd.f32 0.0, %v1226
      %1228 = vmatmul.f32.gmra.mxu0 %v394
      %v1229 = vpop.f32.mrf.mxu0
      %v1230 = vadd.f32 0.0, %v1229
      %1231 = vmatmul.f32.gmra.mxu0 %v397
      %v1232 = vpop.f32.mrf.mxu0
      %v1233 = vadd.f32 0.0, %v1232
      %1234 = vmatmul.f32.gmra.mxu0 %v400
      %v1235 = vpop.f32.mrf.mxu0
      %v1236 = vadd.f32 0.0, %v1235
      %1237 = vmatmul.f32.gmra.mxu0 %v403
      %v1238 = vpop.f32.mrf.mxu0
      %v1239 = vadd.f32 0.0, %v1238
      %1240 = vmatmul.f32.gmra.mxu0 %v406
      %v1241 = vpop.f32.mrf.mxu0
      %v1242 = vadd.f32 0.0, %v1241
      %1243 = vmatmul.f32.gmra.mxu0 %v409
      %v1244 = vpop.f32.mrf.mxu0
      %v1245 = vadd.f32 0.0, %v1244
      %1246 = vmatmul.f32.gmra.mxu0 %v412
      %v1247 = vpop.f32.mrf.mxu0
      %v1248 = vadd.f32 0.0, %v1247
      %1249 = vmatmul.f32.gmra.mxu0 %v415
      %v1250 = vpop.f32.mrf.mxu0
      %v1251 = vadd.f32 0.0, %v1250
      %1252 = vmatmul.f32.gmra.mxu0 %v418
      %v1253 = vpop.f32.mrf.mxu0
      %v1254 = vadd.f32 0.0, %v1253
      %1255 = vmatmul.f32.gmra.mxu0 %v421
      %v1256 = vpop.f32.mrf.mxu0
      %v1257 = vadd.f32 0.0, %v1256
      %1258 = vmatmul.f32.gmra.mxu0 %v424
      %v1259 = vpop.f32.mrf.mxu0
      %v1260 = vadd.f32 0.0, %v1259
      %1261 = vmatmul.f32.gmra.mxu0 %v427
      %v1262 = vpop.f32.mrf.mxu0
      %v1263 = vadd.f32 0.0, %v1262
      %1264 = vmatmul.f32.gmra.mxu0 %v430
      %v1265 = vpop.f32.mrf.mxu0
      %v1266 = vadd.f32 0.0, %v1265
      %1267 = vmatmul.f32.gmra.mxu0 %v433
      %v1268 = vpop.f32.mrf.mxu0
      %v1269 = vadd.f32 0.0, %v1268
      %1270 = vmatmul.f32.gmra.mxu0 %v436
      %v1271 = vpop.f32.mrf.mxu0
      %v1272 = vadd.f32 0.0, %v1271
      %1273 = vmatmul.f32.gmra.mxu0 %v439
      %v1274 = vpop.f32.mrf.mxu0
      %v1275 = vadd.f32 0.0, %v1274
      %1276 = vmatmul.f32.gmra.mxu0 %v442
      %v1277 = vpop.f32.mrf.mxu0
      %v1278 = vadd.f32 0.0, %v1277
      %1279 = vmatmul.f32.gmra.mxu0 %v445
      %v1280 = vpop.f32.mrf.mxu0
      %v1281 = vadd.f32 0.0, %v1280
      %1282 = vmatmul.f32.gmra.mxu0 %v448
      %v1283 = vpop.f32.mrf.mxu0
      %v1284 = vadd.f32 0.0, %v1283
      %1285 = vmatmul.f32.gmra.mxu0 %v451
      %v1286 = vpop.f32.mrf.mxu0
      %v1287 = vadd.f32 0.0, %v1286
      %1288 = vmatmul.f32.gmra.mxu0 %v454
      %v1289 = vpop.f32.mrf.mxu0
      %v1290 = vadd.f32 0.0, %v1289
      %1291 = vmatmul.f32.gmra.mxu0 %v457
      %v1292 = vpop.f32.mrf.mxu0
      %v1293 = vadd.f32 0.0, %v1292
      %1294 = vmatmul.f32.gmra.mxu0 %v460
      %v1295 = vpop.f32.mrf.mxu0
      %v1296 = vadd.f32 0.0, %v1295
      %1297 = vmatmul.f32.gmra.mxu0 %v463
      %v1298 = vpop.f32.mrf.mxu0
      %v1299 = vadd.f32 0.0, %v1298
      %1300 = vmatmul.f32.gmra.mxu0 %v466
      %v1301 = vpop.f32.mrf.mxu0
      %v1302 = vadd.f32 0.0, %v1301
      %1303 = vmatmul.f32.gmra.mxu0 %v469
      %v1304 = vpop.f32.mrf.mxu0
      %v1305 = vadd.f32 0.0, %v1304
      %1306 = vmatmul.f32.gmra.mxu0 %v472
      %v1307 = vpop.f32.mrf.mxu0
      %v1308 = vadd.f32 0.0, %v1307
      %1309 = vmatmul.f32.gmra.mxu0 %v475
      %v1310 = vpop.f32.mrf.mxu0
      %v1311 = vadd.f32 0.0, %v1310
      %1312 = vmatmul.f32.gmra.mxu0 %v478
      %v1313 = vpop.f32.mrf.mxu0
      %v1314 = vadd.f32 0.0, %v1313
      %1315 = vmatmul.f32.gmra.mxu0 %v481
      %v1316 = vpop.f32.mrf.mxu0
      %v1317 = vadd.f32 0.0, %v1316
      %1318 = vmatmul.f32.gmra.mxu0 %v484
      %v1319 = vpop.f32.mrf.mxu0
      %v1320 = vadd.f32 0.0, %v1319
      %1321 = vmatmul.f32.gmra.mxu0 %v487
      %v1322 = vpop.f32.mrf.mxu0
      %v1323 = vadd.f32 0.0, %v1322
      %1324 = vmatmul.f32.gmra.mxu0 %v490
      %v1325 = vpop.f32.mrf.mxu0
      %v1326 = vadd.f32 0.0, %v1325
      %1327 = vmatmul.f32.gmra.mxu0 %v493
      %v1328 = vpop.f32.mrf.mxu0
      %v1329 = vadd.f32 0.0, %v1328
      %1330 = vmatmul.f32.gmra.mxu0 %v496
      %v1331 = vpop.f32.mrf.mxu0
      %v1332 = vadd.f32 0.0, %v1331
      %1333 = vmatmul.f32.gmra.mxu0 %v499
      %v1334 = vpop.f32.mrf.mxu0
      %v1335 = vadd.f32 0.0, %v1334
      %1336 = vmatmul.f32.gmra.mxu0 %v502
      %v1337 = vpop.f32.mrf.mxu0
      %v1338 = vadd.f32 0.0, %v1337
      %1339 = vmatmul.f32.gmra.mxu0 %v505
      %v1340 = vpop.f32.mrf.mxu0
      %v1341 = vadd.f32 0.0, %v1340
      %1342 = vmatmul.f32.gmra.mxu0 %v508
      %v1343 = vpop.f32.mrf.mxu0
      %v1344 = vadd.f32 0.0, %v1343
      %1345 = vmatmul.f32.gmra.mxu0 %v511
      %v1346 = vpop.f32.mrf.mxu0
      %v1347 = vadd.f32 0.0, %v1346
      %1348 = vmatmul.f32.gmra.mxu0 %v514
      %v1349 = vpop.f32.mrf.mxu0
      %v1350 = vadd.f32 0.0, %v1349
      %1351 = vmatmul.f32.gmra.mxu0 %v517
      %v1352 = vpop.f32.mrf.mxu0
      %v1353 = vadd.f32 0.0, %v1352
      %1354 = vmatmul.f32.gmra.mxu0 %v520
      %v1355 = vpop.f32.mrf.mxu0
      %v1356 = vadd.f32 0.0, %v1355
      %1357 = vmatmul.f32.gmra.mxu0 %v523
      %v1358 = vpop.f32.mrf.mxu0
      %v1359 = vadd.f32 0.0, %v1358
      %1360 = vmatmul.f32.gmra.mxu0 %v526
      %v1361 = vpop.f32.mrf.mxu0
      %v1362 = vadd.f32 0.0, %v1361
      %1363 = vdwg.mxu0
      %v1364 = vmin.f32 %v546, %v549
      %v1365 = vmin.f32 %v1364, %v552
      %v1366 = vmin.f32 %v1365, %v555
      %v1367 = vmin.f32 %v1366, %v558
      %v1368 = vmin.f32 %v1367, %v561
      %v1369 = vmin.f32 %v1368, %v564
      %v1370 = vmin.f32 %v1369, %v567
      %v1371 = vmin.f32 %v1370, %v570
      %v1372 = vmin.f32 %v1371, %v573
      %v1373 = vmin.f32 %v1372, %v576
      %v1374 = vmin.f32 %v1373, %v579
      %v1375 = vmin.f32 %v1374, %v582
      %v1376 = vmin.f32 %v1375, %v585
      %v1377 = vmin.f32 %v1376, %v588
      %v1378 = vmin.f32 %v1377, %v591
      %v1379 = vmin.f32 %v1378, %v594
      %v1380 = vmin.f32 %v1379, %v597
      %v1381 = vmin.f32 %v1380, %v600
      %v1382 = vmin.f32 %v1381, %v603
      %v1383 = vmin.f32 %v1382, %v606
      %v1384 = vmin.f32 %v1383, %v609
      %v1385 = vmin.f32 %v1384, %v612
      %v1386 = vmin.f32 %v1385, %v615
      %v1387 = vmin.f32 %v1386, %v618
      %v1388 = vmin.f32 %v1387, %v621
      %v1389 = vmin.f32 %v1388, %v624
      %v1390 = vmin.f32 %v1389, %v627
      %v1391 = vmin.f32 %v1390, %v630
      %v1392 = vmin.f32 %v1391, %v633
      %v1393 = vmin.f32 %v1392, %v636
      %v1394 = vmin.f32 %v1393, %v639
      %v1395 = vmin.f32 %v1394, %v642
      %v1396 = vmin.f32 %v1395, %v645
      %v1397 = vmin.f32 %v1396, %v648
      %v1398 = vmin.f32 %v1397, %v651
      %v1399 = vmin.f32 %v1398, %v654
      %v1400 = vmin.f32 %v1399, %v657
      %v1401 = vmin.f32 %v1400, %v660
      %v1402 = vmin.f32 %v1401, %v663
      %v1403 = vmin.f32 %v1402, %v666
      %v1404 = vmin.f32 %v1403, %v669
      %v1405 = vmin.f32 %v1404, %v672
      %v1406 = vmin.f32 %v1405, %v675
      %v1407 = vmin.f32 %v1406, %v678
      %v1408 = vmin.f32 %v1407, %v681
      %v1409 = vmin.f32 %v1408, %v684
      %v1410 = vmin.f32 %v1409, %v687
      %v1411 = vmin.f32 %v1410, %v690
      %v1412 = vmin.f32 %v1411, %v693
      %v1413 = vmin.f32 %v1412, %v696
      %v1414 = vmin.f32 %v1413, %v699
      %v1415 = vmin.f32 %v1414, %v702
      %v1416 = vmin.f32 %v1415, %v705
      %v1417 = vmin.f32 %v1416, %v708
      %v1418 = vmin.f32 %v1417, %v711
      %v1419 = vmin.f32 %v1418, %v714
      %v1420 = vmin.f32 %v1419, %v717
      %v1421 = vmin.f32 %v1420, %v720
      %v1422 = vmin.f32 %v1421, %v723
      %v1423 = vmin.f32 %v1422, %v726
      %v1424 = vmin.f32 %v1423, %v729
      %v1425 = vmin.f32 %v1424, %v732
      %v1426 = vmin.f32 %v1425, %v735
      %v1427 = vrot.slane %v1426, 4
      %v1428 = vmin.f32 %v1426, %v1427
      %v1429 = vrot.slane %v1428, 2
      %v1430 = vmin.f32 %v1428, %v1429
      %v1431 = vrot.slane %v1430, 1
      %v1432 = vmin.f32 %v1430, %v1431
      %v1433 = vmin.f32 %v755, %v758
      %v1434 = vmin.f32 %v1433, %v761
      %v1435 = vmin.f32 %v1434, %v764
      %v1436 = vmin.f32 %v1435, %v767
      %v1437 = vmin.f32 %v1436, %v770
      %v1438 = vmin.f32 %v1437, %v773
      %v1439 = vmin.f32 %v1438, %v776
      %v1440 = vmin.f32 %v1439, %v779
      %v1441 = vmin.f32 %v1440, %v782
      %v1442 = vmin.f32 %v1441, %v785
      %v1443 = vmin.f32 %v1442, %v788
      %v1444 = vmin.f32 %v1443, %v791
      %v1445 = vmin.f32 %v1444, %v794
      %v1446 = vmin.f32 %v1445, %v797
      %v1447 = vmin.f32 %v1446, %v800
      %v1448 = vmin.f32 %v1447, %v803
      %v1449 = vmin.f32 %v1448, %v806
      %v1450 = vmin.f32 %v1449, %v809
      %v1451 = vmin.f32 %v1450, %v812
      %v1452 = vmin.f32 %v1451, %v815
      %v1453 = vmin.f32 %v1452, %v818
      %v1454 = vmin.f32 %v1453, %v821
      %v1455 = vmin.f32 %v1454, %v824
      %v1456 = vmin.f32 %v1455, %v827
      %v1457 = vmin.f32 %v1456, %v830
      %v1458 = vmin.f32 %v1457, %v833
      %v1459 = vmin.f32 %v1458, %v836
      %v1460 = vmin.f32 %v1459, %v839
      %v1461 = vmin.f32 %v1460, %v842
      %v1462 = vmin.f32 %v1461, %v845
      %v1463 = vmin.f32 %v1462, %v848
      %v1464 = vmin.f32 %v1463, %v851
      %v1465 = vmin.f32 %v1464, %v854
      %v1466 = vmin.f32 %v1465, %v857
      %v1467 = vmin.f32 %v1466, %v860
      %v1468 = vmin.f32 %v1467, %v863
      %v1469 = vmin.f32 %v1468, %v866
      %v1470 = vmin.f32 %v1469, %v869
      %v1471 = vmin.f32 %v1470, %v872
      %v1472 = vmin.f32 %v1471, %v875
      %v1473 = vmin.f32 %v1472, %v878
      %v1474 = vmin.f32 %v1473, %v881
      %v1475 = vmin.f32 %v1474, %v884
      %v1476 = vmin.f32 %v1475, %v887
      %v1477 = vmin.f32 %v1476, %v890
      %v1478 = vmin.f32 %v1477, %v893
      %v1479 = vmin.f32 %v1478, %v896
      %v1480 = vmin.f32 %v1479, %v899
      %v1481 = vmin.f32 %v1480, %v902
      %v1482 = vmin.f32 %v1481, %v905
      %v1483 = vmin.f32 %v1482, %v908
      %v1484 = vmin.f32 %v1483, %v911
      %v1485 = vmin.f32 %v1484, %v914
      %v1486 = vmin.f32 %v1485, %v917
      %v1487 = vmin.f32 %v1486, %v920
      %v1488 = vmin.f32 %v1487, %v923
      %v1489 = vmin.f32 %v1488, %v926
      %v1490 = vmin.f32 %v1489, %v929
      %v1491 = vmin.f32 %v1490, %v932
      %v1492 = vmin.f32 %v1491, %v935
      %v1493 = vmin.f32 %v1492, %v938
      %v1494 = vmin.f32 %v1493, %v941
      %v1495 = vmin.f32 %v1494, %v944
      %v1496 = vrot.slane %v1495, 4
      %v1497 = vmin.f32 %v1495, %v1496
      %v1498 = vrot.slane %v1497, 2
      %v1499 = vmin.f32 %v1497, %v1498
      %v1500 = vrot.slane %v1499, 1
      %v1501 = vmin.f32 %v1499, %v1500
      %v1502 = vmin.f32 %v964, %v967
      %v1503 = vmin.f32 %v1502, %v970
      %v1504 = vmin.f32 %v1503, %v973
      %v1505 = vmin.f32 %v1504, %v976
      %v1506 = vmin.f32 %v1505, %v979
      %v1507 = vmin.f32 %v1506, %v982
      %v1508 = vmin.f32 %v1507, %v985
      %v1509 = vmin.f32 %v1508, %v988
      %v1510 = vmin.f32 %v1509, %v991
      %v1511 = vmin.f32 %v1510, %v994
      %v1512 = vmin.f32 %v1511, %v997
      %v1513 = vmin.f32 %v1512, %v1000
      %v1514 = vmin.f32 %v1513, %v1003
      %v1515 = vmin.f32 %v1514, %v1006
      %v1516 = vmin.f32 %v1515, %v1009
      %v1517 = vmin.f32 %v1516, %v1012
      %v1518 = vmin.f32 %v1517, %v1015
      %v1519 = vmin.f32 %v1518, %v1018
      %v1520 = vmin.f32 %v1519, %v1021
      %v1521 = vmin.f32 %v1520, %v1024
      %v1522 = vmin.f32 %v1521, %v1027
      %v1523 = vmin.f32 %v1522, %v1030
      %v1524 = vmin.f32 %v1523, %v1033
      %v1525 = vmin.f32 %v1524, %v1036
      %v1526 = vmin.f32 %v1525, %v1039
      %v1527 = vmin.f32 %v1526, %v1042
      %v1528 = vmin.f32 %v1527, %v1045
      %v1529 = vmin.f32 %v1528, %v1048
      %v1530 = vmin.f32 %v1529, %v1051
      %v1531 = vmin.f32 %v1530, %v1054
      %v1532 = vmin.f32 %v1531, %v1057
      %v1533 = vmin.f32 %v1532, %v1060
      %v1534 = vmin.f32 %v1533, %v1063
      %v1535 = vmin.f32 %v1534, %v1066
      %v1536 = vmin.f32 %v1535, %v1069
      %v1537 = vmin.f32 %v1536, %v1072
      %v1538 = vmin.f32 %v1537, %v1075
      %v1539 = vmin.f32 %v1538, %v1078
      %v1540 = vmin.f32 %v1539, %v1081
      %v1541 = vmin.f32 %v1540, %v1084
      %v1542 = vmin.f32 %v1541, %v1087
      %v1543 = vmin.f32 %v1542, %v1090
      %v1544 = vmin.f32 %v1543, %v1093
      %v1545 = vmin.f32 %v1544, %v1096
      %v1546 = vmin.f32 %v1545, %v1099
      %v1547 = vmin.f32 %v1546, %v1102
      %v1548 = vmin.f32 %v1547, %v1105
      %v1549 = vmin.f32 %v1548, %v1108
      %v1550 = vmin.f32 %v1549, %v1111
      %v1551 = vmin.f32 %v1550, %v1114
      %v1552 = vmin.f32 %v1551, %v1117
      %v1553 = vmin.f32 %v1552, %v1120
      %v1554 = vmin.f32 %v1553, %v1123
      %v1555 = vmin.f32 %v1554, %v1126
      %v1556 = vmin.f32 %v1555, %v1129
      %v1557 = vmin.f32 %v1556, %v1132
      %v1558 = vmin.f32 %v1557, %v1135
      %v1559 = vmin.f32 %v1558, %v1138
      %v1560 = vmin.f32 %v1559, %v1141
      %v1561 = vmin.f32 %v1560, %v1144
      %v1562 = vmin.f32 %v1561, %v1147
      %v1563 = vmin.f32 %v1562, %v1150
      %v1564 = vmin.f32 %v1563, %v1153
      %v1565 = vrot.slane %v1564, 4
      %v1566 = vmin.f32 %v1564, %v1565
      %v1567 = vrot.slane %v1566, 2
      %v1568 = vmin.f32 %v1566, %v1567
      %v1569 = vrot.slane %v1568, 1
      %v1570 = vmin.f32 %v1568, %v1569
      %v1571 = vmin.f32 %v1173, %v1176
      %v1572 = vmin.f32 %v1571, %v1179
      %v1573 = vmin.f32 %v1572, %v1182
      %v1574 = vmin.f32 %v1573, %v1185
      %v1575 = vmin.f32 %v1574, %v1188
      %v1576 = vmin.f32 %v1575, %v1191
      %v1577 = vmin.f32 %v1576, %v1194
      %v1578 = vmin.f32 %v1577, %v1197
      %v1579 = vmin.f32 %v1578, %v1200
      %v1580 = vmin.f32 %v1579, %v1203
      %v1581 = vmin.f32 %v1580, %v1206
      %v1582 = vmin.f32 %v1581, %v1209
      %v1583 = vmin.f32 %v1582, %v1212
      %v1584 = vmin.f32 %v1583, %v1215
      %v1585 = vmin.f32 %v1584, %v1218
      %v1586 = vmin.f32 %v1585, %v1221
      %v1587 = vmin.f32 %v1586, %v1224
      %v1588 = vmin.f32 %v1587, %v1227
      %v1589 = vmin.f32 %v1588, %v1230
      %v1590 = vmin.f32 %v1589, %v1233
      %v1591 = vmin.f32 %v1590, %v1236
      %v1592 = vmin.f32 %v1591, %v1239
      %v1593 = vmin.f32 %v1592, %v1242
      %v1594 = vmin.f32 %v1593, %v1245
      %v1595 = vmin.f32 %v1594, %v1248
      %v1596 = vmin.f32 %v1595, %v1251
      %v1597 = vmin.f32 %v1596, %v1254
      %v1598 = vmin.f32 %v1597, %v1257
      %v1599 = vmin.f32 %v1598, %v1260
      %v1600 = vmin.f32 %v1599, %v1263
      %v1601 = vmin.f32 %v1600, %v1266
      %v1602 = vmin.f32 %v1601, %v1269
      %v1603 = vmin.f32 %v1602, %v1272
      %v1604 = vmin.f32 %v1603, %v1275
      %v1605 = vmin.f32 %v1604, %v1278
      %v1606 = vmin.f32 %v1605, %v1281
      %v1607 = vmin.f32 %v1606, %v1284
      %v1608 = vmin.f32 %v1607, %v1287
      %v1609 = vmin.f32 %v1608, %v1290
      %v1610 = vmin.f32 %v1609, %v1293
      %v1611 = vmin.f32 %v1610, %v1296
      %v1612 = vmin.f32 %v1611, %v1299
      %v1613 = vmin.f32 %v1612, %v1302
      %v1614 = vmin.f32 %v1613, %v1305
      %v1615 = vmin.f32 %v1614, %v1308
      %v1616 = vmin.f32 %v1615, %v1311
      %v1617 = vmin.f32 %v1616, %v1314
      %v1618 = vmin.f32 %v1617, %v1317
      %v1619 = vmin.f32 %v1618, %v1320
      %v1620 = vmin.f32 %v1619, %v1323
      %v1621 = vmin.f32 %v1620, %v1326
      %v1622 = vmin.f32 %v1621, %v1329
      %v1623 = vmin.f32 %v1622, %v1332
      %v1624 = vmin.f32 %v1623, %v1335
      %v1625 = vmin.f32 %v1624, %v1338
      %v1626 = vmin.f32 %v1625, %v1341
      %v1627 = vmin.f32 %v1626, %v1344
      %v1628 = vmin.f32 %v1627, %v1347
      %v1629 = vmin.f32 %v1628, %v1350
      %v1630 = vmin.f32 %v1629, %v1353
      %v1631 = vmin.f32 %v1630, %v1356
      %v1632 = vmin.f32 %v1631, %v1359
      %v1633 = vmin.f32 %v1632, %v1362
      %v1634 = vrot.slane %v1633, 4
      %v1635 = vmin.f32 %v1633, %v1634
      %v1636 = vrot.slane %v1635, 2
      %v1637 = vmin.f32 %v1635, %v1636
      %v1638 = vrot.slane %v1637, 1
      %v1639 = vmin.f32 %v1637, %v1638
      %v1640 = vld [vmem:[#allocation2] ss:$4 sm:$0xf]
      %v1645 = vrot.slane %v1501, 7
      %v1646 = vrot.slane %v1570, 6
      %v1647 = vrot.slane %v1639, 5
      %vm1648 = vcmask 1040384
      %v1649 = vsel %vm1648, %v1432, %v1645
      %vm1650 = vcmask 1042434
      %v1651 = vsel %vm1650, %v1646, %v1647
      %vm1652 = vcmask 1041408
      %v1653 = vsel %vm1652, %v1649, %v1651
      %v1655 = vmin.f32 %v1640, %v1653
      %v1656 = vlaneseq
      %vm1657 = vcmp.ge.s32.totalorder %v1656, 0
      %vm1658 = vcmp.lt.s32.totalorder %v1656, 512
      %vm1659 = vmand %vm1657, %vm1658
      %1660 = vst.msk [vmem:[#allocation2] ss:$4 sm:$0xf] %vm1659, %v1655
      %v1661 = vld [vmem:[%s255] sm:$0xff]
      %v1662 = vld [vmem:[%s255 + $0x8] sm:$0xff]
      %v1663 = vld [vmem:[%s255 + $0x10] sm:$0xff]
      %v1664 = vld [vmem:[%s255 + $0x18] sm:$0xff]
      %v1665 = vld [vmem:[%s255 + $0x20] sm:$0xff]
      %v1666 = vld [vmem:[%s255 + $0x28] sm:$0xff]
      %v1667 = vld [vmem:[%s255 + $0x30] sm:$0xff]
      %v1668 = vld [vmem:[%s255 + $0x38] sm:$0xff]
      %v1669 = vld [vmem:[%s255 + $0x40] sm:$0xff]
      %v1670 = vld [vmem:[%s255 + $0x48] sm:$0xff]
      %v1671 = vld [vmem:[%s255 + $0x50] sm:$0xff]
      %v1672 = vld [vmem:[%s255 + $0x58] sm:$0xff]
      %v1673 = vld [vmem:[%s255 + $0x60] sm:$0xff]
      %v1674 = vld [vmem:[%s255 + $0x68] sm:$0xff]
      %v1675 = vld [vmem:[%s255 + $0x70] sm:$0xff]
      %v1676 = vld [vmem:[%s255 + $0x78] sm:$0xff]
      %v1677 = vld [vmem:[%s255 + $0x80] sm:$0xff]
      %v1678 = vld [vmem:[%s255 + $0x88] sm:$0xff]
      %v1679 = vld [vmem:[%s255 + $0x90] sm:$0xff]
      %v1680 = vld [vmem:[%s255 + $0x98] sm:$0xff]
      %v1681 = vld [vmem:[%s255 + $0xa0] sm:$0xff]
      %v1682 = vld [vmem:[%s255 + $0xa8] sm:$0xff]
      %v1683 = vld [vmem:[%s255 + $0xb0] sm:$0xff]
      %v1684 = vld [vmem:[%s255 + $0xb8] sm:$0xff]
      %v1685 = vld [vmem:[%s255 + $0xc0] sm:$0xff]
      %v1686 = vld [vmem:[%s255 + $0xc8] sm:$0xff]
      %v1687 = vld [vmem:[%s255 + $0xd0] sm:$0xff]
      %v1688 = vld [vmem:[%s255 + $0xd8] sm:$0xff]
      %v1689 = vld [vmem:[%s255 + $0xe0] sm:$0xff]
      %v1690 = vld [vmem:[%s255 + $0xe8] sm:$0xff]
      %v1691 = vld [vmem:[%s255 + $0xf0] sm:$0xff]
      %v1692 = vld [vmem:[%s255 + $0xf8] sm:$0xff]
      %v1693 = vld [vmem:[%s255 + $0x100] sm:$0xff]
      %v1694 = vld [vmem:[%s255 + $0x108] sm:$0xff]
      %v1695 = vld [vmem:[%s255 + $0x110] sm:$0xff]
      %v1696 = vld [vmem:[%s255 + $0x118] sm:$0xff]
      %v1697 = vld [vmem:[%s255 + $0x120] sm:$0xff]
      %v1698 = vld [vmem:[%s255 + $0x128] sm:$0xff]
      %v1699 = vld [vmem:[%s255 + $0x130] sm:$0xff]
      %v1700 = vld [vmem:[%s255 + $0x138] sm:$0xff]
      %v1701 = vld [vmem:[%s255 + $0x140] sm:$0xff]
      %v1702 = vld [vmem:[%s255 + $0x148] sm:$0xff]
      %v1703 = vld [vmem:[%s255 + $0x150] sm:$0xff]
      %v1704 = vld [vmem:[%s255 + $0x158] sm:$0xff]
      %v1705 = vld [vmem:[%s255 + $0x160] sm:$0xff]
      %v1706 = vld [vmem:[%s255 + $0x168] sm:$0xff]
      %v1707 = vld [vmem:[%s255 + $0x170] sm:$0xff]
      %v1708 = vld [vmem:[%s255 + $0x178] sm:$0xff]
      %v1709 = vld [vmem:[%s255 + $0x180] sm:$0xff]
      %v1710 = vld [vmem:[%s255 + $0x188] sm:$0xff]
      %v1711 = vld [vmem:[%s255 + $0x190] sm:$0xff]
      %v1712 = vld [vmem:[%s255 + $0x198] sm:$0xff]
      %v1713 = vld [vmem:[%s255 + $0x1a0] sm:$0xff]
      %v1714 = vld [vmem:[%s255 + $0x1a8] sm:$0xff]
      %v1715 = vld [vmem:[%s255 + $0x1b0] sm:$0xff]
      %v1716 = vld [vmem:[%s255 + $0x1b8] sm:$0xff]
      %v1717 = vld [vmem:[%s255 + $0x1c0] sm:$0xff]
      %v1718 = vld [vmem:[%s255 + $0x1c8] sm:$0xff]
      %v1719 = vld [vmem:[%s255 + $0x1d0] sm:$0xff]
      %v1720 = vld [vmem:[%s255 + $0x1d8] sm:$0xff]
      %v1721 = vld [vmem:[%s255 + $0x1e0] sm:$0xff]
      %v1722 = vld [vmem:[%s255 + $0x1e8] sm:$0xff]
      %v1723 = vld [vmem:[%s255 + $0x1f0] sm:$0xff]
      %v1724 = vld [vmem:[%s255 + $0x1f8] sm:$0xff]
      %1789 = vrot.lane.b32.xlu0 %v1661, 120
      %v1790 = vpop.permute.xlu0 %1789
      %1791 = vrot.lane.b32.xlu0 %v1662, 120
      %v1792 = vpop.permute.xlu0 %1791
      %1793 = vrot.lane.b32.xlu0 %v1663, 120
      %v1794 = vpop.permute.xlu0 %1793
      %1795 = vrot.lane.b32.xlu0 %v1664, 120
      %v1796 = vpop.permute.xlu0 %1795
      %1797 = vrot.lane.b32.xlu0 %v1665, 120
      %v1798 = vpop.permute.xlu0 %1797
      %1799 = vrot.lane.b32.xlu0 %v1666, 120
      %v1800 = vpop.permute.xlu0 %1799
      %1801 = vrot.lane.b32.xlu0 %v1667, 120
      %v1802 = vpop.permute.xlu0 %1801
      %1803 = vrot.lane.b32.xlu0 %v1668, 120
      %v1804 = vpop.permute.xlu0 %1803
      %1805 = vrot.lane.b32.xlu0 %v1669, 120
      %v1806 = vpop.permute.xlu0 %1805
      %1807 = vrot.lane.b32.xlu0 %v1670, 120
      %v1808 = vpop.permute.xlu0 %1807
      %1809 = vrot.lane.b32.xlu0 %v1671, 120
      %v1810 = vpop.permute.xlu0 %1809
      %1811 = vrot.lane.b32.xlu0 %v1672, 120
      %v1812 = vpop.permute.xlu0 %1811
      %1813 = vrot.lane.b32.xlu0 %v1673, 120
      %v1814 = vpop.permute.xlu0 %1813
      %1815 = vrot.lane.b32.xlu0 %v1674, 120
      %v1816 = vpop.permute.xlu0 %1815
      %1817 = vrot.lane.b32.xlu0 %v1675, 120
      %v1818 = vpop.permute.xlu0 %1817
      %1819 = vrot.lane.b32.xlu0 %v1676, 120
      %v1820 = vpop.permute.xlu0 %1819
      %1821 = vrot.lane.b32.xlu0 %v1677, 120
      %v1822 = vpop.permute.xlu0 %1821
      %1823 = vrot.lane.b32.xlu0 %v1678, 120
      %v1824 = vpop.permute.xlu0 %1823
      %1825 = vrot.lane.b32.xlu0 %v1679, 120
      %v1826 = vpop.permute.xlu0 %1825
      %1827 = vrot.lane.b32.xlu0 %v1680, 120
      %v1828 = vpop.permute.xlu0 %1827
      %1829 = vrot.lane.b32.xlu0 %v1681, 120
      %v1830 = vpop.permute.xlu0 %1829
      %1831 = vrot.lane.b32.xlu0 %v1682, 120
      %v1832 = vpop.permute.xlu0 %1831
      %1833 = vrot.lane.b32.xlu0 %v1683, 120
      %v1834 = vpop.permute.xlu0 %1833
      %1835 = vrot.lane.b32.xlu0 %v1684, 120
      %v1836 = vpop.permute.xlu0 %1835
      %1837 = vrot.lane.b32.xlu0 %v1685, 120
      %v1838 = vpop.permute.xlu0 %1837
      %1839 = vrot.lane.b32.xlu0 %v1686, 120
      %v1840 = vpop.permute.xlu0 %1839
      %1841 = vrot.lane.b32.xlu0 %v1687, 120
      %v1842 = vpop.permute.xlu0 %1841
      %1843 = vrot.lane.b32.xlu0 %v1688, 120
      %v1844 = vpop.permute.xlu0 %1843
      %1845 = vrot.lane.b32.xlu0 %v1689, 120
      %v1846 = vpop.permute.xlu0 %1845
      %1847 = vrot.lane.b32.xlu0 %v1690, 120
      %v1848 = vpop.permute.xlu0 %1847
      %1849 = vrot.lane.b32.xlu0 %v1691, 120
      %v1850 = vpop.permute.xlu0 %1849
      %1851 = vrot.lane.b32.xlu0 %v1692, 120
      %v1852 = vpop.permute.xlu0 %1851
      %1853 = vrot.lane.b32.xlu0 %v1693, 120
      %v1854 = vpop.permute.xlu0 %1853
      %1855 = vrot.lane.b32.xlu0 %v1694, 120
      %v1856 = vpop.permute.xlu0 %1855
      %1857 = vrot.lane.b32.xlu0 %v1695, 120
      %v1858 = vpop.permute.xlu0 %1857
      %1859 = vrot.lane.b32.xlu0 %v1696, 120
      %v1860 = vpop.permute.xlu0 %1859
      %1861 = vrot.lane.b32.xlu0 %v1697, 120
      %v1862 = vpop.permute.xlu0 %1861
      %1863 = vrot.lane.b32.xlu0 %v1698, 120
      %v1864 = vpop.permute.xlu0 %1863
      %1865 = vrot.lane.b32.xlu0 %v1699, 120
      %v1866 = vpop.permute.xlu0 %1865
      %1867 = vrot.lane.b32.xlu0 %v1700, 120
      %v1868 = vpop.permute.xlu0 %1867
      %1869 = vrot.lane.b32.xlu0 %v1701, 120
      %v1870 = vpop.permute.xlu0 %1869
      %1871 = vrot.lane.b32.xlu0 %v1702, 120
      %v1872 = vpop.permute.xlu0 %1871
      %1873 = vrot.lane.b32.xlu0 %v1703, 120
      %v1874 = vpop.permute.xlu0 %1873
      %1875 = vrot.lane.b32.xlu0 %v1704, 120
      %v1876 = vpop.permute.xlu0 %1875
      %1877 = vrot.lane.b32.xlu0 %v1705, 120
      %v1878 = vpop.permute.xlu0 %1877
      %1879 = vrot.lane.b32.xlu0 %v1706, 120
      %v1880 = vpop.permute.xlu0 %1879
      %1881 = vrot.lane.b32.xlu0 %v1707, 120
      %v1882 = vpop.permute.xlu0 %1881
      %1883 = vrot.lane.b32.xlu0 %v1708, 120
      %v1884 = vpop.permute.xlu0 %1883
      %1885 = vrot.lane.b32.xlu0 %v1709, 120
      %v1886 = vpop.permute.xlu0 %1885
      %1887 = vrot.lane.b32.xlu0 %v1710, 120
      %v1888 = vpop.permute.xlu0 %1887
      %1889 = vrot.lane.b32.xlu0 %v1711, 120
      %v1890 = vpop.permute.xlu0 %1889
      %1891 = vrot.lane.b32.xlu0 %v1712, 120
      %v1892 = vpop.permute.xlu0 %1891
      %1893 = vrot.lane.b32.xlu0 %v1713, 120
      %v1894 = vpop.permute.xlu0 %1893
      %1895 = vrot.lane.b32.xlu0 %v1714, 120
      %v1896 = vpop.permute.xlu0 %1895
      %1897 = vrot.lane.b32.xlu0 %v1715, 120
      %v1898 = vpop.permute.xlu0 %1897
      %1899 = vrot.lane.b32.xlu0 %v1716, 120
      %v1900 = vpop.permute.xlu0 %1899
      %1901 = vrot.lane.b32.xlu0 %v1717, 120
      %v1902 = vpop.permute.xlu0 %1901
      %1903 = vrot.lane.b32.xlu0 %v1718, 120
      %v1904 = vpop.permute.xlu0 %1903
      %1905 = vrot.lane.b32.xlu0 %v1719, 120
      %v1906 = vpop.permute.xlu0 %1905
      %1907 = vrot.lane.b32.xlu0 %v1720, 120
      %v1908 = vpop.permute.xlu0 %1907
      %1909 = vrot.lane.b32.xlu0 %v1721, 120
      %v1910 = vpop.permute.xlu0 %1909
      %1911 = vrot.lane.b32.xlu0 %v1722, 120
      %v1912 = vpop.permute.xlu0 %1911
      %1913 = vrot.lane.b32.xlu0 %v1723, 120
      %v1914 = vpop.permute.xlu0 %1913
      %1915 = vrot.lane.b32.xlu0 %v1724, 120
      %v1916 = vpop.permute.xlu0 %1915
      %v1917 = vsel %vm335, %v1790, 0
      %v1919 = vsel %vm335, %v1792, 0
      %v1921 = vsel %vm335, %v1794, 0
      %v1923 = vsel %vm335, %v1796, 0
      %v1925 = vsel %vm335, %v1798, 0
      %v1927 = vsel %vm335, %v1800, 0
      %v1929 = vsel %vm335, %v1802, 0
      %v1931 = vsel %vm335, %v1804, 0
      %v1933 = vsel %vm335, %v1806, 0
      %v1935 = vsel %vm335, %v1808, 0
      %v1937 = vsel %vm335, %v1810, 0
      %v1939 = vsel %vm335, %v1812, 0
      %v1941 = vsel %vm335, %v1814, 0
      %v1943 = vsel %vm335, %v1816, 0
      %v1945 = vsel %vm335, %v1818, 0
      %v1947 = vsel %vm335, %v1820, 0
      %v1949 = vsel %vm335, %v1822, 0
      %v1951 = vsel %vm335, %v1824, 0
      %v1953 = vsel %vm335, %v1826, 0
      %v1955 = vsel %vm335, %v1828, 0
      %v1957 = vsel %vm335, %v1830, 0
      %v1959 = vsel %vm335, %v1832, 0
      %v1961 = vsel %vm335, %v1834, 0
      %v1963 = vsel %vm335, %v1836, 0
      %v1965 = vsel %vm335, %v1838, 0
      %v1967 = vsel %vm335, %v1840, 0
      %v1969 = vsel %vm335, %v1842, 0
      %v1971 = vsel %vm335, %v1844, 0
      %v1973 = vsel %vm335, %v1846, 0
      %v1975 = vsel %vm335, %v1848, 0
      %v1977 = vsel %vm335, %v1850, 0
      %v1979 = vsel %vm335, %v1852, 0
      %v1981 = vsel %vm335, %v1854, 0
      %v1983 = vsel %vm335, %v1856, 0
      %v1985 = vsel %vm335, %v1858, 0
      %v1987 = vsel %vm335, %v1860, 0
      %v1989 = vsel %vm335, %v1862, 0
      %v1991 = vsel %vm335, %v1864, 0
      %v1993 = vsel %vm335, %v1866, 0
      %v1995 = vsel %vm335, %v1868, 0
      %v1997 = vsel %vm335, %v1870, 0
      %v1999 = vsel %vm335, %v1872, 0
      %v2001 = vsel %vm335, %v1874, 0
      %v2003 = vsel %vm335, %v1876, 0
      %v2005 = vsel %vm335, %v1878, 0
      %v2007 = vsel %vm335, %v1880, 0
      %v2009 = vsel %vm335, %v1882, 0
      %v2011 = vsel %vm335, %v1884, 0
      %v2013 = vsel %vm335, %v1886, 0
      %v2015 = vsel %vm335, %v1888, 0
      %v2017 = vsel %vm335, %v1890, 0
      %v2019 = vsel %vm335, %v1892, 0
      %v2021 = vsel %vm335, %v1894, 0
      %v2023 = vsel %vm335, %v1896, 0
      %v2025 = vsel %vm335, %v1898, 0
      %v2027 = vsel %vm335, %v1900, 0
      %v2029 = vsel %vm335, %v1902, 0
      %v2031 = vsel %vm335, %v1904, 0
      %v2033 = vsel %vm335, %v1906, 0
      %v2035 = vsel %vm335, %v1908, 0
      %v2037 = vsel %vm335, %v1910, 0
      %v2039 = vsel %vm335, %v1912, 0
      %v2041 = vsel %vm335, %v1914, 0
      %v2043 = vsel %vm335, %v1916, 0
      %2045 = vmatpush.msra.mxu0 0.0
      %2046 = vmatpush.msra.mxu0 0.0
      %2047 = vmatpush.msra.mxu0 0.0
      %2048 = vmatpush.msra.mxu0 0.0
      %2049 = vmatpush.msra.mxu0 0.0
      %2050 = vmatpush.msra.mxu0 0.0
      %2051 = vmatpush.msra.mxu0 0.0
      %2052 = vmatpush.msra.mxu0 0.0
      %2053 = vmatpush.msra.mxu0 0.0
      %2054 = vmatpush.msra.mxu0 0.0
      %2055 = vmatpush.msra.mxu0 0.0
      %2056 = vmatpush.msra.mxu0 0.0
      %2057 = vmatpush.msra.mxu0 0.0
      %2058 = vmatpush.msra.mxu0 0.0
      %2059 = vmatpush.msra.mxu0 0.0
      %2060 = vmatpush.msra.mxu0 %v267
      %2061 = vmatmul.f32.gmra.mxu0 %v1917
      %v2062 = vpop.f32.mrf.mxu0
      %v2063 = vadd.f32 0.0, %v2062
      %2064 = vmatmul.f32.gmra.mxu0 %v1919
      %v2065 = vpop.f32.mrf.mxu0
      %v2066 = vadd.f32 0.0, %v2065
      %2067 = vmatmul.f32.gmra.mxu0 %v1921
      %v2068 = vpop.f32.mrf.mxu0
      %v2069 = vadd.f32 0.0, %v2068
      %2070 = vmatmul.f32.gmra.mxu0 %v1923
      %v2071 = vpop.f32.mrf.mxu0
      %v2072 = vadd.f32 0.0, %v2071
      %2073 = vmatmul.f32.gmra.mxu0 %v1925
      %v2074 = vpop.f32.mrf.mxu0
      %v2075 = vadd.f32 0.0, %v2074
      %2076 = vmatmul.f32.gmra.mxu0 %v1927
      %v2077 = vpop.f32.mrf.mxu0
      %v2078 = vadd.f32 0.0, %v2077
      %2079 = vmatmul.f32.gmra.mxu0 %v1929
      %v2080 = vpop.f32.mrf.mxu0
      %v2081 = vadd.f32 0.0, %v2080
      %2082 = vmatmul.f32.gmra.mxu0 %v1931
      %v2083 = vpop.f32.mrf.mxu0
      %v2084 = vadd.f32 0.0, %v2083
      %2085 = vmatmul.f32.gmra.mxu0 %v1933
      %v2086 = vpop.f32.mrf.mxu0
      %v2087 = vadd.f32 0.0, %v2086
      %2088 = vmatmul.f32.gmra.mxu0 %v1935
      %v2089 = vpop.f32.mrf.mxu0
      %v2090 = vadd.f32 0.0, %v2089
      %2091 = vmatmul.f32.gmra.mxu0 %v1937
      %v2092 = vpop.f32.mrf.mxu0
      %v2093 = vadd.f32 0.0, %v2092
      %2094 = vmatmul.f32.gmra.mxu0 %v1939
      %v2095 = vpop.f32.mrf.mxu0
      %v2096 = vadd.f32 0.0, %v2095
      %2097 = vmatmul.f32.gmra.mxu0 %v1941
      %v2098 = vpop.f32.mrf.mxu0
      %v2099 = vadd.f32 0.0, %v2098
      %2100 = vmatmul.f32.gmra.mxu0 %v1943
      %v2101 = vpop.f32.mrf.mxu0
      %v2102 = vadd.f32 0.0, %v2101
      %2103 = vmatmul.f32.gmra.mxu0 %v1945
      %v2104 = vpop.f32.mrf.mxu0
      %v2105 = vadd.f32 0.0, %v2104
      %2106 = vmatmul.f32.gmra.mxu0 %v1947
      %v2107 = vpop.f32.mrf.mxu0
      %v2108 = vadd.f32 0.0, %v2107
      %2109 = vmatmul.f32.gmra.mxu0 %v1949
      %v2110 = vpop.f32.mrf.mxu0
      %v2111 = vadd.f32 0.0, %v2110
      %2112 = vmatmul.f32.gmra.mxu0 %v1951
      %v2113 = vpop.f32.mrf.mxu0
      %v2114 = vadd.f32 0.0, %v2113
      %2115 = vmatmul.f32.gmra.mxu0 %v1953
      %v2116 = vpop.f32.mrf.mxu0
      %v2117 = vadd.f32 0.0, %v2116
      %2118 = vmatmul.f32.gmra.mxu0 %v1955
      %v2119 = vpop.f32.mrf.mxu0
      %v2120 = vadd.f32 0.0, %v2119
      %2121 = vmatmul.f32.gmra.mxu0 %v1957
      %v2122 = vpop.f32.mrf.mxu0
      %v2123 = vadd.f32 0.0, %v2122
      %2124 = vmatmul.f32.gmra.mxu0 %v1959
      %v2125 = vpop.f32.mrf.mxu0
      %v2126 = vadd.f32 0.0, %v2125
      %2127 = vmatmul.f32.gmra.mxu0 %v1961
      %v2128 = vpop.f32.mrf.mxu0
      %v2129 = vadd.f32 0.0, %v2128
      %2130 = vmatmul.f32.gmra.mxu0 %v1963
      %v2131 = vpop.f32.mrf.mxu0
      %v2132 = vadd.f32 0.0, %v2131
      %2133 = vmatmul.f32.gmra.mxu0 %v1965
      %v2134 = vpop.f32.mrf.mxu0
      %v2135 = vadd.f32 0.0, %v2134
      %2136 = vmatmul.f32.gmra.mxu0 %v1967
      %v2137 = vpop.f32.mrf.mxu0
      %v2138 = vadd.f32 0.0, %v2137
      %2139 = vmatmul.f32.gmra.mxu0 %v1969
      %v2140 = vpop.f32.mrf.mxu0
      %v2141 = vadd.f32 0.0, %v2140
      %2142 = vmatmul.f32.gmra.mxu0 %v1971
      %v2143 = vpop.f32.mrf.mxu0
      %v2144 = vadd.f32 0.0, %v2143
      %2145 = vmatmul.f32.gmra.mxu0 %v1973
      %v2146 = vpop.f32.mrf.mxu0
      %v2147 = vadd.f32 0.0, %v2146
      %2148 = vmatmul.f32.gmra.mxu0 %v1975
      %v2149 = vpop.f32.mrf.mxu0
      %v2150 = vadd.f32 0.0, %v2149
      %2151 = vmatmul.f32.gmra.mxu0 %v1977
      %v2152 = vpop.f32.mrf.mxu0
      %v2153 = vadd.f32 0.0, %v2152
      %2154 = vmatmul.f32.gmra.mxu0 %v1979
      %v2155 = vpop.f32.mrf.mxu0
      %v2156 = vadd.f32 0.0, %v2155
      %2157 = vmatmul.f32.gmra.mxu0 %v1981
      %v2158 = vpop.f32.mrf.mxu0
      %v2159 = vadd.f32 0.0, %v2158
      %2160 = vmatmul.f32.gmra.mxu0 %v1983
      %v2161 = vpop.f32.mrf.mxu0
      %v2162 = vadd.f32 0.0, %v2161
      %2163 = vmatmul.f32.gmra.mxu0 %v1985
      %v2164 = vpop.f32.mrf.mxu0
      %v2165 = vadd.f32 0.0, %v2164
      %2166 = vmatmul.f32.gmra.mxu0 %v1987
      %v2167 = vpop.f32.mrf.mxu0
      %v2168 = vadd.f32 0.0, %v2167
      %2169 = vmatmul.f32.gmra.mxu0 %v1989
      %v2170 = vpop.f32.mrf.mxu0
      %v2171 = vadd.f32 0.0, %v2170
      %2172 = vmatmul.f32.gmra.mxu0 %v1991
      %v2173 = vpop.f32.mrf.mxu0
      %v2174 = vadd.f32 0.0, %v2173
      %2175 = vmatmul.f32.gmra.mxu0 %v1993
      %v2176 = vpop.f32.mrf.mxu0
      %v2177 = vadd.f32 0.0, %v2176
      %2178 = vmatmul.f32.gmra.mxu0 %v1995
      %v2179 = vpop.f32.mrf.mxu0
      %v2180 = vadd.f32 0.0, %v2179
      %2181 = vmatmul.f32.gmra.mxu0 %v1997
      %v2182 = vpop.f32.mrf.mxu0
      %v2183 = vadd.f32 0.0, %v2182
      %2184 = vmatmul.f32.gmra.mxu0 %v1999
      %v2185 = vpop.f32.mrf.mxu0
      %v2186 = vadd.f32 0.0, %v2185
      %2187 = vmatmul.f32.gmra.mxu0 %v2001
      %v2188 = vpop.f32.mrf.mxu0
      %v2189 = vadd.f32 0.0, %v2188
      %2190 = vmatmul.f32.gmra.mxu0 %v2003
      %v2191 = vpop.f32.mrf.mxu0
      %v2192 = vadd.f32 0.0, %v2191
      %2193 = vmatmul.f32.gmra.mxu0 %v2005
      %v2194 = vpop.f32.mrf.mxu0
      %v2195 = vadd.f32 0.0, %v2194
      %2196 = vmatmul.f32.gmra.mxu0 %v2007
      %v2197 = vpop.f32.mrf.mxu0
      %v2198 = vadd.f32 0.0, %v2197
      %2199 = vmatmul.f32.gmra.mxu0 %v2009
      %v2200 = vpop.f32.mrf.mxu0
      %v2201 = vadd.f32 0.0, %v2200
      %2202 = vmatmul.f32.gmra.mxu0 %v2011
      %v2203 = vpop.f32.mrf.mxu0
      %v2204 = vadd.f32 0.0, %v2203
      %2205 = vmatmul.f32.gmra.mxu0 %v2013
      %v2206 = vpop.f32.mrf.mxu0
      %v2207 = vadd.f32 0.0, %v2206
      %2208 = vmatmul.f32.gmra.mxu0 %v2015
      %v2209 = vpop.f32.mrf.mxu0
      %v2210 = vadd.f32 0.0, %v2209
      %2211 = vmatmul.f32.gmra.mxu0 %v2017
      %v2212 = vpop.f32.mrf.mxu0
      %v2213 = vadd.f32 0.0, %v2212
      %2214 = vmatmul.f32.gmra.mxu0 %v2019
      %v2215 = vpop.f32.mrf.mxu0
      %v2216 = vadd.f32 0.0, %v2215
      %2217 = vmatmul.f32.gmra.mxu0 %v2021
      %v2218 = vpop.f32.mrf.mxu0
      %v2219 = vadd.f32 0.0, %v2218
      %2220 = vmatmul.f32.gmra.mxu0 %v2023
      %v2221 = vpop.f32.mrf.mxu0
      %v2222 = vadd.f32 0.0, %v2221
      %2223 = vmatmul.f32.gmra.mxu0 %v2025
      %v2224 = vpop.f32.mrf.mxu0
      %v2225 = vadd.f32 0.0, %v2224
      %2226 = vmatmul.f32.gmra.mxu0 %v2027
      %v2227 = vpop.f32.mrf.mxu0
      %v2228 = vadd.f32 0.0, %v2227
      %2229 = vmatmul.f32.gmra.mxu0 %v2029
      %v2230 = vpop.f32.mrf.mxu0
      %v2231 = vadd.f32 0.0, %v2230
      %2232 = vmatmul.f32.gmra.mxu0 %v2031
      %v2233 = vpop.f32.mrf.mxu0
      %v2234 = vadd.f32 0.0, %v2233
      %2235 = vmatmul.f32.gmra.mxu0 %v2033
      %v2236 = vpop.f32.mrf.mxu0
      %v2237 = vadd.f32 0.0, %v2236
      %2238 = vmatmul.f32.gmra.mxu0 %v2035
      %v2239 = vpop.f32.mrf.mxu0
      %v2240 = vadd.f32 0.0, %v2239
      %2241 = vmatmul.f32.gmra.mxu0 %v2037
      %v2242 = vpop.f32.mrf.mxu0
      %v2243 = vadd.f32 0.0, %v2242
      %2244 = vmatmul.f32.gmra.mxu0 %v2039
      %v2245 = vpop.f32.mrf.mxu0
      %v2246 = vadd.f32 0.0, %v2245
      %2247 = vmatmul.f32.gmra.mxu0 %v2041
      %v2248 = vpop.f32.mrf.mxu0
      %v2249 = vadd.f32 0.0, %v2248
      %2250 = vmatmul.f32.gmra.mxu0 %v2043
      %v2251 = vpop.f32.mrf.mxu0
      %v2252 = vadd.f32 0.0, %v2251
      %2253 = vdwg.mxu0
      %2254 = vmatpush.msra.mxu0 0.0
      %2255 = vmatpush.msra.mxu0 0.0
      %2256 = vmatpush.msra.mxu0 0.0
      %2257 = vmatpush.msra.mxu0 0.0
      %2258 = vmatpush.msra.mxu0 0.0
      %2259 = vmatpush.msra.mxu0 0.0
      %2260 = vmatpush.msra.mxu0 0.0
      %2261 = vmatpush.msra.mxu0 0.0
      %2262 = vmatpush.msra.mxu0 0.0
      %2263 = vmatpush.msra.mxu0 0.0
      %2264 = vmatpush.msra.mxu0 0.0
      %2265 = vmatpush.msra.mxu0 0.0
      %2266 = vmatpush.msra.mxu0 0.0
      %2267 = vmatpush.msra.mxu0 0.0
      %2268 = vmatpush.msra.mxu0 0.0
      %2269 = vmatpush.msra.mxu0 %v268
      %2270 = vmatmul.f32.gmra.mxu0 %v1917
      %v2271 = vpop.f32.mrf.mxu0
      %v2272 = vadd.f32 0.0, %v2271
      %2273 = vmatmul.f32.gmra.mxu0 %v1919
      %v2274 = vpop.f32.mrf.mxu0
      %v2275 = vadd.f32 0.0, %v2274
      %2276 = vmatmul.f32.gmra.mxu0 %v1921
      %v2277 = vpop.f32.mrf.mxu0
      %v2278 = vadd.f32 0.0, %v2277
      %2279 = vmatmul.f32.gmra.mxu0 %v1923
      %v2280 = vpop.f32.mrf.mxu0
      %v2281 = vadd.f32 0.0, %v2280
      %2282 = vmatmul.f32.gmra.mxu0 %v1925
      %v2283 = vpop.f32.mrf.mxu0
      %v2284 = vadd.f32 0.0, %v2283
      %2285 = vmatmul.f32.gmra.mxu0 %v1927
      %v2286 = vpop.f32.mrf.mxu0
      %v2287 = vadd.f32 0.0, %v2286
      %2288 = vmatmul.f32.gmra.mxu0 %v1929
      %v2289 = vpop.f32.mrf.mxu0
      %v2290 = vadd.f32 0.0, %v2289
      %2291 = vmatmul.f32.gmra.mxu0 %v1931
      %v2292 = vpop.f32.mrf.mxu0
      %v2293 = vadd.f32 0.0, %v2292
      %2294 = vmatmul.f32.gmra.mxu0 %v1933
      %v2295 = vpop.f32.mrf.mxu0
      %v2296 = vadd.f32 0.0, %v2295
      %2297 = vmatmul.f32.gmra.mxu0 %v1935
      %v2298 = vpop.f32.mrf.mxu0
      %v2299 = vadd.f32 0.0, %v2298
      %2300 = vmatmul.f32.gmra.mxu0 %v1937
      %v2301 = vpop.f32.mrf.mxu0
      %v2302 = vadd.f32 0.0, %v2301
      %2303 = vmatmul.f32.gmra.mxu0 %v1939
      %v2304 = vpop.f32.mrf.mxu0
      %v2305 = vadd.f32 0.0, %v2304
      %2306 = vmatmul.f32.gmra.mxu0 %v1941
      %v2307 = vpop.f32.mrf.mxu0
      %v2308 = vadd.f32 0.0, %v2307
      %2309 = vmatmul.f32.gmra.mxu0 %v1943
      %v2310 = vpop.f32.mrf.mxu0
      %v2311 = vadd.f32 0.0, %v2310
      %2312 = vmatmul.f32.gmra.mxu0 %v1945
      %v2313 = vpop.f32.mrf.mxu0
      %v2314 = vadd.f32 0.0, %v2313
      %2315 = vmatmul.f32.gmra.mxu0 %v1947
      %v2316 = vpop.f32.mrf.mxu0
      %v2317 = vadd.f32 0.0, %v2316
      %2318 = vmatmul.f32.gmra.mxu0 %v1949
      %v2319 = vpop.f32.mrf.mxu0
      %v2320 = vadd.f32 0.0, %v2319
      %2321 = vmatmul.f32.gmra.mxu0 %v1951
      %v2322 = vpop.f32.mrf.mxu0
      %v2323 = vadd.f32 0.0, %v2322
      %2324 = vmatmul.f32.gmra.mxu0 %v1953
      %v2325 = vpop.f32.mrf.mxu0
      %v2326 = vadd.f32 0.0, %v2325
      %2327 = vmatmul.f32.gmra.mxu0 %v1955
      %v2328 = vpop.f32.mrf.mxu0
      %v2329 = vadd.f32 0.0, %v2328
      %2330 = vmatmul.f32.gmra.mxu0 %v1957
      %v2331 = vpop.f32.mrf.mxu0
      %v2332 = vadd.f32 0.0, %v2331
      %2333 = vmatmul.f32.gmra.mxu0 %v1959
      %v2334 = vpop.f32.mrf.mxu0
      %v2335 = vadd.f32 0.0, %v2334
      %2336 = vmatmul.f32.gmra.mxu0 %v1961
      %v2337 = vpop.f32.mrf.mxu0
      %v2338 = vadd.f32 0.0, %v2337
      %2339 = vmatmul.f32.gmra.mxu0 %v1963
      %v2340 = vpop.f32.mrf.mxu0
      %v2341 = vadd.f32 0.0, %v2340
      %2342 = vmatmul.f32.gmra.mxu0 %v1965
      %v2343 = vpop.f32.mrf.mxu0
      %v2344 = vadd.f32 0.0, %v2343
      %2345 = vmatmul.f32.gmra.mxu0 %v1967
      %v2346 = vpop.f32.mrf.mxu0
      %v2347 = vadd.f32 0.0, %v2346
      %2348 = vmatmul.f32.gmra.mxu0 %v1969
      %v2349 = vpop.f32.mrf.mxu0
      %v2350 = vadd.f32 0.0, %v2349
      %2351 = vmatmul.f32.gmra.mxu0 %v1971
      %v2352 = vpop.f32.mrf.mxu0
      %v2353 = vadd.f32 0.0, %v2352
      %2354 = vmatmul.f32.gmra.mxu0 %v1973
      %v2355 = vpop.f32.mrf.mxu0
      %v2356 = vadd.f32 0.0, %v2355
      %2357 = vmatmul.f32.gmra.mxu0 %v1975
      %v2358 = vpop.f32.mrf.mxu0
      %v2359 = vadd.f32 0.0, %v2358
      %2360 = vmatmul.f32.gmra.mxu0 %v1977
      %v2361 = vpop.f32.mrf.mxu0
      %v2362 = vadd.f32 0.0, %v2361
      %2363 = vmatmul.f32.gmra.mxu0 %v1979
      %v2364 = vpop.f32.mrf.mxu0
      %v2365 = vadd.f32 0.0, %v2364
      %2366 = vmatmul.f32.gmra.mxu0 %v1981
      %v2367 = vpop.f32.mrf.mxu0
      %v2368 = vadd.f32 0.0, %v2367
      %2369 = vmatmul.f32.gmra.mxu0 %v1983
      %v2370 = vpop.f32.mrf.mxu0
      %v2371 = vadd.f32 0.0, %v2370
      %2372 = vmatmul.f32.gmra.mxu0 %v1985
      %v2373 = vpop.f32.mrf.mxu0
      %v2374 = vadd.f32 0.0, %v2373
      %2375 = vmatmul.f32.gmra.mxu0 %v1987
      %v2376 = vpop.f32.mrf.mxu0
      %v2377 = vadd.f32 0.0, %v2376
      %2378 = vmatmul.f32.gmra.mxu0 %v1989
      %v2379 = vpop.f32.mrf.mxu0
      %v2380 = vadd.f32 0.0, %v2379
      %2381 = vmatmul.f32.gmra.mxu0 %v1991
      %v2382 = vpop.f32.mrf.mxu0
      %v2383 = vadd.f32 0.0, %v2382
      %2384 = vmatmul.f32.gmra.mxu0 %v1993
      %v2385 = vpop.f32.mrf.mxu0
      %v2386 = vadd.f32 0.0, %v2385
      %2387 = vmatmul.f32.gmra.mxu0 %v1995
      %v2388 = vpop.f32.mrf.mxu0
      %v2389 = vadd.f32 0.0, %v2388
      %2390 = vmatmul.f32.gmra.mxu0 %v1997
      %v2391 = vpop.f32.mrf.mxu0
      %v2392 = vadd.f32 0.0, %v2391
      %2393 = vmatmul.f32.gmra.mxu0 %v1999
      %v2394 = vpop.f32.mrf.mxu0
      %v2395 = vadd.f32 0.0, %v2394
      %2396 = vmatmul.f32.gmra.mxu0 %v2001
      %v2397 = vpop.f32.mrf.mxu0
      %v2398 = vadd.f32 0.0, %v2397
      %2399 = vmatmul.f32.gmra.mxu0 %v2003
      %v2400 = vpop.f32.mrf.mxu0
      %v2401 = vadd.f32 0.0, %v2400
      %2402 = vmatmul.f32.gmra.mxu0 %v2005
      %v2403 = vpop.f32.mrf.mxu0
      %v2404 = vadd.f32 0.0, %v2403
      %2405 = vmatmul.f32.gmra.mxu0 %v2007
      %v2406 = vpop.f32.mrf.mxu0
      %v2407 = vadd.f32 0.0, %v2406
      %2408 = vmatmul.f32.gmra.mxu0 %v2009
      %v2409 = vpop.f32.mrf.mxu0
      %v2410 = vadd.f32 0.0, %v2409
      %2411 = vmatmul.f32.gmra.mxu0 %v2011
      %v2412 = vpop.f32.mrf.mxu0
      %v2413 = vadd.f32 0.0, %v2412
      %2414 = vmatmul.f32.gmra.mxu0 %v2013
      %v2415 = vpop.f32.mrf.mxu0
      %v2416 = vadd.f32 0.0, %v2415
      %2417 = vmatmul.f32.gmra.mxu0 %v2015
      %v2418 = vpop.f32.mrf.mxu0
      %v2419 = vadd.f32 0.0, %v2418
      %2420 = vmatmul.f32.gmra.mxu0 %v2017
      %v2421 = vpop.f32.mrf.mxu0
      %v2422 = vadd.f32 0.0, %v2421
      %2423 = vmatmul.f32.gmra.mxu0 %v2019
      %v2424 = vpop.f32.mrf.mxu0
      %v2425 = vadd.f32 0.0, %v2424
      %2426 = vmatmul.f32.gmra.mxu0 %v2021
      %v2427 = vpop.f32.mrf.mxu0
      %v2428 = vadd.f32 0.0, %v2427
      %2429 = vmatmul.f32.gmra.mxu0 %v2023
      %v2430 = vpop.f32.mrf.mxu0
      %v2431 = vadd.f32 0.0, %v2430
      %2432 = vmatmul.f32.gmra.mxu0 %v2025
      %v2433 = vpop.f32.mrf.mxu0
      %v2434 = vadd.f32 0.0, %v2433
      %2435 = vmatmul.f32.gmra.mxu0 %v2027
      %v2436 = vpop.f32.mrf.mxu0
      %v2437 = vadd.f32 0.0, %v2436
      %2438 = vmatmul.f32.gmra.mxu0 %v2029
      %v2439 = vpop.f32.mrf.mxu0
      %v2440 = vadd.f32 0.0, %v2439
      %2441 = vmatmul.f32.gmra.mxu0 %v2031
      %v2442 = vpop.f32.mrf.mxu0
      %v2443 = vadd.f32 0.0, %v2442
      %2444 = vmatmul.f32.gmra.mxu0 %v2033
      %v2445 = vpop.f32.mrf.mxu0
      %v2446 = vadd.f32 0.0, %v2445
      %2447 = vmatmul.f32.gmra.mxu0 %v2035
      %v2448 = vpop.f32.mrf.mxu0
      %v2449 = vadd.f32 0.0, %v2448
      %2450 = vmatmul.f32.gmra.mxu0 %v2037
      %v2451 = vpop.f32.mrf.mxu0
      %v2452 = vadd.f32 0.0, %v2451
      %2453 = vmatmul.f32.gmra.mxu0 %v2039
      %v2454 = vpop.f32.mrf.mxu0
      %v2455 = vadd.f32 0.0, %v2454
      %2456 = vmatmul.f32.gmra.mxu0 %v2041
      %v2457 = vpop.f32.mrf.mxu0
      %v2458 = vadd.f32 0.0, %v2457
      %2459 = vmatmul.f32.gmra.mxu0 %v2043
      %v2460 = vpop.f32.mrf.mxu0
      %v2461 = vadd.f32 0.0, %v2460
      %2462 = vdwg.mxu0
      %2463 = vmatpush.msra.mxu0 0.0
      %2464 = vmatpush.msra.mxu0 0.0
      %2465 = vmatpush.msra.mxu0 0.0
      %2466 = vmatpush.msra.mxu0 0.0
      %2467 = vmatpush.msra.mxu0 0.0
      %2468 = vmatpush.msra.mxu0 0.0
      %2469 = vmatpush.msra.mxu0 0.0
      %2470 = vmatpush.msra.mxu0 0.0
      %2471 = vmatpush.msra.mxu0 0.0
      %2472 = vmatpush.msra.mxu0 0.0
      %2473 = vmatpush.msra.mxu0 0.0
      %2474 = vmatpush.msra.mxu0 0.0
      %2475 = vmatpush.msra.mxu0 0.0
      %2476 = vmatpush.msra.mxu0 0.0
      %2477 = vmatpush.msra.mxu0 0.0
      %2478 = vmatpush.msra.mxu0 %v269
      %2479 = vmatmul.f32.gmra.mxu0 %v1917
      %v2480 = vpop.f32.mrf.mxu0
      %v2481 = vadd.f32 0.0, %v2480
      %2482 = vmatmul.f32.gmra.mxu0 %v1919
      %v2483 = vpop.f32.mrf.mxu0
      %v2484 = vadd.f32 0.0, %v2483
      %2485 = vmatmul.f32.gmra.mxu0 %v1921
      %v2486 = vpop.f32.mrf.mxu0
      %v2487 = vadd.f32 0.0, %v2486
      %2488 = vmatmul.f32.gmra.mxu0 %v1923
      %v2489 = vpop.f32.mrf.mxu0
      %v2490 = vadd.f32 0.0, %v2489
      %2491 = vmatmul.f32.gmra.mxu0 %v1925
      %v2492 = vpop.f32.mrf.mxu0
      %v2493 = vadd.f32 0.0, %v2492
      %2494 = vmatmul.f32.gmra.mxu0 %v1927
      %v2495 = vpop.f32.mrf.mxu0
      %v2496 = vadd.f32 0.0, %v2495
      %2497 = vmatmul.f32.gmra.mxu0 %v1929
      %v2498 = vpop.f32.mrf.mxu0
      %v2499 = vadd.f32 0.0, %v2498
      %2500 = vmatmul.f32.gmra.mxu0 %v1931
      %v2501 = vpop.f32.mrf.mxu0
      %v2502 = vadd.f32 0.0, %v2501
      %2503 = vmatmul.f32.gmra.mxu0 %v1933
      %v2504 = vpop.f32.mrf.mxu0
      %v2505 = vadd.f32 0.0, %v2504
      %2506 = vmatmul.f32.gmra.mxu0 %v1935
      %v2507 = vpop.f32.mrf.mxu0
      %v2508 = vadd.f32 0.0, %v2507
      %2509 = vmatmul.f32.gmra.mxu0 %v1937
      %v2510 = vpop.f32.mrf.mxu0
      %v2511 = vadd.f32 0.0, %v2510
      %2512 = vmatmul.f32.gmra.mxu0 %v1939
      %v2513 = vpop.f32.mrf.mxu0
      %v2514 = vadd.f32 0.0, %v2513
      %2515 = vmatmul.f32.gmra.mxu0 %v1941
      %v2516 = vpop.f32.mrf.mxu0
      %v2517 = vadd.f32 0.0, %v2516
      %2518 = vmatmul.f32.gmra.mxu0 %v1943
      %v2519 = vpop.f32.mrf.mxu0
      %v2520 = vadd.f32 0.0, %v2519
      %2521 = vmatmul.f32.gmra.mxu0 %v1945
      %v2522 = vpop.f32.mrf.mxu0
      %v2523 = vadd.f32 0.0, %v2522
      %2524 = vmatmul.f32.gmra.mxu0 %v1947
      %v2525 = vpop.f32.mrf.mxu0
      %v2526 = vadd.f32 0.0, %v2525
      %2527 = vmatmul.f32.gmra.mxu0 %v1949
      %v2528 = vpop.f32.mrf.mxu0
      %v2529 = vadd.f32 0.0, %v2528
      %2530 = vmatmul.f32.gmra.mxu0 %v1951
      %v2531 = vpop.f32.mrf.mxu0
      %v2532 = vadd.f32 0.0, %v2531
      %2533 = vmatmul.f32.gmra.mxu0 %v1953
      %v2534 = vpop.f32.mrf.mxu0
      %v2535 = vadd.f32 0.0, %v2534
      %2536 = vmatmul.f32.gmra.mxu0 %v1955
      %v2537 = vpop.f32.mrf.mxu0
      %v2538 = vadd.f32 0.0, %v2537
      %2539 = vmatmul.f32.gmra.mxu0 %v1957
      %v2540 = vpop.f32.mrf.mxu0
      %v2541 = vadd.f32 0.0, %v2540
      %2542 = vmatmul.f32.gmra.mxu0 %v1959
      %v2543 = vpop.f32.mrf.mxu0
      %v2544 = vadd.f32 0.0, %v2543
      %2545 = vmatmul.f32.gmra.mxu0 %v1961
      %v2546 = vpop.f32.mrf.mxu0
      %v2547 = vadd.f32 0.0, %v2546
      %2548 = vmatmul.f32.gmra.mxu0 %v1963
      %v2549 = vpop.f32.mrf.mxu0
      %v2550 = vadd.f32 0.0, %v2549
      %2551 = vmatmul.f32.gmra.mxu0 %v1965
      %v2552 = vpop.f32.mrf.mxu0
      %v2553 = vadd.f32 0.0, %v2552
      %2554 = vmatmul.f32.gmra.mxu0 %v1967
      %v2555 = vpop.f32.mrf.mxu0
      %v2556 = vadd.f32 0.0, %v2555
      %2557 = vmatmul.f32.gmra.mxu0 %v1969
      %v2558 = vpop.f32.mrf.mxu0
      %v2559 = vadd.f32 0.0, %v2558
      %2560 = vmatmul.f32.gmra.mxu0 %v1971
      %v2561 = vpop.f32.mrf.mxu0
      %v2562 = vadd.f32 0.0, %v2561
      %2563 = vmatmul.f32.gmra.mxu0 %v1973
      %v2564 = vpop.f32.mrf.mxu0
      %v2565 = vadd.f32 0.0, %v2564
      %2566 = vmatmul.f32.gmra.mxu0 %v1975
      %v2567 = vpop.f32.mrf.mxu0
      %v2568 = vadd.f32 0.0, %v2567
      %2569 = vmatmul.f32.gmra.mxu0 %v1977
      %v2570 = vpop.f32.mrf.mxu0
      %v2571 = vadd.f32 0.0, %v2570
      %2572 = vmatmul.f32.gmra.mxu0 %v1979
      %v2573 = vpop.f32.mrf.mxu0
      %v2574 = vadd.f32 0.0, %v2573
      %2575 = vmatmul.f32.gmra.mxu0 %v1981
      %v2576 = vpop.f32.mrf.mxu0
      %v2577 = vadd.f32 0.0, %v2576
      %2578 = vmatmul.f32.gmra.mxu0 %v1983
      %v2579 = vpop.f32.mrf.mxu0
      %v2580 = vadd.f32 0.0, %v2579
      %2581 = vmatmul.f32.gmra.mxu0 %v1985
      %v2582 = vpop.f32.mrf.mxu0
      %v2583 = vadd.f32 0.0, %v2582
      %2584 = vmatmul.f32.gmra.mxu0 %v1987
      %v2585 = vpop.f32.mrf.mxu0
      %v2586 = vadd.f32 0.0, %v2585
      %2587 = vmatmul.f32.gmra.mxu0 %v1989
      %v2588 = vpop.f32.mrf.mxu0
      %v2589 = vadd.f32 0.0, %v2588
      %2590 = vmatmul.f32.gmra.mxu0 %v1991
      %v2591 = vpop.f32.mrf.mxu0
      %v2592 = vadd.f32 0.0, %v2591
      %2593 = vmatmul.f32.gmra.mxu0 %v1993
      %v2594 = vpop.f32.mrf.mxu0
      %v2595 = vadd.f32 0.0, %v2594
      %2596 = vmatmul.f32.gmra.mxu0 %v1995
      %v2597 = vpop.f32.mrf.mxu0
      %v2598 = vadd.f32 0.0, %v2597
      %2599 = vmatmul.f32.gmra.mxu0 %v1997
      %v2600 = vpop.f32.mrf.mxu0
      %v2601 = vadd.f32 0.0, %v2600
      %2602 = vmatmul.f32.gmra.mxu0 %v1999
      %v2603 = vpop.f32.mrf.mxu0
      %v2604 = vadd.f32 0.0, %v2603
      %2605 = vmatmul.f32.gmra.mxu0 %v2001
      %v2606 = vpop.f32.mrf.mxu0
      %v2607 = vadd.f32 0.0, %v2606
      %2608 = vmatmul.f32.gmra.mxu0 %v2003
      %v2609 = vpop.f32.mrf.mxu0
      %v2610 = vadd.f32 0.0, %v2609
      %2611 = vmatmul.f32.gmra.mxu0 %v2005
      %v2612 = vpop.f32.mrf.mxu0
      %v2613 = vadd.f32 0.0, %v2612
      %2614 = vmatmul.f32.gmra.mxu0 %v2007
      %v2615 = vpop.f32.mrf.mxu0
      %v2616 = vadd.f32 0.0, %v2615
      %2617 = vmatmul.f32.gmra.mxu0 %v2009
      %v2618 = vpop.f32.mrf.mxu0
      %v2619 = vadd.f32 0.0, %v2618
      %2620 = vmatmul.f32.gmra.mxu0 %v2011
      %v2621 = vpop.f32.mrf.mxu0
      %v2622 = vadd.f32 0.0, %v2621
      %2623 = vmatmul.f32.gmra.mxu0 %v2013
      %v2624 = vpop.f32.mrf.mxu0
      %v2625 = vadd.f32 0.0, %v2624
      %2626 = vmatmul.f32.gmra.mxu0 %v2015
      %v2627 = vpop.f32.mrf.mxu0
      %v2628 = vadd.f32 0.0, %v2627
      %2629 = vmatmul.f32.gmra.mxu0 %v2017
      %v2630 = vpop.f32.mrf.mxu0
      %v2631 = vadd.f32 0.0, %v2630
      %2632 = vmatmul.f32.gmra.mxu0 %v2019
      %v2633 = vpop.f32.mrf.mxu0
      %v2634 = vadd.f32 0.0, %v2633
      %2635 = vmatmul.f32.gmra.mxu0 %v2021
      %v2636 = vpop.f32.mrf.mxu0
      %v2637 = vadd.f32 0.0, %v2636
      %2638 = vmatmul.f32.gmra.mxu0 %v2023
      %v2639 = vpop.f32.mrf.mxu0
      %v2640 = vadd.f32 0.0, %v2639
      %2641 = vmatmul.f32.gmra.mxu0 %v2025
      %v2642 = vpop.f32.mrf.mxu0
      %v2643 = vadd.f32 0.0, %v2642
      %2644 = vmatmul.f32.gmra.mxu0 %v2027
      %v2645 = vpop.f32.mrf.mxu0
      %v2646 = vadd.f32 0.0, %v2645
      %2647 = vmatmul.f32.gmra.mxu0 %v2029
      %v2648 = vpop.f32.mrf.mxu0
      %v2649 = vadd.f32 0.0, %v2648
      %2650 = vmatmul.f32.gmra.mxu0 %v2031
      %v2651 = vpop.f32.mrf.mxu0
      %v2652 = vadd.f32 0.0, %v2651
      %2653 = vmatmul.f32.gmra.mxu0 %v2033
      %v2654 = vpop.f32.mrf.mxu0
      %v2655 = vadd.f32 0.0, %v2654
      %2656 = vmatmul.f32.gmra.mxu0 %v2035
      %v2657 = vpop.f32.mrf.mxu0
      %v2658 = vadd.f32 0.0, %v2657
      %2659 = vmatmul.f32.gmra.mxu0 %v2037
      %v2660 = vpop.f32.mrf.mxu0
      %v2661 = vadd.f32 0.0, %v2660
      %2662 = vmatmul.f32.gmra.mxu0 %v2039
      %v2663 = vpop.f32.mrf.mxu0
      %v2664 = vadd.f32 0.0, %v2663
      %2665 = vmatmul.f32.gmra.mxu0 %v2041
      %v2666 = vpop.f32.mrf.mxu0
      %v2667 = vadd.f32 0.0, %v2666
      %2668 = vmatmul.f32.gmra.mxu0 %v2043
      %v2669 = vpop.f32.mrf.mxu0
      %v2670 = vadd.f32 0.0, %v2669
      %2671 = vdwg.mxu0
      %2672 = vmatpush.msra.mxu0 0.0
      %2673 = vmatpush.msra.mxu0 0.0
      %2674 = vmatpush.msra.mxu0 0.0
      %2675 = vmatpush.msra.mxu0 0.0
      %2676 = vmatpush.msra.mxu0 0.0
      %2677 = vmatpush.msra.mxu0 0.0
      %2678 = vmatpush.msra.mxu0 0.0
      %2679 = vmatpush.msra.mxu0 0.0
      %2680 = vmatpush.msra.mxu0 0.0
      %2681 = vmatpush.msra.mxu0 0.0
      %2682 = vmatpush.msra.mxu0 0.0
      %2683 = vmatpush.msra.mxu0 0.0
      %2684 = vmatpush.msra.mxu0 0.0
      %2685 = vmatpush.msra.mxu0 0.0
      %2686 = vmatpush.msra.mxu0 0.0
      %2687 = vmatpush.msra.mxu0 %v270
      %2688 = vmatmul.f32.gmra.mxu0 %v1917
      %v2689 = vpop.f32.mrf.mxu0
      %v2690 = vadd.f32 0.0, %v2689
      %2691 = vmatmul.f32.gmra.mxu0 %v1919
      %v2692 = vpop.f32.mrf.mxu0
      %v2693 = vadd.f32 0.0, %v2692
      %2694 = vmatmul.f32.gmra.mxu0 %v1921
      %v2695 = vpop.f32.mrf.mxu0
      %v2696 = vadd.f32 0.0, %v2695
      %2697 = vmatmul.f32.gmra.mxu0 %v1923
      %v2698 = vpop.f32.mrf.mxu0
      %v2699 = vadd.f32 0.0, %v2698
      %2700 = vmatmul.f32.gmra.mxu0 %v1925
      %v2701 = vpop.f32.mrf.mxu0
      %v2702 = vadd.f32 0.0, %v2701
      %2703 = vmatmul.f32.gmra.mxu0 %v1927
      %v2704 = vpop.f32.mrf.mxu0
      %v2705 = vadd.f32 0.0, %v2704
      %2706 = vmatmul.f32.gmra.mxu0 %v1929
      %v2707 = vpop.f32.mrf.mxu0
      %v2708 = vadd.f32 0.0, %v2707
      %2709 = vmatmul.f32.gmra.mxu0 %v1931
      %v2710 = vpop.f32.mrf.mxu0
      %v2711 = vadd.f32 0.0, %v2710
      %2712 = vmatmul.f32.gmra.mxu0 %v1933
      %v2713 = vpop.f32.mrf.mxu0
      %v2714 = vadd.f32 0.0, %v2713
      %2715 = vmatmul.f32.gmra.mxu0 %v1935
      %v2716 = vpop.f32.mrf.mxu0
      %v2717 = vadd.f32 0.0, %v2716
      %2718 = vmatmul.f32.gmra.mxu0 %v1937
      %v2719 = vpop.f32.mrf.mxu0
      %v2720 = vadd.f32 0.0, %v2719
      %2721 = vmatmul.f32.gmra.mxu0 %v1939
      %v2722 = vpop.f32.mrf.mxu0
      %v2723 = vadd.f32 0.0, %v2722
      %2724 = vmatmul.f32.gmra.mxu0 %v1941
      %v2725 = vpop.f32.mrf.mxu0
      %v2726 = vadd.f32 0.0, %v2725
      %2727 = vmatmul.f32.gmra.mxu0 %v1943
      %v2728 = vpop.f32.mrf.mxu0
      %v2729 = vadd.f32 0.0, %v2728
      %2730 = vmatmul.f32.gmra.mxu0 %v1945
      %v2731 = vpop.f32.mrf.mxu0
      %v2732 = vadd.f32 0.0, %v2731
      %2733 = vmatmul.f32.gmra.mxu0 %v1947
      %v2734 = vpop.f32.mrf.mxu0
      %v2735 = vadd.f32 0.0, %v2734
      %2736 = vmatmul.f32.gmra.mxu0 %v1949
      %v2737 = vpop.f32.mrf.mxu0
      %v2738 = vadd.f32 0.0, %v2737
      %2739 = vmatmul.f32.gmra.mxu0 %v1951
      %v2740 = vpop.f32.mrf.mxu0
      %v2741 = vadd.f32 0.0, %v2740
      %2742 = vmatmul.f32.gmra.mxu0 %v1953
      %v2743 = vpop.f32.mrf.mxu0
      %v2744 = vadd.f32 0.0, %v2743
      %2745 = vmatmul.f32.gmra.mxu0 %v1955
      %v2746 = vpop.f32.mrf.mxu0
      %v2747 = vadd.f32 0.0, %v2746
      %2748 = vmatmul.f32.gmra.mxu0 %v1957
      %v2749 = vpop.f32.mrf.mxu0
      %v2750 = vadd.f32 0.0, %v2749
      %2751 = vmatmul.f32.gmra.mxu0 %v1959
      %v2752 = vpop.f32.mrf.mxu0
      %v2753 = vadd.f32 0.0, %v2752
      %2754 = vmatmul.f32.gmra.mxu0 %v1961
      %v2755 = vpop.f32.mrf.mxu0
      %v2756 = vadd.f32 0.0, %v2755
      %2757 = vmatmul.f32.gmra.mxu0 %v1963
      %v2758 = vpop.f32.mrf.mxu0
      %v2759 = vadd.f32 0.0, %v2758
      %2760 = vmatmul.f32.gmra.mxu0 %v1965
      %v2761 = vpop.f32.mrf.mxu0
      %v2762 = vadd.f32 0.0, %v2761
      %2763 = vmatmul.f32.gmra.mxu0 %v1967
      %v2764 = vpop.f32.mrf.mxu0
      %v2765 = vadd.f32 0.0, %v2764
      %2766 = vmatmul.f32.gmra.mxu0 %v1969
      %v2767 = vpop.f32.mrf.mxu0
      %v2768 = vadd.f32 0.0, %v2767
      %2769 = vmatmul.f32.gmra.mxu0 %v1971
      %v2770 = vpop.f32.mrf.mxu0
      %v2771 = vadd.f32 0.0, %v2770
      %2772 = vmatmul.f32.gmra.mxu0 %v1973
      %v2773 = vpop.f32.mrf.mxu0
      %v2774 = vadd.f32 0.0, %v2773
      %2775 = vmatmul.f32.gmra.mxu0 %v1975
      %v2776 = vpop.f32.mrf.mxu0
      %v2777 = vadd.f32 0.0, %v2776
      %2778 = vmatmul.f32.gmra.mxu0 %v1977
      %v2779 = vpop.f32.mrf.mxu0
      %v2780 = vadd.f32 0.0, %v2779
      %2781 = vmatmul.f32.gmra.mxu0 %v1979
      %v2782 = vpop.f32.mrf.mxu0
      %v2783 = vadd.f32 0.0, %v2782
      %2784 = vmatmul.f32.gmra.mxu0 %v1981
      %v2785 = vpop.f32.mrf.mxu0
      %v2786 = vadd.f32 0.0, %v2785
      %2787 = vmatmul.f32.gmra.mxu0 %v1983
      %v2788 = vpop.f32.mrf.mxu0
      %v2789 = vadd.f32 0.0, %v2788
      %2790 = vmatmul.f32.gmra.mxu0 %v1985
      %v2791 = vpop.f32.mrf.mxu0
      %v2792 = vadd.f32 0.0, %v2791
      %2793 = vmatmul.f32.gmra.mxu0 %v1987
      %v2794 = vpop.f32.mrf.mxu0
      %v2795 = vadd.f32 0.0, %v2794
      %2796 = vmatmul.f32.gmra.mxu0 %v1989
      %v2797 = vpop.f32.mrf.mxu0
      %v2798 = vadd.f32 0.0, %v2797
      %2799 = vmatmul.f32.gmra.mxu0 %v1991
      %v2800 = vpop.f32.mrf.mxu0
      %v2801 = vadd.f32 0.0, %v2800
      %2802 = vmatmul.f32.gmra.mxu0 %v1993
      %v2803 = vpop.f32.mrf.mxu0
      %v2804 = vadd.f32 0.0, %v2803
      %2805 = vmatmul.f32.gmra.mxu0 %v1995
      %v2806 = vpop.f32.mrf.mxu0
      %v2807 = vadd.f32 0.0, %v2806
      %2808 = vmatmul.f32.gmra.mxu0 %v1997
      %v2809 = vpop.f32.mrf.mxu0
      %v2810 = vadd.f32 0.0, %v2809
      %2811 = vmatmul.f32.gmra.mxu0 %v1999
      %v2812 = vpop.f32.mrf.mxu0
      %v2813 = vadd.f32 0.0, %v2812
      %2814 = vmatmul.f32.gmra.mxu0 %v2001
      %v2815 = vpop.f32.mrf.mxu0
      %v2816 = vadd.f32 0.0, %v2815
      %2817 = vmatmul.f32.gmra.mxu0 %v2003
      %v2818 = vpop.f32.mrf.mxu0
      %v2819 = vadd.f32 0.0, %v2818
      %2820 = vmatmul.f32.gmra.mxu0 %v2005
      %v2821 = vpop.f32.mrf.mxu0
      %v2822 = vadd.f32 0.0, %v2821
      %2823 = vmatmul.f32.gmra.mxu0 %v2007
      %v2824 = vpop.f32.mrf.mxu0
      %v2825 = vadd.f32 0.0, %v2824
      %2826 = vmatmul.f32.gmra.mxu0 %v2009
      %v2827 = vpop.f32.mrf.mxu0
      %v2828 = vadd.f32 0.0, %v2827
      %2829 = vmatmul.f32.gmra.mxu0 %v2011
      %v2830 = vpop.f32.mrf.mxu0
      %v2831 = vadd.f32 0.0, %v2830
      %2832 = vmatmul.f32.gmra.mxu0 %v2013
      %v2833 = vpop.f32.mrf.mxu0
      %v2834 = vadd.f32 0.0, %v2833
      %2835 = vmatmul.f32.gmra.mxu0 %v2015
      %v2836 = vpop.f32.mrf.mxu0
      %v2837 = vadd.f32 0.0, %v2836
      %2838 = vmatmul.f32.gmra.mxu0 %v2017
      %v2839 = vpop.f32.mrf.mxu0
      %v2840 = vadd.f32 0.0, %v2839
      %2841 = vmatmul.f32.gmra.mxu0 %v2019
      %v2842 = vpop.f32.mrf.mxu0
      %v2843 = vadd.f32 0.0, %v2842
      %2844 = vmatmul.f32.gmra.mxu0 %v2021
      %v2845 = vpop.f32.mrf.mxu0
      %v2846 = vadd.f32 0.0, %v2845
      %2847 = vmatmul.f32.gmra.mxu0 %v2023
      %v2848 = vpop.f32.mrf.mxu0
      %v2849 = vadd.f32 0.0, %v2848
      %2850 = vmatmul.f32.gmra.mxu0 %v2025
      %v2851 = vpop.f32.mrf.mxu0
      %v2852 = vadd.f32 0.0, %v2851
      %2853 = vmatmul.f32.gmra.mxu0 %v2027
      %v2854 = vpop.f32.mrf.mxu0
      %v2855 = vadd.f32 0.0, %v2854
      %2856 = vmatmul.f32.gmra.mxu0 %v2029
      %v2857 = vpop.f32.mrf.mxu0
      %v2858 = vadd.f32 0.0, %v2857
      %2859 = vmatmul.f32.gmra.mxu0 %v2031
      %v2860 = vpop.f32.mrf.mxu0
      %v2861 = vadd.f32 0.0, %v2860
      %2862 = vmatmul.f32.gmra.mxu0 %v2033
      %v2863 = vpop.f32.mrf.mxu0
      %v2864 = vadd.f32 0.0, %v2863
      %2865 = vmatmul.f32.gmra.mxu0 %v2035
      %v2866 = vpop.f32.mrf.mxu0
      %v2867 = vadd.f32 0.0, %v2866
      %2868 = vmatmul.f32.gmra.mxu0 %v2037
      %v2869 = vpop.f32.mrf.mxu0
      %v2870 = vadd.f32 0.0, %v2869
      %2871 = vmatmul.f32.gmra.mxu0 %v2039
      %v2872 = vpop.f32.mrf.mxu0
      %v2873 = vadd.f32 0.0, %v2872
      %2874 = vmatmul.f32.gmra.mxu0 %v2041
      %v2875 = vpop.f32.mrf.mxu0
      %v2876 = vadd.f32 0.0, %v2875
      %2877 = vmatmul.f32.gmra.mxu0 %v2043
      %v2878 = vpop.f32.mrf.mxu0
      %v2879 = vadd.f32 0.0, %v2878
      %2880 = vdwg.mxu0
      %v2881 = vmin.f32 %v2063, %v2066
      %v2882 = vmin.f32 %v2881, %v2069
      %v2883 = vmin.f32 %v2882, %v2072
      %v2884 = vmin.f32 %v2883, %v2075
      %v2885 = vmin.f32 %v2884, %v2078
      %v2886 = vmin.f32 %v2885, %v2081
      %v2887 = vmin.f32 %v2886, %v2084
      %v2888 = vmin.f32 %v2887, %v2087
      %v2889 = vmin.f32 %v2888, %v2090
      %v2890 = vmin.f32 %v2889, %v2093
      %v2891 = vmin.f32 %v2890, %v2096
      %v2892 = vmin.f32 %v2891, %v2099
      %v2893 = vmin.f32 %v2892, %v2102
      %v2894 = vmin.f32 %v2893, %v2105
      %v2895 = vmin.f32 %v2894, %v2108
      %v2896 = vmin.f32 %v2895, %v2111
      %v2897 = vmin.f32 %v2896, %v2114
      %v2898 = vmin.f32 %v2897, %v2117
      %v2899 = vmin.f32 %v2898, %v2120
      %v2900 = vmin.f32 %v2899, %v2123
      %v2901 = vmin.f32 %v2900, %v2126
      %v2902 = vmin.f32 %v2901, %v2129
      %v2903 = vmin.f32 %v2902, %v2132
      %v2904 = vmin.f32 %v2903, %v2135
      %v2905 = vmin.f32 %v2904, %v2138
      %v2906 = vmin.f32 %v2905, %v2141
      %v2907 = vmin.f32 %v2906, %v2144
      %v2908 = vmin.f32 %v2907, %v2147
      %v2909 = vmin.f32 %v2908, %v2150
      %v2910 = vmin.f32 %v2909, %v2153
      %v2911 = vmin.f32 %v2910, %v2156
      %v2912 = vmin.f32 %v2911, %v2159
      %v2913 = vmin.f32 %v2912, %v2162
      %v2914 = vmin.f32 %v2913, %v2165
      %v2915 = vmin.f32 %v2914, %v2168
      %v2916 = vmin.f32 %v2915, %v2171
      %v2917 = vmin.f32 %v2916, %v2174
      %v2918 = vmin.f32 %v2917, %v2177
      %v2919 = vmin.f32 %v2918, %v2180
      %v2920 = vmin.f32 %v2919, %v2183
      %v2921 = vmin.f32 %v2920, %v2186
      %v2922 = vmin.f32 %v2921, %v2189
      %v2923 = vmin.f32 %v2922, %v2192
      %v2924 = vmin.f32 %v2923, %v2195
      %v2925 = vmin.f32 %v2924, %v2198
      %v2926 = vmin.f32 %v2925, %v2201
      %v2927 = vmin.f32 %v2926, %v2204
      %v2928 = vmin.f32 %v2927, %v2207
      %v2929 = vmin.f32 %v2928, %v2210
      %v2930 = vmin.f32 %v2929, %v2213
      %v2931 = vmin.f32 %v2930, %v2216
      %v2932 = vmin.f32 %v2931, %v2219
      %v2933 = vmin.f32 %v2932, %v2222
      %v2934 = vmin.f32 %v2933, %v2225
      %v2935 = vmin.f32 %v2934, %v2228
      %v2936 = vmin.f32 %v2935, %v2231
      %v2937 = vmin.f32 %v2936, %v2234
      %v2938 = vmin.f32 %v2937, %v2237
      %v2939 = vmin.f32 %v2938, %v2240
      %v2940 = vmin.f32 %v2939, %v2243
      %v2941 = vmin.f32 %v2940, %v2246
      %v2942 = vmin.f32 %v2941, %v2249
      %v2943 = vmin.f32 %v2942, %v2252
      %v2944 = vrot.slane %v2943, 4
      %v2945 = vmin.f32 %v2943, %v2944
      %v2946 = vrot.slane %v2945, 2
      %v2947 = vmin.f32 %v2945, %v2946
      %v2948 = vrot.slane %v2947, 1
      %v2949 = vmin.f32 %v2947, %v2948
      %v2950 = vmin.f32 %v2272, %v2275
      %v2951 = vmin.f32 %v2950, %v2278
      %v2952 = vmin.f32 %v2951, %v2281
      %v2953 = vmin.f32 %v2952, %v2284
      %v2954 = vmin.f32 %v2953, %v2287
      %v2955 = vmin.f32 %v2954, %v2290
      %v2956 = vmin.f32 %v2955, %v2293
      %v2957 = vmin.f32 %v2956, %v2296
      %v2958 = vmin.f32 %v2957, %v2299
      %v2959 = vmin.f32 %v2958, %v2302
      %v2960 = vmin.f32 %v2959, %v2305
      %v2961 = vmin.f32 %v2960, %v2308
      %v2962 = vmin.f32 %v2961, %v2311
      %v2963 = vmin.f32 %v2962, %v2314
      %v2964 = vmin.f32 %v2963, %v2317
      %v2965 = vmin.f32 %v2964, %v2320
      %v2966 = vmin.f32 %v2965, %v2323
      %v2967 = vmin.f32 %v2966, %v2326
      %v2968 = vmin.f32 %v2967, %v2329
      %v2969 = vmin.f32 %v2968, %v2332
      %v2970 = vmin.f32 %v2969, %v2335
      %v2971 = vmin.f32 %v2970, %v2338
      %v2972 = vmin.f32 %v2971, %v2341
      %v2973 = vmin.f32 %v2972, %v2344
      %v2974 = vmin.f32 %v2973, %v2347
      %v2975 = vmin.f32 %v2974, %v2350
      %v2976 = vmin.f32 %v2975, %v2353
      %v2977 = vmin.f32 %v2976, %v2356
      %v2978 = vmin.f32 %v2977, %v2359
      %v2979 = vmin.f32 %v2978, %v2362
      %v2980 = vmin.f32 %v2979, %v2365
      %v2981 = vmin.f32 %v2980, %v2368
      %v2982 = vmin.f32 %v2981, %v2371
      %v2983 = vmin.f32 %v2982, %v2374
      %v2984 = vmin.f32 %v2983, %v2377
      %v2985 = vmin.f32 %v2984, %v2380
      %v2986 = vmin.f32 %v2985, %v2383
      %v2987 = vmin.f32 %v2986, %v2386
      %v2988 = vmin.f32 %v2987, %v2389
      %v2989 = vmin.f32 %v2988, %v2392
      %v2990 = vmin.f32 %v2989, %v2395
      %v2991 = vmin.f32 %v2990, %v2398
      %v2992 = vmin.f32 %v2991, %v2401
      %v2993 = vmin.f32 %v2992, %v2404
      %v2994 = vmin.f32 %v2993, %v2407
      %v2995 = vmin.f32 %v2994, %v2410
      %v2996 = vmin.f32 %v2995, %v2413
      %v2997 = vmin.f32 %v2996, %v2416
      %v2998 = vmin.f32 %v2997, %v2419
      %v2999 = vmin.f32 %v2998, %v2422
      %v3000 = vmin.f32 %v2999, %v2425
      %v3001 = vmin.f32 %v3000, %v2428
      %v3002 = vmin.f32 %v3001, %v2431
      %v3003 = vmin.f32 %v3002, %v2434
      %v3004 = vmin.f32 %v3003, %v2437
      %v3005 = vmin.f32 %v3004, %v2440
      %v3006 = vmin.f32 %v3005, %v2443
      %v3007 = vmin.f32 %v3006, %v2446
      %v3008 = vmin.f32 %v3007, %v2449
      %v3009 = vmin.f32 %v3008, %v2452
      %v3010 = vmin.f32 %v3009, %v2455
      %v3011 = vmin.f32 %v3010, %v2458
      %v3012 = vmin.f32 %v3011, %v2461
      %v3013 = vrot.slane %v3012, 4
      %v3014 = vmin.f32 %v3012, %v3013
      %v3015 = vrot.slane %v3014, 2
      %v3016 = vmin.f32 %v3014, %v3015
      %v3017 = vrot.slane %v3016, 1
      %v3018 = vmin.f32 %v3016, %v3017
      %v3019 = vmin.f32 %v2481, %v2484
      %v3020 = vmin.f32 %v3019, %v2487
      %v3021 = vmin.f32 %v3020, %v2490
      %v3022 = vmin.f32 %v3021, %v2493
      %v3023 = vmin.f32 %v3022, %v2496
      %v3024 = vmin.f32 %v3023, %v2499
      %v3025 = vmin.f32 %v3024, %v2502
      %v3026 = vmin.f32 %v3025, %v2505
      %v3027 = vmin.f32 %v3026, %v2508
      %v3028 = vmin.f32 %v3027, %v2511
      %v3029 = vmin.f32 %v3028, %v2514
      %v3030 = vmin.f32 %v3029, %v2517
      %v3031 = vmin.f32 %v3030, %v2520
      %v3032 = vmin.f32 %v3031, %v2523
      %v3033 = vmin.f32 %v3032, %v2526
      %v3034 = vmin.f32 %v3033, %v2529
      %v3035 = vmin.f32 %v3034, %v2532
      %v3036 = vmin.f32 %v3035, %v2535
      %v3037 = vmin.f32 %v3036, %v2538
      %v3038 = vmin.f32 %v3037, %v2541
      %v3039 = vmin.f32 %v3038, %v2544
      %v3040 = vmin.f32 %v3039, %v2547
      %v3041 = vmin.f32 %v3040, %v2550
      %v3042 = vmin.f32 %v3041, %v2553
      %v3043 = vmin.f32 %v3042, %v2556
      %v3044 = vmin.f32 %v3043, %v2559
      %v3045 = vmin.f32 %v3044, %v2562
      %v3046 = vmin.f32 %v3045, %v2565
      %v3047 = vmin.f32 %v3046, %v2568
      %v3048 = vmin.f32 %v3047, %v2571
      %v3049 = vmin.f32 %v3048, %v2574
      %v3050 = vmin.f32 %v3049, %v2577
      %v3051 = vmin.f32 %v3050, %v2580
      %v3052 = vmin.f32 %v3051, %v2583
      %v3053 = vmin.f32 %v3052, %v2586
      %v3054 = vmin.f32 %v3053, %v2589
      %v3055 = vmin.f32 %v3054, %v2592
      %v3056 = vmin.f32 %v3055, %v2595
      %v3057 = vmin.f32 %v3056, %v2598
      %v3058 = vmin.f32 %v3057, %v2601
      %v3059 = vmin.f32 %v3058, %v2604
      %v3060 = vmin.f32 %v3059, %v2607
      %v3061 = vmin.f32 %v3060, %v2610
      %v3062 = vmin.f32 %v3061, %v2613
      %v3063 = vmin.f32 %v3062, %v2616
      %v3064 = vmin.f32 %v3063, %v2619
      %v3065 = vmin.f32 %v3064, %v2622
      %v3066 = vmin.f32 %v3065, %v2625
      %v3067 = vmin.f32 %v3066, %v2628
      %v3068 = vmin.f32 %v3067, %v2631
      %v3069 = vmin.f32 %v3068, %v2634
      %v3070 = vmin.f32 %v3069, %v2637
      %v3071 = vmin.f32 %v3070, %v2640
      %v3072 = vmin.f32 %v3071, %v2643
      %v3073 = vmin.f32 %v3072, %v2646
      %v3074 = vmin.f32 %v3073, %v2649
      %v3075 = vmin.f32 %v3074, %v2652
      %v3076 = vmin.f32 %v3075, %v2655
      %v3077 = vmin.f32 %v3076, %v2658
      %v3078 = vmin.f32 %v3077, %v2661
      %v3079 = vmin.f32 %v3078, %v2664
      %v3080 = vmin.f32 %v3079, %v2667
      %v3081 = vmin.f32 %v3080, %v2670
      %v3082 = vrot.slane %v3081, 4
      %v3083 = vmin.f32 %v3081, %v3082
      %v3084 = vrot.slane %v3083, 2
      %v3085 = vmin.f32 %v3083, %v3084
      %v3086 = vrot.slane %v3085, 1
      %v3087 = vmin.f32 %v3085, %v3086
      %v3088 = vmin.f32 %v2690, %v2693
      %v3089 = vmin.f32 %v3088, %v2696
      %v3090 = vmin.f32 %v3089, %v2699
      %v3091 = vmin.f32 %v3090, %v2702
      %v3092 = vmin.f32 %v3091, %v2705
      %v3093 = vmin.f32 %v3092, %v2708
      %v3094 = vmin.f32 %v3093, %v2711
      %v3095 = vmin.f32 %v3094, %v2714
      %v3096 = vmin.f32 %v3095, %v2717
      %v3097 = vmin.f32 %v3096, %v2720
      %v3098 = vmin.f32 %v3097, %v2723
      %v3099 = vmin.f32 %v3098, %v2726
      %v3100 = vmin.f32 %v3099, %v2729
      %v3101 = vmin.f32 %v3100, %v2732
      %v3102 = vmin.f32 %v3101, %v2735
      %v3103 = vmin.f32 %v3102, %v2738
      %v3104 = vmin.f32 %v3103, %v2741
      %v3105 = vmin.f32 %v3104, %v2744
      %v3106 = vmin.f32 %v3105, %v2747
      %v3107 = vmin.f32 %v3106, %v2750
      %v3108 = vmin.f32 %v3107, %v2753
      %v3109 = vmin.f32 %v3108, %v2756
      %v3110 = vmin.f32 %v3109, %v2759
      %v3111 = vmin.f32 %v3110, %v2762
      %v3112 = vmin.f32 %v3111, %v2765
      %v3113 = vmin.f32 %v3112, %v2768
      %v3114 = vmin.f32 %v3113, %v2771
      %v3115 = vmin.f32 %v3114, %v2774
      %v3116 = vmin.f32 %v3115, %v2777
      %v3117 = vmin.f32 %v3116, %v2780
      %v3118 = vmin.f32 %v3117, %v2783
      %v3119 = vmin.f32 %v3118, %v2786
      %v3120 = vmin.f32 %v3119, %v2789
      %v3121 = vmin.f32 %v3120, %v2792
      %v3122 = vmin.f32 %v3121, %v2795
      %v3123 = vmin.f32 %v3122, %v2798
      %v3124 = vmin.f32 %v3123, %v2801
      %v3125 = vmin.f32 %v3124, %v2804
      %v3126 = vmin.f32 %v3125, %v2807
      %v3127 = vmin.f32 %v3126, %v2810
      %v3128 = vmin.f32 %v3127, %v2813
      %v3129 = vmin.f32 %v3128, %v2816
      %v3130 = vmin.f32 %v3129, %v2819
      %v3131 = vmin.f32 %v3130, %v2822
      %v3132 = vmin.f32 %v3131, %v2825
      %v3133 = vmin.f32 %v3132, %v2828
      %v3134 = vmin.f32 %v3133, %v2831
      %v3135 = vmin.f32 %v3134, %v2834
      %v3136 = vmin.f32 %v3135, %v2837
      %v3137 = vmin.f32 %v3136, %v2840
      %v3138 = vmin.f32 %v3137, %v2843
      %v3139 = vmin.f32 %v3138, %v2846
      %v3140 = vmin.f32 %v3139, %v2849
      %v3141 = vmin.f32 %v3140, %v2852
      %v3142 = vmin.f32 %v3141, %v2855
      %v3143 = vmin.f32 %v3142, %v2858
      %v3144 = vmin.f32 %v3143, %v2861
      %v3145 = vmin.f32 %v3144, %v2864
      %v3146 = vmin.f32 %v3145, %v2867
      %v3147 = vmin.f32 %v3146, %v2870
      %v3148 = vmin.f32 %v3147, %v2873
      %v3149 = vmin.f32 %v3148, %v2876
      %v3150 = vmin.f32 %v3149, %v2879
      %v3151 = vrot.slane %v3150, 4
      %v3152 = vmin.f32 %v3150, %v3151
      %v3153 = vrot.slane %v3152, 2
      %v3154 = vmin.f32 %v3152, %v3153
      %v3155 = vrot.slane %v3154, 1
      %v3156 = vmin.f32 %v3154, %v3155
      %s3157 = scalar_lea.vmem [#allocation2], 1
      %v3158 = vld [vmem:[%s3157] ss:$4 sm:$0xf]
      %v3163 = vrot.slane %v3018, 7
      %v3164 = vrot.slane %v3087, 6
      %v3165 = vrot.slane %v3156, 5
      %v3166 = vsel %vm1648, %v2949, %v3163
      %v3167 = vsel %vm1650, %v3164, %v3165
      %v3168 = vsel %vm1652, %v3166, %v3167
      %v3170 = vmin.f32 %v3158, %v3168
      %3171 = vst.msk [vmem:[%s3157] ss:$4 sm:$0xf] %vm1659, %v3170
      %v3172 = vld [vmem:[%s255] sm:$0xff]
      %v3173 = vld [vmem:[%s255 + $0x8] sm:$0xff]
      %v3174 = vld [vmem:[%s255 + $0x10] sm:$0xff]
      %v3175 = vld [vmem:[%s255 + $0x18] sm:$0xff]
      %v3176 = vld [vmem:[%s255 + $0x20] sm:$0xff]
      %v3177 = vld [vmem:[%s255 + $0x28] sm:$0xff]
      %v3178 = vld [vmem:[%s255 + $0x30] sm:$0xff]
      %v3179 = vld [vmem:[%s255 + $0x38] sm:$0xff]
      %v3180 = vld [vmem:[%s255 + $0x40] sm:$0xff]
      %v3181 = vld [vmem:[%s255 + $0x48] sm:$0xff]
      %v3182 = vld [vmem:[%s255 + $0x50] sm:$0xff]
      %v3183 = vld [vmem:[%s255 + $0x58] sm:$0xff]
      %v3184 = vld [vmem:[%s255 + $0x60] sm:$0xff]
      %v3185 = vld [vmem:[%s255 + $0x68] sm:$0xff]
      %v3186 = vld [vmem:[%s255 + $0x70] sm:$0xff]
      %v3187 = vld [vmem:[%s255 + $0x78] sm:$0xff]
      %v3188 = vld [vmem:[%s255 + $0x80] sm:$0xff]
      %v3189 = vld [vmem:[%s255 + $0x88] sm:$0xff]
      %v3190 = vld [vmem:[%s255 + $0x90] sm:$0xff]
      %v3191 = vld [vmem:[%s255 + $0x98] sm:$0xff]
      %v3192 = vld [vmem:[%s255 + $0xa0] sm:$0xff]
      %v3193 = vld [vmem:[%s255 + $0xa8] sm:$0xff]
      %v3194 = vld [vmem:[%s255 + $0xb0] sm:$0xff]
      %v3195 = vld [vmem:[%s255 + $0xb8] sm:$0xff]
      %v3196 = vld [vmem:[%s255 + $0xc0] sm:$0xff]
      %v3197 = vld [vmem:[%s255 + $0xc8] sm:$0xff]
      %v3198 = vld [vmem:[%s255 + $0xd0] sm:$0xff]
      %v3199 = vld [vmem:[%s255 + $0xd8] sm:$0xff]
      %v3200 = vld [vmem:[%s255 + $0xe0] sm:$0xff]
      %v3201 = vld [vmem:[%s255 + $0xe8] sm:$0xff]
      %v3202 = vld [vmem:[%s255 + $0xf0] sm:$0xff]
      %v3203 = vld [vmem:[%s255 + $0xf8] sm:$0xff]
      %v3204 = vld [vmem:[%s255 + $0x100] sm:$0xff]
      %v3205 = vld [vmem:[%s255 + $0x108] sm:$0xff]
      %v3206 = vld [vmem:[%s255 + $0x110] sm:$0xff]
      %v3207 = vld [vmem:[%s255 + $0x118] sm:$0xff]
      %v3208 = vld [vmem:[%s255 + $0x120] sm:$0xff]
      %v3209 = vld [vmem:[%s255 + $0x128] sm:$0xff]
      %v3210 = vld [vmem:[%s255 + $0x130] sm:$0xff]
      %v3211 = vld [vmem:[%s255 + $0x138] sm:$0xff]
      %v3212 = vld [vmem:[%s255 + $0x140] sm:$0xff]
      %v3213 = vld [vmem:[%s255 + $0x148] sm:$0xff]
      %v3214 = vld [vmem:[%s255 + $0x150] sm:$0xff]
      %v3215 = vld [vmem:[%s255 + $0x158] sm:$0xff]
      %v3216 = vld [vmem:[%s255 + $0x160] sm:$0xff]
      %v3217 = vld [vmem:[%s255 + $0x168] sm:$0xff]
      %v3218 = vld [vmem:[%s255 + $0x170] sm:$0xff]
      %v3219 = vld [vmem:[%s255 + $0x178] sm:$0xff]
      %v3220 = vld [vmem:[%s255 + $0x180] sm:$0xff]
      %v3221 = vld [vmem:[%s255 + $0x188] sm:$0xff]
      %v3222 = vld [vmem:[%s255 + $0x190] sm:$0xff]
      %v3223 = vld [vmem:[%s255 + $0x198] sm:$0xff]
      %v3224 = vld [vmem:[%s255 + $0x1a0] sm:$0xff]
      %v3225 = vld [vmem:[%s255 + $0x1a8] sm:$0xff]
      %v3226 = vld [vmem:[%s255 + $0x1b0] sm:$0xff]
      %v3227 = vld [vmem:[%s255 + $0x1b8] sm:$0xff]
      %v3228 = vld [vmem:[%s255 + $0x1c0] sm:$0xff]
      %v3229 = vld [vmem:[%s255 + $0x1c8] sm:$0xff]
      %v3230 = vld [vmem:[%s255 + $0x1d0] sm:$0xff]
      %v3231 = vld [vmem:[%s255 + $0x1d8] sm:$0xff]
      %v3232 = vld [vmem:[%s255 + $0x1e0] sm:$0xff]
      %v3233 = vld [vmem:[%s255 + $0x1e8] sm:$0xff]
      %v3234 = vld [vmem:[%s255 + $0x1f0] sm:$0xff]
      %v3235 = vld [vmem:[%s255 + $0x1f8] sm:$0xff]
      %3300 = vrot.lane.b32.xlu0 %v3172, 112
      %v3301 = vpop.permute.xlu0 %3300
      %3302 = vrot.lane.b32.xlu0 %v3173, 112
      %v3303 = vpop.permute.xlu0 %3302
      %3304 = vrot.lane.b32.xlu0 %v3174, 112
      %v3305 = vpop.permute.xlu0 %3304
      %3306 = vrot.lane.b32.xlu0 %v3175, 112
      %v3307 = vpop.permute.xlu0 %3306
      %3308 = vrot.lane.b32.xlu0 %v3176, 112
      %v3309 = vpop.permute.xlu0 %3308
      %3310 = vrot.lane.b32.xlu0 %v3177, 112
      %v3311 = vpop.permute.xlu0 %3310
      %3312 = vrot.lane.b32.xlu0 %v3178, 112
      %v3313 = vpop.permute.xlu0 %3312
      %3314 = vrot.lane.b32.xlu0 %v3179, 112
      %v3315 = vpop.permute.xlu0 %3314
      %3316 = vrot.lane.b32.xlu0 %v3180, 112
      %v3317 = vpop.permute.xlu0 %3316
      %3318 = vrot.lane.b32.xlu0 %v3181, 112
      %v3319 = vpop.permute.xlu0 %3318
      %3320 = vrot.lane.b32.xlu0 %v3182, 112
      %v3321 = vpop.permute.xlu0 %3320
      %3322 = vrot.lane.b32.xlu0 %v3183, 112
      %v3323 = vpop.permute.xlu0 %3322
      %3324 = vrot.lane.b32.xlu0 %v3184, 112
      %v3325 = vpop.permute.xlu0 %3324
      %3326 = vrot.lane.b32.xlu0 %v3185, 112
      %v3327 = vpop.permute.xlu0 %3326
      %3328 = vrot.lane.b32.xlu0 %v3186, 112
      %v3329 = vpop.permute.xlu0 %3328
      %3330 = vrot.lane.b32.xlu0 %v3187, 112
      %v3331 = vpop.permute.xlu0 %3330
      %3332 = vrot.lane.b32.xlu0 %v3188, 112
      %v3333 = vpop.permute.xlu0 %3332
      %3334 = vrot.lane.b32.xlu0 %v3189, 112
      %v3335 = vpop.permute.xlu0 %3334
      %3336 = vrot.lane.b32.xlu0 %v3190, 112
      %v3337 = vpop.permute.xlu0 %3336
      %3338 = vrot.lane.b32.xlu0 %v3191, 112
      %v3339 = vpop.permute.xlu0 %3338
      %3340 = vrot.lane.b32.xlu0 %v3192, 112
      %v3341 = vpop.permute.xlu0 %3340
      %3342 = vrot.lane.b32.xlu0 %v3193, 112
      %v3343 = vpop.permute.xlu0 %3342
      %3344 = vrot.lane.b32.xlu0 %v3194, 112
      %v3345 = vpop.permute.xlu0 %3344
      %3346 = vrot.lane.b32.xlu0 %v3195, 112
      %v3347 = vpop.permute.xlu0 %3346
      %3348 = vrot.lane.b32.xlu0 %v3196, 112
      %v3349 = vpop.permute.xlu0 %3348
      %3350 = vrot.lane.b32.xlu0 %v3197, 112
      %v3351 = vpop.permute.xlu0 %3350
      %3352 = vrot.lane.b32.xlu0 %v3198, 112
      %v3353 = vpop.permute.xlu0 %3352
      %3354 = vrot.lane.b32.xlu0 %v3199, 112
      %v3355 = vpop.permute.xlu0 %3354
      %3356 = vrot.lane.b32.xlu0 %v3200, 112
      %v3357 = vpop.permute.xlu0 %3356
      %3358 = vrot.lane.b32.xlu0 %v3201, 112
      %v3359 = vpop.permute.xlu0 %3358
      %3360 = vrot.lane.b32.xlu0 %v3202, 112
      %v3361 = vpop.permute.xlu0 %3360
      %3362 = vrot.lane.b32.xlu0 %v3203, 112
      %v3363 = vpop.permute.xlu0 %3362
      %3364 = vrot.lane.b32.xlu0 %v3204, 112
      %v3365 = vpop.permute.xlu0 %3364
      %3366 = vrot.lane.b32.xlu0 %v3205, 112
      %v3367 = vpop.permute.xlu0 %3366
      %3368 = vrot.lane.b32.xlu0 %v3206, 112
      %v3369 = vpop.permute.xlu0 %3368
      %3370 = vrot.lane.b32.xlu0 %v3207, 112
      %v3371 = vpop.permute.xlu0 %3370
      %3372 = vrot.lane.b32.xlu0 %v3208, 112
      %v3373 = vpop.permute.xlu0 %3372
      %3374 = vrot.lane.b32.xlu0 %v3209, 112
      %v3375 = vpop.permute.xlu0 %3374
      %3376 = vrot.lane.b32.xlu0 %v3210, 112
      %v3377 = vpop.permute.xlu0 %3376
      %3378 = vrot.lane.b32.xlu0 %v3211, 112
      %v3379 = vpop.permute.xlu0 %3378
      %3380 = vrot.lane.b32.xlu0 %v3212, 112
      %v3381 = vpop.permute.xlu0 %3380
      %3382 = vrot.lane.b32.xlu0 %v3213, 112
      %v3383 = vpop.permute.xlu0 %3382
      %3384 = vrot.lane.b32.xlu0 %v3214, 112
      %v3385 = vpop.permute.xlu0 %3384
      %3386 = vrot.lane.b32.xlu0 %v3215, 112
      %v3387 = vpop.permute.xlu0 %3386
      %3388 = vrot.lane.b32.xlu0 %v3216, 112
      %v3389 = vpop.permute.xlu0 %3388
      %3390 = vrot.lane.b32.xlu0 %v3217, 112
      %v3391 = vpop.permute.xlu0 %3390
      %3392 = vrot.lane.b32.xlu0 %v3218, 112
      %v3393 = vpop.permute.xlu0 %3392
      %3394 = vrot.lane.b32.xlu0 %v3219, 112
      %v3395 = vpop.permute.xlu0 %3394
      %3396 = vrot.lane.b32.xlu0 %v3220, 112
      %v3397 = vpop.permute.xlu0 %3396
      %3398 = vrot.lane.b32.xlu0 %v3221, 112
      %v3399 = vpop.permute.xlu0 %3398
      %3400 = vrot.lane.b32.xlu0 %v3222, 112
      %v3401 = vpop.permute.xlu0 %3400
      %3402 = vrot.lane.b32.xlu0 %v3223, 112
      %v3403 = vpop.permute.xlu0 %3402
      %3404 = vrot.lane.b32.xlu0 %v3224, 112
      %v3405 = vpop.permute.xlu0 %3404
      %3406 = vrot.lane.b32.xlu0 %v3225, 112
      %v3407 = vpop.permute.xlu0 %3406
      %3408 = vrot.lane.b32.xlu0 %v3226, 112
      %v3409 = vpop.permute.xlu0 %3408
      %3410 = vrot.lane.b32.xlu0 %v3227, 112
      %v3411 = vpop.permute.xlu0 %3410
      %3412 = vrot.lane.b32.xlu0 %v3228, 112
      %v3413 = vpop.permute.xlu0 %3412
      %3414 = vrot.lane.b32.xlu0 %v3229, 112
      %v3415 = vpop.permute.xlu0 %3414
      %3416 = vrot.lane.b32.xlu0 %v3230, 112
      %v3417 = vpop.permute.xlu0 %3416
      %3418 = vrot.lane.b32.xlu0 %v3231, 112
      %v3419 = vpop.permute.xlu0 %3418
      %3420 = vrot.lane.b32.xlu0 %v3232, 112
      %v3421 = vpop.permute.xlu0 %3420
      %3422 = vrot.lane.b32.xlu0 %v3233, 112
      %v3423 = vpop.permute.xlu0 %3422
      %3424 = vrot.lane.b32.xlu0 %v3234, 112
      %v3425 = vpop.permute.xlu0 %3424
      %3426 = vrot.lane.b32.xlu0 %v3235, 112
      %v3427 = vpop.permute.xlu0 %3426
      %v3428 = vsel %vm335, %v3301, 0
      %v3430 = vsel %vm335, %v3303, 0
      %v3432 = vsel %vm335, %v3305, 0
      %v3434 = vsel %vm335, %v3307, 0
      %v3436 = vsel %vm335, %v3309, 0
      %v3438 = vsel %vm335, %v3311, 0
      %v3440 = vsel %vm335, %v3313, 0
      %v3442 = vsel %vm335, %v3315, 0
      %v3444 = vsel %vm335, %v3317, 0
      %v3446 = vsel %vm335, %v3319, 0
      %v3448 = vsel %vm335, %v3321, 0
      %v3450 = vsel %vm335, %v3323, 0
      %v3452 = vsel %vm335, %v3325, 0
      %v3454 = vsel %vm335, %v3327, 0
      %v3456 = vsel %vm335, %v3329, 0
      %v3458 = vsel %vm335, %v3331, 0
      %v3460 = vsel %vm335, %v3333, 0
      %v3462 = vsel %vm335, %v3335, 0
      %v3464 = vsel %vm335, %v3337, 0
      %v3466 = vsel %vm335, %v3339, 0
      %v3468 = vsel %vm335, %v3341, 0
      %v3470 = vsel %vm335, %v3343, 0
      %v3472 = vsel %vm335, %v3345, 0
      %v3474 = vsel %vm335, %v3347, 0
      %v3476 = vsel %vm335, %v3349, 0
      %v3478 = vsel %vm335, %v3351, 0
      %v3480 = vsel %vm335, %v3353, 0
      %v3482 = vsel %vm335, %v3355, 0
      %v3484 = vsel %vm335, %v3357, 0
      %v3486 = vsel %vm335, %v3359, 0
      %v3488 = vsel %vm335, %v3361, 0
      %v3490 = vsel %vm335, %v3363, 0
      %v3492 = vsel %vm335, %v3365, 0
      %v3494 = vsel %vm335, %v3367, 0
      %v3496 = vsel %vm335, %v3369, 0
      %v3498 = vsel %vm335, %v3371, 0
      %v3500 = vsel %vm335, %v3373, 0
      %v3502 = vsel %vm335, %v3375, 0
      %v3504 = vsel %vm335, %v3377, 0
      %v3506 = vsel %vm335, %v3379, 0
      %v3508 = vsel %vm335, %v3381, 0
      %v3510 = vsel %vm335, %v3383, 0
      %v3512 = vsel %vm335, %v3385, 0
      %v3514 = vsel %vm335, %v3387, 0
      %v3516 = vsel %vm335, %v3389, 0
      %v3518 = vsel %vm335, %v3391, 0
      %v3520 = vsel %vm335, %v3393, 0
      %v3522 = vsel %vm335, %v3395, 0
      %v3524 = vsel %vm335, %v3397, 0
      %v3526 = vsel %vm335, %v3399, 0
      %v3528 = vsel %vm335, %v3401, 0
      %v3530 = vsel %vm335, %v3403, 0
      %v3532 = vsel %vm335, %v3405, 0
      %v3534 = vsel %vm335, %v3407, 0
      %v3536 = vsel %vm335, %v3409, 0
      %v3538 = vsel %vm335, %v3411, 0
      %v3540 = vsel %vm335, %v3413, 0
      %v3542 = vsel %vm335, %v3415, 0
      %v3544 = vsel %vm335, %v3417, 0
      %v3546 = vsel %vm335, %v3419, 0
      %v3548 = vsel %vm335, %v3421, 0
      %v3550 = vsel %vm335, %v3423, 0
      %v3552 = vsel %vm335, %v3425, 0
      %v3554 = vsel %vm335, %v3427, 0
      %3556 = vmatpush.msra.mxu0 0.0
      %3557 = vmatpush.msra.mxu0 0.0
      %3558 = vmatpush.msra.mxu0 0.0
      %3559 = vmatpush.msra.mxu0 0.0
      %3560 = vmatpush.msra.mxu0 0.0
      %3561 = vmatpush.msra.mxu0 0.0
      %3562 = vmatpush.msra.mxu0 0.0
      %3563 = vmatpush.msra.mxu0 0.0
      %3564 = vmatpush.msra.mxu0 0.0
      %3565 = vmatpush.msra.mxu0 0.0
      %3566 = vmatpush.msra.mxu0 0.0
      %3567 = vmatpush.msra.mxu0 0.0
      %3568 = vmatpush.msra.mxu0 0.0
      %3569 = vmatpush.msra.mxu0 0.0
      %3570 = vmatpush.msra.mxu0 0.0
      %3571 = vmatpush.msra.mxu0 %v267
      %3572 = vmatmul.f32.gmra.mxu0 %v3428
      %v3573 = vpop.f32.mrf.mxu0
      %v3574 = vadd.f32 0.0, %v3573
      %3575 = vmatmul.f32.gmra.mxu0 %v3430
      %v3576 = vpop.f32.mrf.mxu0
      %v3577 = vadd.f32 0.0, %v3576
      %3578 = vmatmul.f32.gmra.mxu0 %v3432
      %v3579 = vpop.f32.mrf.mxu0
      %v3580 = vadd.f32 0.0, %v3579
      %3581 = vmatmul.f32.gmra.mxu0 %v3434
      %v3582 = vpop.f32.mrf.mxu0
      %v3583 = vadd.f32 0.0, %v3582
      %3584 = vmatmul.f32.gmra.mxu0 %v3436
      %v3585 = vpop.f32.mrf.mxu0
      %v3586 = vadd.f32 0.0, %v3585
      %3587 = vmatmul.f32.gmra.mxu0 %v3438
      %v3588 = vpop.f32.mrf.mxu0
      %v3589 = vadd.f32 0.0, %v3588
      %3590 = vmatmul.f32.gmra.mxu0 %v3440
      %v3591 = vpop.f32.mrf.mxu0
      %v3592 = vadd.f32 0.0, %v3591
      %3593 = vmatmul.f32.gmra.mxu0 %v3442
      %v3594 = vpop.f32.mrf.mxu0
      %v3595 = vadd.f32 0.0, %v3594
      %3596 = vmatmul.f32.gmra.mxu0 %v3444
      %v3597 = vpop.f32.mrf.mxu0
      %v3598 = vadd.f32 0.0, %v3597
      %3599 = vmatmul.f32.gmra.mxu0 %v3446
      %v3600 = vpop.f32.mrf.mxu0
      %v3601 = vadd.f32 0.0, %v3600
      %3602 = vmatmul.f32.gmra.mxu0 %v3448
      %v3603 = vpop.f32.mrf.mxu0
      %v3604 = vadd.f32 0.0, %v3603
      %3605 = vmatmul.f32.gmra.mxu0 %v3450
      %v3606 = vpop.f32.mrf.mxu0
      %v3607 = vadd.f32 0.0, %v3606
      %3608 = vmatmul.f32.gmra.mxu0 %v3452
      %v3609 = vpop.f32.mrf.mxu0
      %v3610 = vadd.f32 0.0, %v3609
      %3611 = vmatmul.f32.gmra.mxu0 %v3454
      %v3612 = vpop.f32.mrf.mxu0
      %v3613 = vadd.f32 0.0, %v3612
      %3614 = vmatmul.f32.gmra.mxu0 %v3456
      %v3615 = vpop.f32.mrf.mxu0
      %v3616 = vadd.f32 0.0, %v3615
      %3617 = vmatmul.f32.gmra.mxu0 %v3458
      %v3618 = vpop.f32.mrf.mxu0
      %v3619 = vadd.f32 0.0, %v3618
      %3620 = vmatmul.f32.gmra.mxu0 %v3460
      %v3621 = vpop.f32.mrf.mxu0
      %v3622 = vadd.f32 0.0, %v3621
      %3623 = vmatmul.f32.gmra.mxu0 %v3462
      %v3624 = vpop.f32.mrf.mxu0
      %v3625 = vadd.f32 0.0, %v3624
      %3626 = vmatmul.f32.gmra.mxu0 %v3464
      %v3627 = vpop.f32.mrf.mxu0
      %v3628 = vadd.f32 0.0, %v3627
      %3629 = vmatmul.f32.gmra.mxu0 %v3466
      %v3630 = vpop.f32.mrf.mxu0
      %v3631 = vadd.f32 0.0, %v3630
      %3632 = vmatmul.f32.gmra.mxu0 %v3468
      %v3633 = vpop.f32.mrf.mxu0
      %v3634 = vadd.f32 0.0, %v3633
      %3635 = vmatmul.f32.gmra.mxu0 %v3470
      %v3636 = vpop.f32.mrf.mxu0
      %v3637 = vadd.f32 0.0, %v3636
      %3638 = vmatmul.f32.gmra.mxu0 %v3472
      %v3639 = vpop.f32.mrf.mxu0
      %v3640 = vadd.f32 0.0, %v3639
      %3641 = vmatmul.f32.gmra.mxu0 %v3474
      %v3642 = vpop.f32.mrf.mxu0
      %v3643 = vadd.f32 0.0, %v3642
      %3644 = vmatmul.f32.gmra.mxu0 %v3476
      %v3645 = vpop.f32.mrf.mxu0
      %v3646 = vadd.f32 0.0, %v3645
      %3647 = vmatmul.f32.gmra.mxu0 %v3478
      %v3648 = vpop.f32.mrf.mxu0
      %v3649 = vadd.f32 0.0, %v3648
      %3650 = vmatmul.f32.gmra.mxu0 %v3480
      %v3651 = vpop.f32.mrf.mxu0
      %v3652 = vadd.f32 0.0, %v3651
      %3653 = vmatmul.f32.gmra.mxu0 %v3482
      %v3654 = vpop.f32.mrf.mxu0
      %v3655 = vadd.f32 0.0, %v3654
      %3656 = vmatmul.f32.gmra.mxu0 %v3484
      %v3657 = vpop.f32.mrf.mxu0
      %v3658 = vadd.f32 0.0, %v3657
      %3659 = vmatmul.f32.gmra.mxu0 %v3486
      %v3660 = vpop.f32.mrf.mxu0
      %v3661 = vadd.f32 0.0, %v3660
      %3662 = vmatmul.f32.gmra.mxu0 %v3488
      %v3663 = vpop.f32.mrf.mxu0
      %v3664 = vadd.f32 0.0, %v3663
      %3665 = vmatmul.f32.gmra.mxu0 %v3490
      %v3666 = vpop.f32.mrf.mxu0
      %v3667 = vadd.f32 0.0, %v3666
      %3668 = vmatmul.f32.gmra.mxu0 %v3492
      %v3669 = vpop.f32.mrf.mxu0
      %v3670 = vadd.f32 0.0, %v3669
      %3671 = vmatmul.f32.gmra.mxu0 %v3494
      %v3672 = vpop.f32.mrf.mxu0
      %v3673 = vadd.f32 0.0, %v3672
      %3674 = vmatmul.f32.gmra.mxu0 %v3496
      %v3675 = vpop.f32.mrf.mxu0
      %v3676 = vadd.f32 0.0, %v3675
      %3677 = vmatmul.f32.gmra.mxu0 %v3498
      %v3678 = vpop.f32.mrf.mxu0
      %v3679 = vadd.f32 0.0, %v3678
      %3680 = vmatmul.f32.gmra.mxu0 %v3500
      %v3681 = vpop.f32.mrf.mxu0
      %v3682 = vadd.f32 0.0, %v3681
      %3683 = vmatmul.f32.gmra.mxu0 %v3502
      %v3684 = vpop.f32.mrf.mxu0
      %v3685 = vadd.f32 0.0, %v3684
      %3686 = vmatmul.f32.gmra.mxu0 %v3504
      %v3687 = vpop.f32.mrf.mxu0
      %v3688 = vadd.f32 0.0, %v3687
      %3689 = vmatmul.f32.gmra.mxu0 %v3506
      %v3690 = vpop.f32.mrf.mxu0
      %v3691 = vadd.f32 0.0, %v3690
      %3692 = vmatmul.f32.gmra.mxu0 %v3508
      %v3693 = vpop.f32.mrf.mxu0
      %v3694 = vadd.f32 0.0, %v3693
      %3695 = vmatmul.f32.gmra.mxu0 %v3510
      %v3696 = vpop.f32.mrf.mxu0
      %v3697 = vadd.f32 0.0, %v3696
      %3698 = vmatmul.f32.gmra.mxu0 %v3512
      %v3699 = vpop.f32.mrf.mxu0
      %v3700 = vadd.f32 0.0, %v3699
      %3701 = vmatmul.f32.gmra.mxu0 %v3514
      %v3702 = vpop.f32.mrf.mxu0
      %v3703 = vadd.f32 0.0, %v3702
      %3704 = vmatmul.f32.gmra.mxu0 %v3516
      %v3705 = vpop.f32.mrf.mxu0
      %v3706 = vadd.f32 0.0, %v3705
      %3707 = vmatmul.f32.gmra.mxu0 %v3518
      %v3708 = vpop.f32.mrf.mxu0
      %v3709 = vadd.f32 0.0, %v3708
      %3710 = vmatmul.f32.gmra.mxu0 %v3520
      %v3711 = vpop.f32.mrf.mxu0
      %v3712 = vadd.f32 0.0, %v3711
      %3713 = vmatmul.f32.gmra.mxu0 %v3522
      %v3714 = vpop.f32.mrf.mxu0
      %v3715 = vadd.f32 0.0, %v3714
      %3716 = vmatmul.f32.gmra.mxu0 %v3524
      %v3717 = vpop.f32.mrf.mxu0
      %v3718 = vadd.f32 0.0, %v3717
      %3719 = vmatmul.f32.gmra.mxu0 %v3526
      %v3720 = vpop.f32.mrf.mxu0
      %v3721 = vadd.f32 0.0, %v3720
      %3722 = vmatmul.f32.gmra.mxu0 %v3528
      %v3723 = vpop.f32.mrf.mxu0
      %v3724 = vadd.f32 0.0, %v3723
      %3725 = vmatmul.f32.gmra.mxu0 %v3530
      %v3726 = vpop.f32.mrf.mxu0
      %v3727 = vadd.f32 0.0, %v3726
      %3728 = vmatmul.f32.gmra.mxu0 %v3532
      %v3729 = vpop.f32.mrf.mxu0
      %v3730 = vadd.f32 0.0, %v3729
      %3731 = vmatmul.f32.gmra.mxu0 %v3534
      %v3732 = vpop.f32.mrf.mxu0
      %v3733 = vadd.f32 0.0, %v3732
      %3734 = vmatmul.f32.gmra.mxu0 %v3536
      %v3735 = vpop.f32.mrf.mxu0
      %v3736 = vadd.f32 0.0, %v3735
      %3737 = vmatmul.f32.gmra.mxu0 %v3538
      %v3738 = vpop.f32.mrf.mxu0
      %v3739 = vadd.f32 0.0, %v3738
      %3740 = vmatmul.f32.gmra.mxu0 %v3540
      %v3741 = vpop.f32.mrf.mxu0
      %v3742 = vadd.f32 0.0, %v3741
      %3743 = vmatmul.f32.gmra.mxu0 %v3542
      %v3744 = vpop.f32.mrf.mxu0
      %v3745 = vadd.f32 0.0, %v3744
      %3746 = vmatmul.f32.gmra.mxu0 %v3544
      %v3747 = vpop.f32.mrf.mxu0
      %v3748 = vadd.f32 0.0, %v3747
      %3749 = vmatmul.f32.gmra.mxu0 %v3546
      %v3750 = vpop.f32.mrf.mxu0
      %v3751 = vadd.f32 0.0, %v3750
      %3752 = vmatmul.f32.gmra.mxu0 %v3548
      %v3753 = vpop.f32.mrf.mxu0
      %v3754 = vadd.f32 0.0, %v3753
      %3755 = vmatmul.f32.gmra.mxu0 %v3550
      %v3756 = vpop.f32.mrf.mxu0
      %v3757 = vadd.f32 0.0, %v3756
      %3758 = vmatmul.f32.gmra.mxu0 %v3552
      %v3759 = vpop.f32.mrf.mxu0
      %v3760 = vadd.f32 0.0, %v3759
      %3761 = vmatmul.f32.gmra.mxu0 %v3554
      %v3762 = vpop.f32.mrf.mxu0
      %v3763 = vadd.f32 0.0, %v3762
      %3764 = vdwg.mxu0
      %3765 = vmatpush.msra.mxu0 0.0
      %3766 = vmatpush.msra.mxu0 0.0
      %3767 = vmatpush.msra.mxu0 0.0
      %3768 = vmatpush.msra.mxu0 0.0
      %3769 = vmatpush.msra.mxu0 0.0
      %3770 = vmatpush.msra.mxu0 0.0
      %3771 = vmatpush.msra.mxu0 0.0
      %3772 = vmatpush.msra.mxu0 0.0
      %3773 = vmatpush.msra.mxu0 0.0
      %3774 = vmatpush.msra.mxu0 0.0
      %3775 = vmatpush.msra.mxu0 0.0
      %3776 = vmatpush.msra.mxu0 0.0
      %3777 = vmatpush.msra.mxu0 0.0
      %3778 = vmatpush.msra.mxu0 0.0
      %3779 = vmatpush.msra.mxu0 0.0
      %3780 = vmatpush.msra.mxu0 %v268
      %3781 = vmatmul.f32.gmra.mxu0 %v3428
      %v3782 = vpop.f32.mrf.mxu0
      %v3783 = vadd.f32 0.0, %v3782
      %3784 = vmatmul.f32.gmra.mxu0 %v3430
      %v3785 = vpop.f32.mrf.mxu0
      %v3786 = vadd.f32 0.0, %v3785
      %3787 = vmatmul.f32.gmra.mxu0 %v3432
      %v3788 = vpop.f32.mrf.mxu0
      %v3789 = vadd.f32 0.0, %v3788
      %3790 = vmatmul.f32.gmra.mxu0 %v3434
      %v3791 = vpop.f32.mrf.mxu0
      %v3792 = vadd.f32 0.0, %v3791
      %3793 = vmatmul.f32.gmra.mxu0 %v3436
      %v3794 = vpop.f32.mrf.mxu0
      %v3795 = vadd.f32 0.0, %v3794
      %3796 = vmatmul.f32.gmra.mxu0 %v3438
      %v3797 = vpop.f32.mrf.mxu0
      %v3798 = vadd.f32 0.0, %v3797
      %3799 = vmatmul.f32.gmra.mxu0 %v3440
      %v3800 = vpop.f32.mrf.mxu0
      %v3801 = vadd.f32 0.0, %v3800
      %3802 = vmatmul.f32.gmra.mxu0 %v3442
      %v3803 = vpop.f32.mrf.mxu0
      %v3804 = vadd.f32 0.0, %v3803
      %3805 = vmatmul.f32.gmra.mxu0 %v3444
      %v3806 = vpop.f32.mrf.mxu0
      %v3807 = vadd.f32 0.0, %v3806
      %3808 = vmatmul.f32.gmra.mxu0 %v3446
      %v3809 = vpop.f32.mrf.mxu0
      %v3810 = vadd.f32 0.0, %v3809
      %3811 = vmatmul.f32.gmra.mxu0 %v3448
      %v3812 = vpop.f32.mrf.mxu0
      %v3813 = vadd.f32 0.0, %v3812
      %3814 = vmatmul.f32.gmra.mxu0 %v3450
      %v3815 = vpop.f32.mrf.mxu0
      %v3816 = vadd.f32 0.0, %v3815
      %3817 = vmatmul.f32.gmra.mxu0 %v3452
      %v3818 = vpop.f32.mrf.mxu0
      %v3819 = vadd.f32 0.0, %v3818
      %3820 = vmatmul.f32.gmra.mxu0 %v3454
      %v3821 = vpop.f32.mrf.mxu0
      %v3822 = vadd.f32 0.0, %v3821
      %3823 = vmatmul.f32.gmra.mxu0 %v3456
      %v3824 = vpop.f32.mrf.mxu0
      %v3825 = vadd.f32 0.0, %v3824
      %3826 = vmatmul.f32.gmra.mxu0 %v3458
      %v3827 = vpop.f32.mrf.mxu0
      %v3828 = vadd.f32 0.0, %v3827
      %3829 = vmatmul.f32.gmra.mxu0 %v3460
      %v3830 = vpop.f32.mrf.mxu0
      %v3831 = vadd.f32 0.0, %v3830
      %3832 = vmatmul.f32.gmra.mxu0 %v3462
      %v3833 = vpop.f32.mrf.mxu0
      %v3834 = vadd.f32 0.0, %v3833
      %3835 = vmatmul.f32.gmra.mxu0 %v3464
      %v3836 = vpop.f32.mrf.mxu0
      %v3837 = vadd.f32 0.0, %v3836
      %3838 = vmatmul.f32.gmra.mxu0 %v3466
      %v3839 = vpop.f32.mrf.mxu0
      %v3840 = vadd.f32 0.0, %v3839
      %3841 = vmatmul.f32.gmra.mxu0 %v3468
      %v3842 = vpop.f32.mrf.mxu0
      %v3843 = vadd.f32 0.0, %v3842
      %3844 = vmatmul.f32.gmra.mxu0 %v3470
      %v3845 = vpop.f32.mrf.mxu0
      %v3846 = vadd.f32 0.0, %v3845
      %3847 = vmatmul.f32.gmra.mxu0 %v3472
      %v3848 = vpop.f32.mrf.mxu0
      %v3849 = vadd.f32 0.0, %v3848
      %3850 = vmatmul.f32.gmra.mxu0 %v3474
      %v3851 = vpop.f32.mrf.mxu0
      %v3852 = vadd.f32 0.0, %v3851
      %3853 = vmatmul.f32.gmra.mxu0 %v3476
      %v3854 = vpop.f32.mrf.mxu0
      %v3855 = vadd.f32 0.0, %v3854
      %3856 = vmatmul.f32.gmra.mxu0 %v3478
      %v3857 = vpop.f32.mrf.mxu0
      %v3858 = vadd.f32 0.0, %v3857
      %3859 = vmatmul.f32.gmra.mxu0 %v3480
      %v3860 = vpop.f32.mrf.mxu0
      %v3861 = vadd.f32 0.0, %v3860
      %3862 = vmatmul.f32.gmra.mxu0 %v3482
      %v3863 = vpop.f32.mrf.mxu0
      %v3864 = vadd.f32 0.0, %v3863
      %3865 = vmatmul.f32.gmra.mxu0 %v3484
      %v3866 = vpop.f32.mrf.mxu0
      %v3867 = vadd.f32 0.0, %v3866
      %3868 = vmatmul.f32.gmra.mxu0 %v3486
      %v3869 = vpop.f32.mrf.mxu0
      %v3870 = vadd.f32 0.0, %v3869
      %3871 = vmatmul.f32.gmra.mxu0 %v3488
      %v3872 = vpop.f32.mrf.mxu0
      %v3873 = vadd.f32 0.0, %v3872
      %3874 = vmatmul.f32.gmra.mxu0 %v3490
      %v3875 = vpop.f32.mrf.mxu0
      %v3876 = vadd.f32 0.0, %v3875
      %3877 = vmatmul.f32.gmra.mxu0 %v3492
      %v3878 = vpop.f32.mrf.mxu0
      %v3879 = vadd.f32 0.0, %v3878
      %3880 = vmatmul.f32.gmra.mxu0 %v3494
      %v3881 = vpop.f32.mrf.mxu0
      %v3882 = vadd.f32 0.0, %v3881
      %3883 = vmatmul.f32.gmra.mxu0 %v3496
      %v3884 = vpop.f32.mrf.mxu0
      %v3885 = vadd.f32 0.0, %v3884
      %3886 = vmatmul.f32.gmra.mxu0 %v3498
      %v3887 = vpop.f32.mrf.mxu0
      %v3888 = vadd.f32 0.0, %v3887
      %3889 = vmatmul.f32.gmra.mxu0 %v3500
      %v3890 = vpop.f32.mrf.mxu0
      %v3891 = vadd.f32 0.0, %v3890
      %3892 = vmatmul.f32.gmra.mxu0 %v3502
      %v3893 = vpop.f32.mrf.mxu0
      %v3894 = vadd.f32 0.0, %v3893
      %3895 = vmatmul.f32.gmra.mxu0 %v3504
      %v3896 = vpop.f32.mrf.mxu0
      %v3897 = vadd.f32 0.0, %v3896
      %3898 = vmatmul.f32.gmra.mxu0 %v3506
      %v3899 = vpop.f32.mrf.mxu0
      %v3900 = vadd.f32 0.0, %v3899
      %3901 = vmatmul.f32.gmra.mxu0 %v3508
      %v3902 = vpop.f32.mrf.mxu0
      %v3903 = vadd.f32 0.0, %v3902
      %3904 = vmatmul.f32.gmra.mxu0 %v3510
      %v3905 = vpop.f32.mrf.mxu0
      %v3906 = vadd.f32 0.0, %v3905
      %3907 = vmatmul.f32.gmra.mxu0 %v3512
      %v3908 = vpop.f32.mrf.mxu0
      %v3909 = vadd.f32 0.0, %v3908
      %3910 = vmatmul.f32.gmra.mxu0 %v3514
      %v3911 = vpop.f32.mrf.mxu0
      %v3912 = vadd.f32 0.0, %v3911
      %3913 = vmatmul.f32.gmra.mxu0 %v3516
      %v3914 = vpop.f32.mrf.mxu0
      %v3915 = vadd.f32 0.0, %v3914
      %3916 = vmatmul.f32.gmra.mxu0 %v3518
      %v3917 = vpop.f32.mrf.mxu0
      %v3918 = vadd.f32 0.0, %v3917
      %3919 = vmatmul.f32.gmra.mxu0 %v3520
      %v3920 = vpop.f32.mrf.mxu0
      %v3921 = vadd.f32 0.0, %v3920
      %3922 = vmatmul.f32.gmra.mxu0 %v3522
      %v3923 = vpop.f32.mrf.mxu0
      %v3924 = vadd.f32 0.0, %v3923
      %3925 = vmatmul.f32.gmra.mxu0 %v3524
      %v3926 = vpop.f32.mrf.mxu0
      %v3927 = vadd.f32 0.0, %v3926
      %3928 = vmatmul.f32.gmra.mxu0 %v3526
      %v3929 = vpop.f32.mrf.mxu0
      %v3930 = vadd.f32 0.0, %v3929
      %3931 = vmatmul.f32.gmra.mxu0 %v3528
      %v3932 = vpop.f32.mrf.mxu0
      %v3933 = vadd.f32 0.0, %v3932
      %3934 = vmatmul.f32.gmra.mxu0 %v3530
      %v3935 = vpop.f32.mrf.mxu0
      %v3936 = vadd.f32 0.0, %v3935
      %3937 = vmatmul.f32.gmra.mxu0 %v3532
      %v3938 = vpop.f32.mrf.mxu0
      %v3939 = vadd.f32 0.0, %v3938
      %3940 = vmatmul.f32.gmra.mxu0 %v3534
      %v3941 = vpop.f32.mrf.mxu0
      %v3942 = vadd.f32 0.0, %v3941
      %3943 = vmatmul.f32.gmra.mxu0 %v3536
      %v3944 = vpop.f32.mrf.mxu0
      %v3945 = vadd.f32 0.0, %v3944
      %3946 = vmatmul.f32.gmra.mxu0 %v3538
      %v3947 = vpop.f32.mrf.mxu0
      %v3948 = vadd.f32 0.0, %v3947
      %3949 = vmatmul.f32.gmra.mxu0 %v3540
      %v3950 = vpop.f32.mrf.mxu0
      %v3951 = vadd.f32 0.0, %v3950
      %3952 = vmatmul.f32.gmra.mxu0 %v3542
      %v3953 = vpop.f32.mrf.mxu0
      %v3954 = vadd.f32 0.0, %v3953
      %3955 = vmatmul.f32.gmra.mxu0 %v3544
      %v3956 = vpop.f32.mrf.mxu0
      %v3957 = vadd.f32 0.0, %v3956
      %3958 = vmatmul.f32.gmra.mxu0 %v3546
      %v3959 = vpop.f32.mrf.mxu0
      %v3960 = vadd.f32 0.0, %v3959
      %3961 = vmatmul.f32.gmra.mxu0 %v3548
      %v3962 = vpop.f32.mrf.mxu0
      %v3963 = vadd.f32 0.0, %v3962
      %3964 = vmatmul.f32.gmra.mxu0 %v3550
      %v3965 = vpop.f32.mrf.mxu0
      %v3966 = vadd.f32 0.0, %v3965
      %3967 = vmatmul.f32.gmra.mxu0 %v3552
      %v3968 = vpop.f32.mrf.mxu0
      %v3969 = vadd.f32 0.0, %v3968
      %3970 = vmatmul.f32.gmra.mxu0 %v3554
      %v3971 = vpop.f32.mrf.mxu0
      %v3972 = vadd.f32 0.0, %v3971
      %3973 = vdwg.mxu0
      %3974 = vmatpush.msra.mxu0 0.0
      %3975 = vmatpush.msra.mxu0 0.0
      %3976 = vmatpush.msra.mxu0 0.0
      %3977 = vmatpush.msra.mxu0 0.0
      %3978 = vmatpush.msra.mxu0 0.0
      %3979 = vmatpush.msra.mxu0 0.0
      %3980 = vmatpush.msra.mxu0 0.0
      %3981 = vmatpush.msra.mxu0 0.0
      %3982 = vmatpush.msra.mxu0 0.0
      %3983 = vmatpush.msra.mxu0 0.0
      %3984 = vmatpush.msra.mxu0 0.0
      %3985 = vmatpush.msra.mxu0 0.0
      %3986 = vmatpush.msra.mxu0 0.0
      %3987 = vmatpush.msra.mxu0 0.0
      %3988 = vmatpush.msra.mxu0 0.0
      %3989 = vmatpush.msra.mxu0 %v269
      %3990 = vmatmul.f32.gmra.mxu0 %v3428
      %v3991 = vpop.f32.mrf.mxu0
      %v3992 = vadd.f32 0.0, %v3991
      %3993 = vmatmul.f32.gmra.mxu0 %v3430
      %v3994 = vpop.f32.mrf.mxu0
      %v3995 = vadd.f32 0.0, %v3994
      %3996 = vmatmul.f32.gmra.mxu0 %v3432
      %v3997 = vpop.f32.mrf.mxu0
      %v3998 = vadd.f32 0.0, %v3997
      %3999 = vmatmul.f32.gmra.mxu0 %v3434
      %v4000 = vpop.f32.mrf.mxu0
      %v4001 = vadd.f32 0.0, %v4000
      %4002 = vmatmul.f32.gmra.mxu0 %v3436
      %v4003 = vpop.f32.mrf.mxu0
      %v4004 = vadd.f32 0.0, %v4003
      %4005 = vmatmul.f32.gmra.mxu0 %v3438
      %v4006 = vpop.f32.mrf.mxu0
      %v4007 = vadd.f32 0.0, %v4006
      %4008 = vmatmul.f32.gmra.mxu0 %v3440
      %v4009 = vpop.f32.mrf.mxu0
      %v4010 = vadd.f32 0.0, %v4009
      %4011 = vmatmul.f32.gmra.mxu0 %v3442
      %v4012 = vpop.f32.mrf.mxu0
      %v4013 = vadd.f32 0.0, %v4012
      %4014 = vmatmul.f32.gmra.mxu0 %v3444
      %v4015 = vpop.f32.mrf.mxu0
      %v4016 = vadd.f32 0.0, %v4015
      %4017 = vmatmul.f32.gmra.mxu0 %v3446
      %v4018 = vpop.f32.mrf.mxu0
      %v4019 = vadd.f32 0.0, %v4018
      %4020 = vmatmul.f32.gmra.mxu0 %v3448
      %v4021 = vpop.f32.mrf.mxu0
      %v4022 = vadd.f32 0.0, %v4021
      %4023 = vmatmul.f32.gmra.mxu0 %v3450
      %v4024 = vpop.f32.mrf.mxu0
      %v4025 = vadd.f32 0.0, %v4024
      %4026 = vmatmul.f32.gmra.mxu0 %v3452
      %v4027 = vpop.f32.mrf.mxu0
      %v4028 = vadd.f32 0.0, %v4027
      %4029 = vmatmul.f32.gmra.mxu0 %v3454
      %v4030 = vpop.f32.mrf.mxu0
      %v4031 = vadd.f32 0.0, %v4030
      %4032 = vmatmul.f32.gmra.mxu0 %v3456
      %v4033 = vpop.f32.mrf.mxu0
      %v4034 = vadd.f32 0.0, %v4033
      %4035 = vmatmul.f32.gmra.mxu0 %v3458
      %v4036 = vpop.f32.mrf.mxu0
      %v4037 = vadd.f32 0.0, %v4036
      %4038 = vmatmul.f32.gmra.mxu0 %v3460
      %v4039 = vpop.f32.mrf.mxu0
      %v4040 = vadd.f32 0.0, %v4039
      %4041 = vmatmul.f32.gmra.mxu0 %v3462
      %v4042 = vpop.f32.mrf.mxu0
      %v4043 = vadd.f32 0.0, %v4042
      %4044 = vmatmul.f32.gmra.mxu0 %v3464
      %v4045 = vpop.f32.mrf.mxu0
      %v4046 = vadd.f32 0.0, %v4045
      %4047 = vmatmul.f32.gmra.mxu0 %v3466
      %v4048 = vpop.f32.mrf.mxu0
      %v4049 = vadd.f32 0.0, %v4048
      %4050 = vmatmul.f32.gmra.mxu0 %v3468
      %v4051 = vpop.f32.mrf.mxu0
      %v4052 = vadd.f32 0.0, %v4051
      %4053 = vmatmul.f32.gmra.mxu0 %v3470
      %v4054 = vpop.f32.mrf.mxu0
      %v4055 = vadd.f32 0.0, %v4054
      %4056 = vmatmul.f32.gmra.mxu0 %v3472
      %v4057 = vpop.f32.mrf.mxu0
      %v4058 = vadd.f32 0.0, %v4057
      %4059 = vmatmul.f32.gmra.mxu0 %v3474
      %v4060 = vpop.f32.mrf.mxu0
      %v4061 = vadd.f32 0.0, %v4060
      %4062 = vmatmul.f32.gmra.mxu0 %v3476
      %v4063 = vpop.f32.mrf.mxu0
      %v4064 = vadd.f32 0.0, %v4063
      %4065 = vmatmul.f32.gmra.mxu0 %v3478
      %v4066 = vpop.f32.mrf.mxu0
      %v4067 = vadd.f32 0.0, %v4066
      %4068 = vmatmul.f32.gmra.mxu0 %v3480
      %v4069 = vpop.f32.mrf.mxu0
      %v4070 = vadd.f32 0.0, %v4069
      %4071 = vmatmul.f32.gmra.mxu0 %v3482
      %v4072 = vpop.f32.mrf.mxu0
      %v4073 = vadd.f32 0.0, %v4072
      %4074 = vmatmul.f32.gmra.mxu0 %v3484
      %v4075 = vpop.f32.mrf.mxu0
      %v4076 = vadd.f32 0.0, %v4075
      %4077 = vmatmul.f32.gmra.mxu0 %v3486
      %v4078 = vpop.f32.mrf.mxu0
      %v4079 = vadd.f32 0.0, %v4078
      %4080 = vmatmul.f32.gmra.mxu0 %v3488
      %v4081 = vpop.f32.mrf.mxu0
      %v4082 = vadd.f32 0.0, %v4081
      %4083 = vmatmul.f32.gmra.mxu0 %v3490
      %v4084 = vpop.f32.mrf.mxu0
      %v4085 = vadd.f32 0.0, %v4084
      %4086 = vmatmul.f32.gmra.mxu0 %v3492
      %v4087 = vpop.f32.mrf.mxu0
      %v4088 = vadd.f32 0.0, %v4087
      %4089 = vmatmul.f32.gmra.mxu0 %v3494
      %v4090 = vpop.f32.mrf.mxu0
      %v4091 = vadd.f32 0.0, %v4090
      %4092 = vmatmul.f32.gmra.mxu0 %v3496
      %v4093 = vpop.f32.mrf.mxu0
      %v4094 = vadd.f32 0.0, %v4093
      %4095 = vmatmul.f32.gmra.mxu0 %v3498
      %v4096 = vpop.f32.mrf.mxu0
      %v4097 = vadd.f32 0.0, %v4096
      %4098 = vmatmul.f32.gmra.mxu0 %v3500
      %v4099 = vpop.f32.mrf.mxu0
      %v4100 = vadd.f32 0.0, %v4099
      %4101 = vmatmul.f32.gmra.mxu0 %v3502
      %v4102 = vpop.f32.mrf.mxu0
      %v4103 = vadd.f32 0.0, %v4102
      %4104 = vmatmul.f32.gmra.mxu0 %v3504
      %v4105 = vpop.f32.mrf.mxu0
      %v4106 = vadd.f32 0.0, %v4105
      %4107 = vmatmul.f32.gmra.mxu0 %v3506
      %v4108 = vpop.f32.mrf.mxu0
      %v4109 = vadd.f32 0.0, %v4108
      %4110 = vmatmul.f32.gmra.mxu0 %v3508
      %v4111 = vpop.f32.mrf.mxu0
      %v4112 = vadd.f32 0.0, %v4111
      %4113 = vmatmul.f32.gmra.mxu0 %v3510
      %v4114 = vpop.f32.mrf.mxu0
      %v4115 = vadd.f32 0.0, %v4114
      %4116 = vmatmul.f32.gmra.mxu0 %v3512
      %v4117 = vpop.f32.mrf.mxu0
      %v4118 = vadd.f32 0.0, %v4117
      %4119 = vmatmul.f32.gmra.mxu0 %v3514
      %v4120 = vpop.f32.mrf.mxu0
      %v4121 = vadd.f32 0.0, %v4120
      %4122 = vmatmul.f32.gmra.mxu0 %v3516
      %v4123 = vpop.f32.mrf.mxu0
      %v4124 = vadd.f32 0.0, %v4123
      %4125 = vmatmul.f32.gmra.mxu0 %v3518
      %v4126 = vpop.f32.mrf.mxu0
      %v4127 = vadd.f32 0.0, %v4126
      %4128 = vmatmul.f32.gmra.mxu0 %v3520
      %v4129 = vpop.f32.mrf.mxu0
      %v4130 = vadd.f32 0.0, %v4129
      %4131 = vmatmul.f32.gmra.mxu0 %v3522
      %v4132 = vpop.f32.mrf.mxu0
      %v4133 = vadd.f32 0.0, %v4132
      %4134 = vmatmul.f32.gmra.mxu0 %v3524
      %v4135 = vpop.f32.mrf.mxu0
      %v4136 = vadd.f32 0.0, %v4135
      %4137 = vmatmul.f32.gmra.mxu0 %v3526
      %v4138 = vpop.f32.mrf.mxu0
      %v4139 = vadd.f32 0.0, %v4138
      %4140 = vmatmul.f32.gmra.mxu0 %v3528
      %v4141 = vpop.f32.mrf.mxu0
      %v4142 = vadd.f32 0.0, %v4141
      %4143 = vmatmul.f32.gmra.mxu0 %v3530
      %v4144 = vpop.f32.mrf.mxu0
      %v4145 = vadd.f32 0.0, %v4144
      %4146 = vmatmul.f32.gmra.mxu0 %v3532
      %v4147 = vpop.f32.mrf.mxu0
      %v4148 = vadd.f32 0.0, %v4147
      %4149 = vmatmul.f32.gmra.mxu0 %v3534
      %v4150 = vpop.f32.mrf.mxu0
      %v4151 = vadd.f32 0.0, %v4150
      %4152 = vmatmul.f32.gmra.mxu0 %v3536
      %v4153 = vpop.f32.mrf.mxu0
      %v4154 = vadd.f32 0.0, %v4153
      %4155 = vmatmul.f32.gmra.mxu0 %v3538
      %v4156 = vpop.f32.mrf.mxu0
      %v4157 = vadd.f32 0.0, %v4156
      %4158 = vmatmul.f32.gmra.mxu0 %v3540
      %v4159 = vpop.f32.mrf.mxu0
      %v4160 = vadd.f32 0.0, %v4159
      %4161 = vmatmul.f32.gmra.mxu0 %v3542
      %v4162 = vpop.f32.mrf.mxu0
      %v4163 = vadd.f32 0.0, %v4162
      %4164 = vmatmul.f32.gmra.mxu0 %v3544
      %v4165 = vpop.f32.mrf.mxu0
      %v4166 = vadd.f32 0.0, %v4165
      %4167 = vmatmul.f32.gmra.mxu0 %v3546
      %v4168 = vpop.f32.mrf.mxu0
      %v4169 = vadd.f32 0.0, %v4168
      %4170 = vmatmul.f32.gmra.mxu0 %v3548
      %v4171 = vpop.f32.mrf.mxu0
      %v4172 = vadd.f32 0.0, %v4171
      %4173 = vmatmul.f32.gmra.mxu0 %v3550
      %v4174 = vpop.f32.mrf.mxu0
      %v4175 = vadd.f32 0.0, %v4174
      %4176 = vmatmul.f32.gmra.mxu0 %v3552
      %v4177 = vpop.f32.mrf.mxu0
      %v4178 = vadd.f32 0.0, %v4177
      %4179 = vmatmul.f32.gmra.mxu0 %v3554
      %v4180 = vpop.f32.mrf.mxu0
      %v4181 = vadd.f32 0.0, %v4180
      %4182 = vdwg.mxu0
      %4183 = vmatpush.msra.mxu0 0.0
      %4184 = vmatpush.msra.mxu0 0.0
      %4185 = vmatpush.msra.mxu0 0.0
      %4186 = vmatpush.msra.mxu0 0.0
      %4187 = vmatpush.msra.mxu0 0.0
      %4188 = vmatpush.msra.mxu0 0.0
      %4189 = vmatpush.msra.mxu0 0.0
      %4190 = vmatpush.msra.mxu0 0.0
      %4191 = vmatpush.msra.mxu0 0.0
      %4192 = vmatpush.msra.mxu0 0.0
      %4193 = vmatpush.msra.mxu0 0.0
      %4194 = vmatpush.msra.mxu0 0.0
      %4195 = vmatpush.msra.mxu0 0.0
      %4196 = vmatpush.msra.mxu0 0.0
      %4197 = vmatpush.msra.mxu0 0.0
      %4198 = vmatpush.msra.mxu0 %v270
      %4199 = vmatmul.f32.gmra.mxu0 %v3428
      %v4200 = vpop.f32.mrf.mxu0
      %v4201 = vadd.f32 0.0, %v4200
      %4202 = vmatmul.f32.gmra.mxu0 %v3430
      %v4203 = vpop.f32.mrf.mxu0
      %v4204 = vadd.f32 0.0, %v4203
      %4205 = vmatmul.f32.gmra.mxu0 %v3432
      %v4206 = vpop.f32.mrf.mxu0
      %v4207 = vadd.f32 0.0, %v4206
      %4208 = vmatmul.f32.gmra.mxu0 %v3434
      %v4209 = vpop.f32.mrf.mxu0
      %v4210 = vadd.f32 0.0, %v4209
      %4211 = vmatmul.f32.gmra.mxu0 %v3436
      %v4212 = vpop.f32.mrf.mxu0
      %v4213 = vadd.f32 0.0, %v4212
      %4214 = vmatmul.f32.gmra.mxu0 %v3438
      %v4215 = vpop.f32.mrf.mxu0
      %v4216 = vadd.f32 0.0, %v4215
      %4217 = vmatmul.f32.gmra.mxu0 %v3440
      %v4218 = vpop.f32.mrf.mxu0
      %v4219 = vadd.f32 0.0, %v4218
      %4220 = vmatmul.f32.gmra.mxu0 %v3442
      %v4221 = vpop.f32.mrf.mxu0
      %v4222 = vadd.f32 0.0, %v4221
      %4223 = vmatmul.f32.gmra.mxu0 %v3444
      %v4224 = vpop.f32.mrf.mxu0
      %v4225 = vadd.f32 0.0, %v4224
      %4226 = vmatmul.f32.gmra.mxu0 %v3446
      %v4227 = vpop.f32.mrf.mxu0
      %v4228 = vadd.f32 0.0, %v4227
      %4229 = vmatmul.f32.gmra.mxu0 %v3448
      %v4230 = vpop.f32.mrf.mxu0
      %v4231 = vadd.f32 0.0, %v4230
      %4232 = vmatmul.f32.gmra.mxu0 %v3450
      %v4233 = vpop.f32.mrf.mxu0
      %v4234 = vadd.f32 0.0, %v4233
      %4235 = vmatmul.f32.gmra.mxu0 %v3452
      %v4236 = vpop.f32.mrf.mxu0
      %v4237 = vadd.f32 0.0, %v4236
      %4238 = vmatmul.f32.gmra.mxu0 %v3454
      %v4239 = vpop.f32.mrf.mxu0
      %v4240 = vadd.f32 0.0, %v4239
      %4241 = vmatmul.f32.gmra.mxu0 %v3456
      %v4242 = vpop.f32.mrf.mxu0
      %v4243 = vadd.f32 0.0, %v4242
      %4244 = vmatmul.f32.gmra.mxu0 %v3458
      %v4245 = vpop.f32.mrf.mxu0
      %v4246 = vadd.f32 0.0, %v4245
      %4247 = vmatmul.f32.gmra.mxu0 %v3460
      %v4248 = vpop.f32.mrf.mxu0
      %v4249 = vadd.f32 0.0, %v4248
      %4250 = vmatmul.f32.gmra.mxu0 %v3462
      %v4251 = vpop.f32.mrf.mxu0
      %v4252 = vadd.f32 0.0, %v4251
      %4253 = vmatmul.f32.gmra.mxu0 %v3464
      %v4254 = vpop.f32.mrf.mxu0
      %v4255 = vadd.f32 0.0, %v4254
      %4256 = vmatmul.f32.gmra.mxu0 %v3466
      %v4257 = vpop.f32.mrf.mxu0
      %v4258 = vadd.f32 0.0, %v4257
      %4259 = vmatmul.f32.gmra.mxu0 %v3468
      %v4260 = vpop.f32.mrf.mxu0
      %v4261 = vadd.f32 0.0, %v4260
      %4262 = vmatmul.f32.gmra.mxu0 %v3470
      %v4263 = vpop.f32.mrf.mxu0
      %v4264 = vadd.f32 0.0, %v4263
      %4265 = vmatmul.f32.gmra.mxu0 %v3472
      %v4266 = vpop.f32.mrf.mxu0
      %v4267 = vadd.f32 0.0, %v4266
      %4268 = vmatmul.f32.gmra.mxu0 %v3474
      %v4269 = vpop.f32.mrf.mxu0
      %v4270 = vadd.f32 0.0, %v4269
      %4271 = vmatmul.f32.gmra.mxu0 %v3476
      %v4272 = vpop.f32.mrf.mxu0
      %v4273 = vadd.f32 0.0, %v4272
      %4274 = vmatmul.f32.gmra.mxu0 %v3478
      %v4275 = vpop.f32.mrf.mxu0
      %v4276 = vadd.f32 0.0, %v4275
      %4277 = vmatmul.f32.gmra.mxu0 %v3480
      %v4278 = vpop.f32.mrf.mxu0
      %v4279 = vadd.f32 0.0, %v4278
      %4280 = vmatmul.f32.gmra.mxu0 %v3482
      %v4281 = vpop.f32.mrf.mxu0
      %v4282 = vadd.f32 0.0, %v4281
      %4283 = vmatmul.f32.gmra.mxu0 %v3484
      %v4284 = vpop.f32.mrf.mxu0
      %v4285 = vadd.f32 0.0, %v4284
      %4286 = vmatmul.f32.gmra.mxu0 %v3486
      %v4287 = vpop.f32.mrf.mxu0
      %v4288 = vadd.f32 0.0, %v4287
      %4289 = vmatmul.f32.gmra.mxu0 %v3488
      %v4290 = vpop.f32.mrf.mxu0
      %v4291 = vadd.f32 0.0, %v4290
      %4292 = vmatmul.f32.gmra.mxu0 %v3490
      %v4293 = vpop.f32.mrf.mxu0
      %v4294 = vadd.f32 0.0, %v4293
      %4295 = vmatmul.f32.gmra.mxu0 %v3492
      %v4296 = vpop.f32.mrf.mxu0
      %v4297 = vadd.f32 0.0, %v4296
      %4298 = vmatmul.f32.gmra.mxu0 %v3494
      %v4299 = vpop.f32.mrf.mxu0
      %v4300 = vadd.f32 0.0, %v4299
      %4301 = vmatmul.f32.gmra.mxu0 %v3496
      %v4302 = vpop.f32.mrf.mxu0
      %v4303 = vadd.f32 0.0, %v4302
      %4304 = vmatmul.f32.gmra.mxu0 %v3498
      %v4305 = vpop.f32.mrf.mxu0
      %v4306 = vadd.f32 0.0, %v4305
      %4307 = vmatmul.f32.gmra.mxu0 %v3500
      %v4308 = vpop.f32.mrf.mxu0
      %v4309 = vadd.f32 0.0, %v4308
      %4310 = vmatmul.f32.gmra.mxu0 %v3502
      %v4311 = vpop.f32.mrf.mxu0
      %v4312 = vadd.f32 0.0, %v4311
      %4313 = vmatmul.f32.gmra.mxu0 %v3504
      %v4314 = vpop.f32.mrf.mxu0
      %v4315 = vadd.f32 0.0, %v4314
      %4316 = vmatmul.f32.gmra.mxu0 %v3506
      %v4317 = vpop.f32.mrf.mxu0
      %v4318 = vadd.f32 0.0, %v4317
      %4319 = vmatmul.f32.gmra.mxu0 %v3508
      %v4320 = vpop.f32.mrf.mxu0
      %v4321 = vadd.f32 0.0, %v4320
      %4322 = vmatmul.f32.gmra.mxu0 %v3510
      %v4323 = vpop.f32.mrf.mxu0
      %v4324 = vadd.f32 0.0, %v4323
      %4325 = vmatmul.f32.gmra.mxu0 %v3512
      %v4326 = vpop.f32.mrf.mxu0
      %v4327 = vadd.f32 0.0, %v4326
      %4328 = vmatmul.f32.gmra.mxu0 %v3514
      %v4329 = vpop.f32.mrf.mxu0
      %v4330 = vadd.f32 0.0, %v4329
      %4331 = vmatmul.f32.gmra.mxu0 %v3516
      %v4332 = vpop.f32.mrf.mxu0
      %v4333 = vadd.f32 0.0, %v4332
      %4334 = vmatmul.f32.gmra.mxu0 %v3518
      %v4335 = vpop.f32.mrf.mxu0
      %v4336 = vadd.f32 0.0, %v4335
      %4337 = vmatmul.f32.gmra.mxu0 %v3520
      %v4338 = vpop.f32.mrf.mxu0
      %v4339 = vadd.f32 0.0, %v4338
      %4340 = vmatmul.f32.gmra.mxu0 %v3522
      %v4341 = vpop.f32.mrf.mxu0
      %v4342 = vadd.f32 0.0, %v4341
      %4343 = vmatmul.f32.gmra.mxu0 %v3524
      %v4344 = vpop.f32.mrf.mxu0
      %v4345 = vadd.f32 0.0, %v4344
      %4346 = vmatmul.f32.gmra.mxu0 %v3526
      %v4347 = vpop.f32.mrf.mxu0
      %v4348 = vadd.f32 0.0, %v4347
      %4349 = vmatmul.f32.gmra.mxu0 %v3528
      %v4350 = vpop.f32.mrf.mxu0
      %v4351 = vadd.f32 0.0, %v4350
      %4352 = vmatmul.f32.gmra.mxu0 %v3530
      %v4353 = vpop.f32.mrf.mxu0
      %v4354 = vadd.f32 0.0, %v4353
      %4355 = vmatmul.f32.gmra.mxu0 %v3532
      %v4356 = vpop.f32.mrf.mxu0
      %v4357 = vadd.f32 0.0, %v4356
      %4358 = vmatmul.f32.gmra.mxu0 %v3534
      %v4359 = vpop.f32.mrf.mxu0
      %v4360 = vadd.f32 0.0, %v4359
      %4361 = vmatmul.f32.gmra.mxu0 %v3536
      %v4362 = vpop.f32.mrf.mxu0
      %v4363 = vadd.f32 0.0, %v4362
      %4364 = vmatmul.f32.gmra.mxu0 %v3538
      %v4365 = vpop.f32.mrf.mxu0
      %v4366 = vadd.f32 0.0, %v4365
      %4367 = vmatmul.f32.gmra.mxu0 %v3540
      %v4368 = vpop.f32.mrf.mxu0
      %v4369 = vadd.f32 0.0, %v4368
      %4370 = vmatmul.f32.gmra.mxu0 %v3542
      %v4371 = vpop.f32.mrf.mxu0
      %v4372 = vadd.f32 0.0, %v4371
      %4373 = vmatmul.f32.gmra.mxu0 %v3544
      %v4374 = vpop.f32.mrf.mxu0
      %v4375 = vadd.f32 0.0, %v4374
      %4376 = vmatmul.f32.gmra.mxu0 %v3546
      %v4377 = vpop.f32.mrf.mxu0
      %v4378 = vadd.f32 0.0, %v4377
      %4379 = vmatmul.f32.gmra.mxu0 %v3548
      %v4380 = vpop.f32.mrf.mxu0
      %v4381 = vadd.f32 0.0, %v4380
      %4382 = vmatmul.f32.gmra.mxu0 %v3550
      %v4383 = vpop.f32.mrf.mxu0
      %v4384 = vadd.f32 0.0, %v4383
      %4385 = vmatmul.f32.gmra.mxu0 %v3552
      %v4386 = vpop.f32.mrf.mxu0
      %v4387 = vadd.f32 0.0, %v4386
      %4388 = vmatmul.f32.gmra.mxu0 %v3554
      %v4389 = vpop.f32.mrf.mxu0
      %v4390 = vadd.f32 0.0, %v4389
      %4391 = vdwg.mxu0
      %v4392 = vmin.f32 %v3574, %v3577
      %v4393 = vmin.f32 %v4392, %v3580
      %v4394 = vmin.f32 %v4393, %v3583
      %v4395 = vmin.f32 %v4394, %v3586
      %v4396 = vmin.f32 %v4395, %v3589
      %v4397 = vmin.f32 %v4396, %v3592
      %v4398 = vmin.f32 %v4397, %v3595
      %v4399 = vmin.f32 %v4398, %v3598
      %v4400 = vmin.f32 %v4399, %v3601
      %v4401 = vmin.f32 %v4400, %v3604
      %v4402 = vmin.f32 %v4401, %v3607
      %v4403 = vmin.f32 %v4402, %v3610
      %v4404 = vmin.f32 %v4403, %v3613
      %v4405 = vmin.f32 %v4404, %v3616
      %v4406 = vmin.f32 %v4405, %v3619
      %v4407 = vmin.f32 %v4406, %v3622
      %v4408 = vmin.f32 %v4407, %v3625
      %v4409 = vmin.f32 %v4408, %v3628
      %v4410 = vmin.f32 %v4409, %v3631
      %v4411 = vmin.f32 %v4410, %v3634
      %v4412 = vmin.f32 %v4411, %v3637
      %v4413 = vmin.f32 %v4412, %v3640
      %v4414 = vmin.f32 %v4413, %v3643
      %v4415 = vmin.f32 %v4414, %v3646
      %v4416 = vmin.f32 %v4415, %v3649
      %v4417 = vmin.f32 %v4416, %v3652
      %v4418 = vmin.f32 %v4417, %v3655
      %v4419 = vmin.f32 %v4418, %v3658
      %v4420 = vmin.f32 %v4419, %v3661
      %v4421 = vmin.f32 %v4420, %v3664
      %v4422 = vmin.f32 %v4421, %v3667
      %v4423 = vmin.f32 %v4422, %v3670
      %v4424 = vmin.f32 %v4423, %v3673
      %v4425 = vmin.f32 %v4424, %v3676
      %v4426 = vmin.f32 %v4425, %v3679
      %v4427 = vmin.f32 %v4426, %v3682
      %v4428 = vmin.f32 %v4427, %v3685
      %v4429 = vmin.f32 %v4428, %v3688
      %v4430 = vmin.f32 %v4429, %v3691
      %v4431 = vmin.f32 %v4430, %v3694
      %v4432 = vmin.f32 %v4431, %v3697
      %v4433 = vmin.f32 %v4432, %v3700
      %v4434 = vmin.f32 %v4433, %v3703
      %v4435 = vmin.f32 %v4434, %v3706
      %v4436 = vmin.f32 %v4435, %v3709
      %v4437 = vmin.f32 %v4436, %v3712
      %v4438 = vmin.f32 %v4437, %v3715
      %v4439 = vmin.f32 %v4438, %v3718
      %v4440 = vmin.f32 %v4439, %v3721
      %v4441 = vmin.f32 %v4440, %v3724
      %v4442 = vmin.f32 %v4441, %v3727
      %v4443 = vmin.f32 %v4442, %v3730
      %v4444 = vmin.f32 %v4443, %v3733
      %v4445 = vmin.f32 %v4444, %v3736
      %v4446 = vmin.f32 %v4445, %v3739
      %v4447 = vmin.f32 %v4446, %v3742
      %v4448 = vmin.f32 %v4447, %v3745
      %v4449 = vmin.f32 %v4448, %v3748
      %v4450 = vmin.f32 %v4449, %v3751
      %v4451 = vmin.f32 %v4450, %v3754
      %v4452 = vmin.f32 %v4451, %v3757
      %v4453 = vmin.f32 %v4452, %v3760
      %v4454 = vmin.f32 %v4453, %v3763
      %v4455 = vrot.slane %v4454, 4
      %v4456 = vmin.f32 %v4454, %v4455
      %v4457 = vrot.slane %v4456, 2
      %v4458 = vmin.f32 %v4456, %v4457
      %v4459 = vrot.slane %v4458, 1
      %v4460 = vmin.f32 %v4458, %v4459
      %v4461 = vmin.f32 %v3783, %v3786
      %v4462 = vmin.f32 %v4461, %v3789
      %v4463 = vmin.f32 %v4462, %v3792
      %v4464 = vmin.f32 %v4463, %v3795
      %v4465 = vmin.f32 %v4464, %v3798
      %v4466 = vmin.f32 %v4465, %v3801
      %v4467 = vmin.f32 %v4466, %v3804
      %v4468 = vmin.f32 %v4467, %v3807
      %v4469 = vmin.f32 %v4468, %v3810
      %v4470 = vmin.f32 %v4469, %v3813
      %v4471 = vmin.f32 %v4470, %v3816
      %v4472 = vmin.f32 %v4471, %v3819
      %v4473 = vmin.f32 %v4472, %v3822
      %v4474 = vmin.f32 %v4473, %v3825
      %v4475 = vmin.f32 %v4474, %v3828
      %v4476 = vmin.f32 %v4475, %v3831
      %v4477 = vmin.f32 %v4476, %v3834
      %v4478 = vmin.f32 %v4477, %v3837
      %v4479 = vmin.f32 %v4478, %v3840
      %v4480 = vmin.f32 %v4479, %v3843
      %v4481 = vmin.f32 %v4480, %v3846
      %v4482 = vmin.f32 %v4481, %v3849
      %v4483 = vmin.f32 %v4482, %v3852
      %v4484 = vmin.f32 %v4483, %v3855
      %v4485 = vmin.f32 %v4484, %v3858
      %v4486 = vmin.f32 %v4485, %v3861
      %v4487 = vmin.f32 %v4486, %v3864
      %v4488 = vmin.f32 %v4487, %v3867
      %v4489 = vmin.f32 %v4488, %v3870
      %v4490 = vmin.f32 %v4489, %v3873
      %v4491 = vmin.f32 %v4490, %v3876
      %v4492 = vmin.f32 %v4491, %v3879
      %v4493 = vmin.f32 %v4492, %v3882
      %v4494 = vmin.f32 %v4493, %v3885
      %v4495 = vmin.f32 %v4494, %v3888
      %v4496 = vmin.f32 %v4495, %v3891
      %v4497 = vmin.f32 %v4496, %v3894
      %v4498 = vmin.f32 %v4497, %v3897
      %v4499 = vmin.f32 %v4498, %v3900
      %v4500 = vmin.f32 %v4499, %v3903
      %v4501 = vmin.f32 %v4500, %v3906
      %v4502 = vmin.f32 %v4501, %v3909
      %v4503 = vmin.f32 %v4502, %v3912
      %v4504 = vmin.f32 %v4503, %v3915
      %v4505 = vmin.f32 %v4504, %v3918
      %v4506 = vmin.f32 %v4505, %v3921
      %v4507 = vmin.f32 %v4506, %v3924
      %v4508 = vmin.f32 %v4507, %v3927
      %v4509 = vmin.f32 %v4508, %v3930
      %v4510 = vmin.f32 %v4509, %v3933
      %v4511 = vmin.f32 %v4510, %v3936
      %v4512 = vmin.f32 %v4511, %v3939
      %v4513 = vmin.f32 %v4512, %v3942
      %v4514 = vmin.f32 %v4513, %v3945
      %v4515 = vmin.f32 %v4514, %v3948
      %v4516 = vmin.f32 %v4515, %v3951
      %v4517 = vmin.f32 %v4516, %v3954
      %v4518 = vmin.f32 %v4517, %v3957
      %v4519 = vmin.f32 %v4518, %v3960
      %v4520 = vmin.f32 %v4519, %v3963
      %v4521 = vmin.f32 %v4520, %v3966
      %v4522 = vmin.f32 %v4521, %v3969
      %v4523 = vmin.f32 %v4522, %v3972
      %v4524 = vrot.slane %v4523, 4
      %v4525 = vmin.f32 %v4523, %v4524
      %v4526 = vrot.slane %v4525, 2
      %v4527 = vmin.f32 %v4525, %v4526
      %v4528 = vrot.slane %v4527, 1
      %v4529 = vmin.f32 %v4527, %v4528
      %v4530 = vmin.f32 %v3992, %v3995
      %v4531 = vmin.f32 %v4530, %v3998
      %v4532 = vmin.f32 %v4531, %v4001
      %v4533 = vmin.f32 %v4532, %v4004
      %v4534 = vmin.f32 %v4533, %v4007
      %v4535 = vmin.f32 %v4534, %v4010
      %v4536 = vmin.f32 %v4535, %v4013
      %v4537 = vmin.f32 %v4536, %v4016
      %v4538 = vmin.f32 %v4537, %v4019
      %v4539 = vmin.f32 %v4538, %v4022
      %v4540 = vmin.f32 %v4539, %v4025
      %v4541 = vmin.f32 %v4540, %v4028
      %v4542 = vmin.f32 %v4541, %v4031
      %v4543 = vmin.f32 %v4542, %v4034
      %v4544 = vmin.f32 %v4543, %v4037
      %v4545 = vmin.f32 %v4544, %v4040
      %v4546 = vmin.f32 %v4545, %v4043
      %v4547 = vmin.f32 %v4546, %v4046
      %v4548 = vmin.f32 %v4547, %v4049
      %v4549 = vmin.f32 %v4548, %v4052
      %v4550 = vmin.f32 %v4549, %v4055
      %v4551 = vmin.f32 %v4550, %v4058
      %v4552 = vmin.f32 %v4551, %v4061
      %v4553 = vmin.f32 %v4552, %v4064
      %v4554 = vmin.f32 %v4553, %v4067
      %v4555 = vmin.f32 %v4554, %v4070
      %v4556 = vmin.f32 %v4555, %v4073
      %v4557 = vmin.f32 %v4556, %v4076
      %v4558 = vmin.f32 %v4557, %v4079
      %v4559 = vmin.f32 %v4558, %v4082
      %v4560 = vmin.f32 %v4559, %v4085
      %v4561 = vmin.f32 %v4560, %v4088
      %v4562 = vmin.f32 %v4561, %v4091
      %v4563 = vmin.f32 %v4562, %v4094
      %v4564 = vmin.f32 %v4563, %v4097
      %v4565 = vmin.f32 %v4564, %v4100
      %v4566 = vmin.f32 %v4565, %v4103
      %v4567 = vmin.f32 %v4566, %v4106
      %v4568 = vmin.f32 %v4567, %v4109
      %v4569 = vmin.f32 %v4568, %v4112
      %v4570 = vmin.f32 %v4569, %v4115
      %v4571 = vmin.f32 %v4570, %v4118
      %v4572 = vmin.f32 %v4571, %v4121
      %v4573 = vmin.f32 %v4572, %v4124
      %v4574 = vmin.f32 %v4573, %v4127
      %v4575 = vmin.f32 %v4574, %v4130
      %v4576 = vmin.f32 %v4575, %v4133
      %v4577 = vmin.f32 %v4576, %v4136
      %v4578 = vmin.f32 %v4577, %v4139
      %v4579 = vmin.f32 %v4578, %v4142
      %v4580 = vmin.f32 %v4579, %v4145
      %v4581 = vmin.f32 %v4580, %v4148
      %v4582 = vmin.f32 %v4581, %v4151
      %v4583 = vmin.f32 %v4582, %v4154
      %v4584 = vmin.f32 %v4583, %v4157
      %v4585 = vmin.f32 %v4584, %v4160
      %v4586 = vmin.f32 %v4585, %v4163
      %v4587 = vmin.f32 %v4586, %v4166
      %v4588 = vmin.f32 %v4587, %v4169
      %v4589 = vmin.f32 %v4588, %v4172
      %v4590 = vmin.f32 %v4589, %v4175
      %v4591 = vmin.f32 %v4590, %v4178
      %v4592 = vmin.f32 %v4591, %v4181
      %v4593 = vrot.slane %v4592, 4
      %v4594 = vmin.f32 %v4592, %v4593
      %v4595 = vrot.slane %v4594, 2
      %v4596 = vmin.f32 %v4594, %v4595
      %v4597 = vrot.slane %v4596, 1
      %v4598 = vmin.f32 %v4596, %v4597
      %v4599 = vmin.f32 %v4201, %v4204
      %v4600 = vmin.f32 %v4599, %v4207
      %v4601 = vmin.f32 %v4600, %v4210
      %v4602 = vmin.f32 %v4601, %v4213
      %v4603 = vmin.f32 %v4602, %v4216
      %v4604 = vmin.f32 %v4603, %v4219
      %v4605 = vmin.f32 %v4604, %v4222
      %v4606 = vmin.f32 %v4605, %v4225
      %v4607 = vmin.f32 %v4606, %v4228
      %v4608 = vmin.f32 %v4607, %v4231
      %v4609 = vmin.f32 %v4608, %v4234
      %v4610 = vmin.f32 %v4609, %v4237
      %v4611 = vmin.f32 %v4610, %v4240
      %v4612 = vmin.f32 %v4611, %v4243
      %v4613 = vmin.f32 %v4612, %v4246
      %v4614 = vmin.f32 %v4613, %v4249
      %v4615 = vmin.f32 %v4614, %v4252
      %v4616 = vmin.f32 %v4615, %v4255
      %v4617 = vmin.f32 %v4616, %v4258
      %v4618 = vmin.f32 %v4617, %v4261
      %v4619 = vmin.f32 %v4618, %v4264
      %v4620 = vmin.f32 %v4619, %v4267
      %v4621 = vmin.f32 %v4620, %v4270
      %v4622 = vmin.f32 %v4621, %v4273
      %v4623 = vmin.f32 %v4622, %v4276
      %v4624 = vmin.f32 %v4623, %v4279
      %v4625 = vmin.f32 %v4624, %v4282
      %v4626 = vmin.f32 %v4625, %v4285
      %v4627 = vmin.f32 %v4626, %v4288
      %v4628 = vmin.f32 %v4627, %v4291
      %v4629 = vmin.f32 %v4628, %v4294
      %v4630 = vmin.f32 %v4629, %v4297
      %v4631 = vmin.f32 %v4630, %v4300
      %v4632 = vmin.f32 %v4631, %v4303
      %v4633 = vmin.f32 %v4632, %v4306
      %v4634 = vmin.f32 %v4633, %v4309
      %v4635 = vmin.f32 %v4634, %v4312
      %v4636 = vmin.f32 %v4635, %v4315
      %v4637 = vmin.f32 %v4636, %v4318
      %v4638 = vmin.f32 %v4637, %v4321
      %v4639 = vmin.f32 %v4638, %v4324
      %v4640 = vmin.f32 %v4639, %v4327
      %v4641 = vmin.f32 %v4640, %v4330
      %v4642 = vmin.f32 %v4641, %v4333
      %v4643 = vmin.f32 %v4642, %v4336
      %v4644 = vmin.f32 %v4643, %v4339
      %v4645 = vmin.f32 %v4644, %v4342
      %v4646 = vmin.f32 %v4645, %v4345
      %v4647 = vmin.f32 %v4646, %v4348
      %v4648 = vmin.f32 %v4647, %v4351
      %v4649 = vmin.f32 %v4648, %v4354
      %v4650 = vmin.f32 %v4649, %v4357
      %v4651 = vmin.f32 %v4650, %v4360
      %v4652 = vmin.f32 %v4651, %v4363
      %v4653 = vmin.f32 %v4652, %v4366
      %v4654 = vmin.f32 %v4653, %v4369
      %v4655 = vmin.f32 %v4654, %v4372
      %v4656 = vmin.f32 %v4655, %v4375
      %v4657 = vmin.f32 %v4656, %v4378
      %v4658 = vmin.f32 %v4657, %v4381
      %v4659 = vmin.f32 %v4658, %v4384
      %v4660 = vmin.f32 %v4659, %v4387
      %v4661 = vmin.f32 %v4660, %v4390
      %v4662 = vrot.slane %v4661, 4
      %v4663 = vmin.f32 %v4661, %v4662
      %v4664 = vrot.slane %v4663, 2
      %v4665 = vmin.f32 %v4663, %v4664
      %v4666 = vrot.slane %v4665, 1
      %v4667 = vmin.f32 %v4665, %v4666
      %s4668 = scalar_lea.vmem [#allocation2], 2
      %v4669 = vld [vmem:[%s4668] ss:$4 sm:$0xf]
      %v4674 = vrot.slane %v4529, 7
      %v4675 = vrot.slane %v4598, 6
      %v4676 = vrot.slane %v4667, 5
      %v4677 = vsel %vm1648, %v4460, %v4674
      %v4678 = vsel %vm1650, %v4675, %v4676
      %v4679 = vsel %vm1652, %v4677, %v4678
      %v4681 = vmin.f32 %v4669, %v4679
      %4682 = vst.msk [vmem:[%s4668] ss:$4 sm:$0xf] %vm1659, %v4681
      // Predicated region
      $region41: #{boundary_loss.1} parent=35 // pred_check
        %p4683 = pneg %p261
      $region42: #{boundary_loss.1} parent=35 // pred_check_branch
        %4685 = sbr.rel (%p4683) target = $region44
      $region43: #{boundary_loss.1} parent=35 // pred_region
        %v4686 = vld [vmem:[%s242] sm:$0x77]
        %v4687 = vld [vmem:[%s242 + $0x8] sm:$0x77]
        %v4690 = vrot.slane %v4686, 7
        %v4691 = vrot.slane %v4687, 7
        %vm4694 = vcmp.gt.f32.partialorder %v4686, %v4690
        %vm4695 = vcmp.gt.f32.partialorder %v4687, %v4691
        %v4696 = vsel %vm4694, 1, 0
        %v4697 = vsel %vm4695, 1, 0
        %v4698 = vsel %vm4694, %v4686, %v4690
        %v4699 = vsel %vm4695, %v4687, %v4691
        %v4702 = vrot.slane %v4698, 7
        %v4703 = vrot.slane %v4699, 7
        %vm4706 = vcmp.gt.f32.partialorder %v4686, %v4702
        %vm4707 = vcmp.gt.f32.partialorder %v4687, %v4703
        %v4708 = vrot.slane %v4696, 7
        %v4709 = vrot.slane %v4697, 7
        %v4710 = vsel %vm4706, 2, %v4708
        %v4711 = vsel %vm4707, 2, %v4709
        %v4712 = vld [vmem:[%s246] sm:$0xf]
        %vm4713 = vcmp.ge.s32.totalorder %v4712, 0
        %v4714 = vsel %vm4713, 1, 0
        %v4715 = vcvt.s32.f32 %v4714
        %v4716 = vld [vmem:[#allocation2] ss:$4 sm:$0xf]
        %v4717 = vld [vmem:[%s3157] ss:$4 sm:$0xf]
        %v4718 = vld [vmem:[%s4668] ss:$4 sm:$0xf]
        %v4719 = vmin.f32 %v4716, %v4718
        %v4720 = vmin.f32 %v4716, %v4717
        %vm4721 = vcmp.eq.s32.totalorder %v4712, 1
        %v4722 = vsel %vm4721, 1, 0
        %v4723 = vcvt.s32.f32 %v4722
        %v4725 = vperm.slane %v4723, 0
        %v4726 = vperm.slane %v4723, 1
        %v4727 = vperm.slane %v4723, 2
        %v4728 = vperm.slane %v4723, 3
        %v4733 = vsel %vm1648, %v4725, 0.0
        %v4734 = vsel %vm1648, %v4726, 0.0
        %v4735 = vadd.f32 %v4733, %v4734
        %v4736 = vsel %vm1648, %v4727, 0.0
        %v4737 = vadd.f32 %v4735, %v4736
        %v4738 = vsel %vm1648, %v4728, 0.0
        %v4739 = vadd.f32 %v4737, %v4738
        %4740 = vadd.xlane.f32.xlu0 %v4739
        %v4741 = vpop.xlane.xlu0 %4740
        %v4742 = vrot.slane %v4741, 4
        %v4743 = vadd.f32 %v4741, %v4742
        %v4744 = vrot.slane %v4743, 2
        %v4745 = vadd.f32 %v4743, %v4744
        %v4746 = vrot.slane %v4745, 1
        %v4747 = vadd.f32 %v4745, %v4746
        %s4748 = vtos %v4747
        %v4749 = vadd.f32 %v4717, 0.5
        %v4750 = vrsqrt.pop %v4749
        %v4751 = vmul.f32 %v4750, %v4749
        %v4752 = vmul.f32 %v4751, %v4750
        %v4753 = vmul.f32 0.5, %v4752
        %v4754 = vsub.f32 1.5, %v4753
        %v4755 = vmul.f32 %v4750, %v4754
        %v4756 = vmul.f32 %v4749, %v4755
        %vm4757 = vcmp.eq.f32.partialorder %v4749, inf
        %v4758 = vsel %vm4757, %v4749, %v4756
        %vm4759 = vcmp.eq.f32.partialorder %v4749, 0.0
        %v4760 = vand.u32 %v4749, 2147483648
        %v4761 = vsel %vm4759, %v4760, %v4758
        %v4762 = vfloor.f32 %v4761
        %v4763 = vadd.f32 %v4719, 0.5
        %v4764 = vrsqrt.pop %v4763
        %v4765 = vmul.f32 %v4764, %v4763
        %v4766 = vmul.f32 %v4765, %v4764
        %v4767 = vmul.f32 0.5, %v4766
        %v4768 = vsub.f32 1.5, %v4767
        %v4769 = vmul.f32 %v4764, %v4768
        %v4770 = vmul.f32 %v4763, %v4769
        %vm4771 = vcmp.eq.f32.partialorder %v4763, inf
        %v4772 = vsel %vm4771, %v4763, %v4770
        %vm4773 = vcmp.eq.f32.partialorder %v4763, 0.0
        %v4774 = vand.u32 %v4763, 2147483648
        %v4775 = vsel %vm4773, %v4774, %v4772
        %v4776 = vfloor.f32 %v4775
        %v4777 = vsub.f32 1.0, %v4776
        %v4778 = vsel %vm4721, %v4777, %v4762
        %p4779 = scmp.gt.f32.partialorder %s4748, 0.5
        %s4780 = scalar_select %p4779, 1, 0
        %v4781 = vstv %s4780
        %vm4782 = vcmp.eq.s32.totalorder %v4781, 1
        %v4783 = vsel %vm4782, %v4778, 0.0
        %vm4784 = vcmp.eq.s32.totalorder %v4710, 1
        %vm4785 = vcmp.eq.s32.totalorder %v4711, 1
        %v4786 = vsel %vm4784, 1, 0
        %v4787 = vsel %vm4785, 1, 0
        %v4788 = vcvt.s32.f32 %v4786
        %v4789 = vcvt.s32.f32 %v4787
        %v4792 = vunpack.c.l.s4 286326784
        %v4793 = vunpack.c.0.s8 %v4792
        %v4794 = vperm.slane %v4783, %v4793
        %v4796 = vunpack.c.l.s4 858989090
        %v4797 = vunpack.c.0.s8 %v4796
        %v4798 = vperm.slane %v4783, %v4797
        %v4801 = vmul.f32 %v4788, %v4794
        %v4802 = vmul.f32 %v4789, %v4798
        %v4803 = vadd.f32 %v4801, 0.0
        %v4804 = vadd.f32 %v4802, 0.0
        %vm4805 = vcmp.eq.s32.totalorder %v4712, 2
        %v4806 = vsel %vm4805, 1, 0
        %v4807 = vcvt.s32.f32 %v4806
        %v4809 = vperm.slane %v4807, 0
        %v4810 = vperm.slane %v4807, 1
        %v4811 = vperm.slane %v4807, 2
        %v4812 = vperm.slane %v4807, 3
        %v4817 = vsel %vm1648, %v4809, 0.0
        %v4818 = vsel %vm1648, %v4810, 0.0
        %v4819 = vadd.f32 %v4817, %v4818
        %v4820 = vsel %vm1648, %v4811, 0.0
        %v4821 = vadd.f32 %v4819, %v4820
        %v4822 = vsel %vm1648, %v4812, 0.0
        %v4823 = vadd.f32 %v4821, %v4822
        %4824 = vadd.xlane.f32.xlu0 %v4823
        %v4825 = vpop.xlane.xlu0 %4824
        %v4826 = vrot.slane %v4825, 4
        %v4827 = vadd.f32 %v4825, %v4826
        %v4828 = vrot.slane %v4827, 2
        %v4829 = vadd.f32 %v4827, %v4828
        %v4830 = vrot.slane %v4829, 1
        %v4831 = vadd.f32 %v4829, %v4830
        %s4832 = vtos %v4831
        %v4833 = vadd.f32 %v4718, 0.5
        %v4834 = vrsqrt.pop %v4833
        %v4835 = vmul.f32 %v4834, %v4833
        %v4836 = vmul.f32 %v4835, %v4834
        %v4837 = vmul.f32 0.5, %v4836
        %v4838 = vsub.f32 1.5, %v4837
        %v4839 = vmul.f32 %v4834, %v4838
        %v4840 = vmul.f32 %v4833, %v4839
        %vm4841 = vcmp.eq.f32.partialorder %v4833, inf
        %v4842 = vsel %vm4841, %v4833, %v4840
        %vm4843 = vcmp.eq.f32.partialorder %v4833, 0.0
        %v4844 = vand.u32 %v4833, 2147483648
        %v4845 = vsel %vm4843, %v4844, %v4842
        %v4846 = vfloor.f32 %v4845
        %v4847 = vadd.f32 %v4720, 0.5
        %v4848 = vrsqrt.pop %v4847
        %v4849 = vmul.f32 %v4848, %v4847
        %v4850 = vmul.f32 %v4849, %v4848
        %v4851 = vmul.f32 0.5, %v4850
        %v4852 = vsub.f32 1.5, %v4851
        %v4853 = vmul.f32 %v4848, %v4852
        %v4854 = vmul.f32 %v4847, %v4853
        %vm4855 = vcmp.eq.f32.partialorder %v4847, inf
        %v4856 = vsel %vm4855, %v4847, %v4854
        %vm4857 = vcmp.eq.f32.partialorder %v4847, 0.0
        %v4858 = vand.u32 %v4847, 2147483648
        %v4859 = vsel %vm4857, %v4858, %v4856
        %v4860 = vfloor.f32 %v4859
        %v4861 = vsub.f32 1.0, %v4860
        %v4862 = vsel %vm4805, %v4861, %v4846
        %p4863 = scmp.gt.f32.partialorder %s4832, 0.5
        %s4864 = scalar_select %p4863, 1, 0
        %v4865 = vstv %s4864
        %vm4866 = vcmp.eq.s32.totalorder %v4865, 1
        %v4867 = vsel %vm4866, %v4862, 0.0
        %vm4868 = vcmp.eq.s32.totalorder %v4710, 2
        %vm4869 = vcmp.eq.s32.totalorder %v4711, 2
        %v4870 = vsel %vm4868, 1, 0
        %v4871 = vsel %vm4869, 1, 0
        %v4872 = vcvt.s32.f32 %v4870
        %v4873 = vcvt.s32.f32 %v4871
        %v4876 = vunpack.c.l.s4 286326784
        %v4877 = vunpack.c.0.s8 %v4876
        %v4878 = vperm.slane %v4867, %v4877
        %v4880 = vunpack.c.l.s4 858989090
        %v4881 = vunpack.c.0.s8 %v4880
        %v4882 = vperm.slane %v4867, %v4881
        %v4885 = vmul.f32 %v4872, %v4878
        %v4886 = vmul.f32 %v4873, %v4882
        %v4887 = vadd.f32 %v4803, %v4885
        %v4888 = vadd.f32 %v4804, %v4886
        %v4891 = vunpack.c.l.s4 286326784
        %v4892 = vunpack.c.0.s8 %v4891
        %v4893 = vperm.slane %v4715, %v4892
        %v4895 = vunpack.c.l.s4 858989090
        %v4896 = vunpack.c.0.s8 %v4895
        %v4897 = vperm.slane %v4715, %v4896
        %v4900 = vmul.f32 %v4887, %v4893
        %v4901 = vmul.f32 %v4888, %v4897
        %v4904 = vperm.slane %v4900, 2
        %v4905 = vperm.slane %v4900, 6
        %v4906 = vperm.slane %v4901, 2
        %v4907 = vperm.slane %v4901, 6
        %v4912 = vsel %vm1648, %v4904, 0.0
        %v4913 = vsel %vm1648, %v4905, 0.0
        %v4914 = vadd.f32 %v4912, %v4913
        %v4915 = vsel %vm1648, %v4906, 0.0
        %v4916 = vadd.f32 %v4914, %v4915
        %v4917 = vsel %vm1648, %v4907, 0.0
        %v4918 = vadd.f32 %v4916, %v4917
        %4919 = vadd.xlane.f32.xlu0 %v4918
        %v4920 = vpop.xlane.xlu0 %4919
        %v4921 = vrot.slane %v4920, 4
        %v4922 = vadd.f32 %v4920, %v4921
        %v4923 = vrot.slane %v4922, 2
        %v4924 = vadd.f32 %v4922, %v4923
        %v4925 = vrot.slane %v4924, 1
        %v4926 = vadd.f32 %v4924, %v4925
        %s4927 = vtos %v4926
        %v4928 = vrcp.pop 1024.0
        %v4929 = vmul.f32 1024.0, %v4928
        %v4930 = vsub.f32 1.0, %v4929
        %v4931 = vmul.f32 %v4928, %v4930
        %v4932 = vadd.f32 %v4928, %v4931
        %vm4933 = vweird.f32 %v4928
        %v4934 = vsel %vm4933, %v4928, %v4932
        %s4935 = vtos %v4934
        %s4936 = smul.f32 %s4927, %s4935
        %v4937 = vstv %s4936
        %4938 = vst [vmem:[%s260] sm:$0xff] %v4937
      $region44: #{boundary_loss.1} parent=35 // pred_fallthru
        _
      %p4939 = scmp.lt.s32.totalorder %s19, 1
      %s4940 = scalar_select %p4939, %s19, 1
      %s4941 = smul.addr %s4940, 8
      %s4942 = scalar_lea.vmem %s4, %s4941
      // Predicated region
      $region45: #{boundary_loss.1} parent=35 // pred_check
        %p4943 = pneg %p146
      $region46: #{boundary_loss.1} parent=35 // pred_check_branch
        %4945 = sbr.rel (%p4943) target = $region48
      $region47: #{boundary_loss.1} parent=35 // pred_region
        _
      $region48: #{boundary_loss.1} parent=35 // pred_fallthru
        _
    $region36: #{boundary_loss.1} parent=5 // pred_fallthru
      _
    %p4946 = scmp.le.s32.totalorder 2, %s10
    // Predicated region
    $region49: #{boundary_loss.1} parent=5 // pred_check
      %p4947 = pneg %p4946
    $region50: #{boundary_loss.1} parent=5 // pred_check_branch
      %4949 = sbr.rel (%p4947) target = $region52
    $region51: #{boundary_loss.1} parent=5 // pred_region
      %s4950 = ssub.s32 %s10, 2
      // Predicated region
      $region53: #{boundary_loss.1} parent=51 // pred_check
        %p4951 = pneg %p152
      $region54: #{boundary_loss.1} parent=51 // pred_check_branch
        %4953 = sbr.rel (%p4951) target = $region56
      $region55: #{boundary_loss.1} parent=51 // pred_region
        %p4954 = scmp.lt.s32.totalorder %s21, 1
        %s4955 = scalar_select %p4954, %s21, 1
        %s4956 = smul.addr %s4955, 8
        %s4957 = scalar_lea.vmem %s4, %s4956
      $region56: #{boundary_loss.1} parent=51 // pred_fallthru
        _
    $region52: #{boundary_loss.1} parent=5 // pred_fallthru
      _
  $region6: #{boundary_loss.1} parent=0 // loop_footer
    %s14 = sadd.s32 1, %s10
  $region7: #{boundary_loss.1} parent=0 // loop_footer_branch
    %9 = sbr.rel target = $region3
  $region8: #{boundary_loss.1} parent=0 // loop_exit
    _

</llo_original>
